<compile_context>
chip_gen: v7x
topology: tpu7x:2x2x1
jax: 0.10.0
libtpu: 0.0.40
codegen_flags: <defaults>
</compile_context>

<pallas_src>
import math

import jax
import jax.numpy as jnp
from jax.experimental import pallas as pl
from jax.experimental.pallas import tpu as pltpu

EMBED_DIM = 128          # config.embed_dim
NUM_HEADS = 8            # config.num_heads
HEAD_DIM = EMBED_DIM // NUM_HEADS
FF_DIM = 4 * EMBED_DIM   # ffwd hidden = embed_dim * 4
LN_EPS = 1e-5            # nn.LayerNorm default eps


def _layernorm(x, gamma, beta):
    mean = jnp.mean(x, axis=-1, keepdims=True)
    var = jnp.mean((x - mean) ** 2, axis=-1, keepdims=True)
    return (x - mean) * jax.lax.rsqrt(var + LN_EPS) * gamma + beta


def transformer_block_kernel(
    x_ref,
    ln1_g_ref, ln1_b_ref,
    wqkv_ref, bqkv_ref,        # folded (qkv ∘ in_proj): (E, 3E) bf16, (1, 3E) f32
    wor_ref, bor_ref,          # folded (out_proj ∘ resid_proj): (E, E) bf16, (1, E) f32
    ln2_g_ref, ln2_b_ref,
    wff1_ref, bff1_ref,
    wff2_ref, bff2_ref,
    o_ref,
):
    E, H, DH = EMBED_DIM, NUM_HEADS, HEAD_DIM
    S = x_ref.shape[1]
    bf16 = jnp.bfloat16
    x = x_ref[0]  # (S, E) f32

    # ---------- attention branch: x + (out_proj∘resid_proj)(attn(ln1(x))) ----------
    h = _layernorm(x, ln1_g_ref[...], ln1_b_ref[...])                       # f32
    qkv = jnp.dot(h.astype(bf16), wqkv_ref[...],
                  preferred_element_type=jnp.float32) + bqkv_ref[...]       # (S, 3E) f32

    def split_heads(t):  # (S, E) -> (H, S, DH), bf16 for the MXU
        return jnp.transpose(t.reshape(S, H, DH), (1, 0, 2)).astype(bf16)

    qh = split_heads(qkv[:, 0:E])
    kh = split_heads(qkv[:, E:2 * E])
    vh = split_heads(qkv[:, 2 * E:3 * E])

    # head-batched QK^T: contraction on DH, no explicit K transpose, no concat
    s = jnp.einsum("hqd,hkd->hqk", qh, kh,
                   preferred_element_type=jnp.float32) * (1.0 / math.sqrt(DH))
    m = jnp.max(s, axis=-1, keepdims=True)                                  # softmax in f32
    e = jnp.exp(s - m)
    p = e * pl.reciprocal(jnp.sum(e, axis=-1, keepdims=True), approx=True)
    # TODO(synk): attention-weight dropout (p=0.1) omitted — eval-mode (identity) semantics.
    o3 = jnp.einsum("hqk,hkd->hqd", p.astype(bf16), vh,
                    preferred_element_type=jnp.float32)                     # (H, S, DH) f32
    attn = jnp.transpose(o3, (1, 0, 2)).reshape(S, E)                       # (S, E)

    # folded MultiheadAttention.out_proj ∘ TransformerBlock.resid_proj
    resid = jnp.dot(attn.astype(bf16), wor_ref[...],
                    preferred_element_type=jnp.float32) + bor_ref[...]
    # TODO(synk): resid_dropout omitted — eval-mode (identity) semantics.
    x1 = x + resid

    # ---------- feed-forward branch: x1 + ffwd(ln2(x1)) ----------
    h2 = _layernorm(x1, ln2_g_ref[...], ln2_b_ref[...])
    f = jnp.dot(h2.astype(bf16), wff1_ref[...],
                preferred_element_type=jnp.float32) + bff1_ref[...]
    f = jnp.maximum(f, 0.0)                                                 # ReLU
    y = jnp.dot(f.astype(bf16), wff2_ref[...],
                preferred_element_type=jnp.float32) + bff2_ref[...]
    # TODO(synk): ffwd Dropout omitted — eval-mode (identity) semantics.
    o_ref[0] = x1 + y


def _fold_params(p):
    """Plain-JAX glue: fold (qkv ∘ in_proj) and (out_proj ∘ resid_proj), transpose
    Linear weights to the x @ W_T orientation, and cast weights to bf16 (biases /
    LayerNorm params stay f32)."""
    E = EMBED_DIM
    hi = jax.lax.Precision.HIGHEST
    bf16 = jnp.bfloat16

    qkv_wt = p["qkv_w"].T          # (E, 3E)
    inp_wt = p["inp_w"].T          # (E, 3E)
    w_cols, b_cols = [], []
    for i in range(3):             # fold separately for q, k, v
        sl = slice(i * E, (i + 1) * E)
        w_cols.append(jnp.matmul(qkv_wt[:, sl], inp_wt[:, sl], precision=hi))
        b_cols.append(jnp.matmul(p["qkv_b"][:, sl], inp_wt[:, sl], precision=hi)
                      + p["inp_b"][:, sl])
    w_qkv = jnp.concatenate(w_cols, axis=1)        # (E, 3E)
    b_qkv = jnp.concatenate(b_cols, axis=1)        # (1, 3E)

    w_or = jnp.matmul(p["outp_w"].T, p["rp_w"].T, precision=hi)             # (E, E)
    b_or = jnp.matmul(p["outp_b"], p["rp_w"].T, precision=hi) + p["rp_b"]   # (1, E)

    return [
        p["ln1_g"], p["ln1_b"],
        w_qkv.astype(bf16), b_qkv,
        w_or.astype(bf16), b_or,
        p["ln2_g"], p["ln2_b"],
        p["ff1_w"].T.astype(bf16), p["ff1_b"],
        p["ff2_w"].T.astype(bf16), p["ff2_b"],
    ]


def transformer_block(x, params):
    """x: (B, S, E) float32; params: PyTorch-convention weights. Returns (B, S, E)."""
    B, S, E = x.shape
    assert E == EMBED_DIM
    weights = _fold_params(params)

    def full_spec(arr):
        nd = arr.ndim
        return pl.BlockSpec(arr.shape, lambda b, _nd=nd: (0,) * _nd)

    in_specs = [pl.BlockSpec((1, S, E), lambda b: (b, 0, 0))] + [full_spec(w) for w in weights]
    out_spec = pl.BlockSpec((1, S, E), lambda b: (b, 0, 0))

    # TODO(synk): for large S, add a sequence-tile grid axis with an online-softmax
    # (flash) kv loop so the (H, S, S) scores never live whole in VMEM; the current
    # single-block-per-batch design targets this module's small-S regime.
    return pl.pallas_call(
        transformer_block_kernel,
        out_shape=jax.ShapeDtypeStruct((B, S, E), jnp.float32),
        grid=(B,),
        in_specs=in_specs,
        out_specs=out_spec,
        compiler_params=pltpu.CompilerParams(dimension_semantics=("parallel",)),
    )(x, *weights)


def init_params(key):
    """Deterministic synthetic parameters, PyTorch shape conventions."""
    E, FF = EMBED_DIM, FF_DIM
    ks = jax.random.split(key, 16)
    n = lambda k, shape, s=0.05: s * jax.random.normal(k, shape, jnp.float32)
    return {
        "ln1_g": 1.0 + n(ks[0], (1, E)),
        "ln1_b": n(ks[1], (1, E)),
        "qkv_w": n(ks[2], (3 * E, E)),          # AttentionBlock.qkv
        "qkv_b": n(ks[3], (1, 3 * E)),
        "inp_w": n(ks[4], (3 * E, E)),          # MultiheadAttention.in_proj_weight
        "inp_b": n(ks[5], (1, 3 * E)),
        "outp_w": n(ks[6], (E, E)),             # MultiheadAttention.out_proj
        "outp_b": n(ks[7], (1, E)),
        "rp_w": n(ks[8], (E, E)),               # TransformerBlock.resid_proj
        "rp_b": n(ks[9], (1, E)),
        "ln2_g": 1.0 + n(ks[10], (1, E)),
        "ln2_b": n(ks[11], (1, E)),
        "ff1_w": n(ks[12], (FF, E)),            # ffwd[0]
        "ff1_b": n(ks[13], (1, FF)),
        "ff2_w": n(ks[14], (E, FF)),            # ffwd[2]
        "ff2_b": n(ks[15], (1, E)),
    }


def reference(x, p):
    """Pure-JAX reference mirroring the PyTorch forward (eval mode)."""
    E, H, DH = EMBED_DIM, NUM_HEADS, HEAD_DIM

    def ln(t, g, b):
        mean = t.mean(-1, keepdims=True)
        var = ((t - mean) ** 2).mean(-1, keepdims=True)
        return (t - mean) / jnp.sqrt(var + LN_EPS) * g + b

    B, S, _ = x.shape
    h = ln(x, p["ln1_g"], p["ln1_b"])
    qkv = h @ p["qkv_w"].T + p["qkv_b"]
    q, k, v = jnp.split(qkv, 3, axis=-1)
    q = q @ p["inp_w"][:E].T + p["inp_b"][:, :E]
    k = k @ p["inp_w"][E:2 * E].T + p["inp_b"][:, E:2 * E]
    v = v @ p["inp_w"][2 * E:].T + p["inp_b"][:, 2 * E:]
    qh = q.reshape(B, S, H, DH).transpose(0, 2, 1, 3)
    kh = k.reshape(B, S, H, DH).transpose(0, 2, 1, 3)
    vh = v.reshape(B, S, H, DH).transpose(0, 2, 1, 3)
    s = jnp.einsum("bhqd,bhkd->bhqk", qh, kh) / math.sqrt(DH)
    pr = jax.nn.softmax(s, axis=-1)
    a = jnp.einsum("bhqk,bhkd->bhqd", pr, vh).transpose(0, 2, 1, 3).reshape(B, S, E)
    a = a @ p["outp_w"].T + p["outp_b"]
    x1 = x + (a @ p["rp_w"].T + p["rp_b"])
    h2 = ln(x1, p["ln2_g"], p["ln2_b"])
    f = jnp.maximum(h2 @ p["ff1_w"].T + p["ff1_b"], 0.0)
    f = f @ p["ff2_w"].T + p["ff2_b"]
    return x1 + f


if __name__ == "__main__":
    key = jax.random.PRNGKey(0)
    kx, kp = jax.random.split(key)
    B, S = 2, 8
    x = jax.random.normal(kx, (B, S, EMBED_DIM), jnp.float32)
    params = init_params(kp)

    out = jax.block_until_ready(transformer_block(x, params))

    with jax.default_matmul_precision("highest"):
        ref = jax.block_until_ready(reference(x, params))

    assert out.shape == (B, S, EMBED_DIM) and out.dtype == jnp.float32
    # bf16 MXU operands + folded projections shift rounding vs. the f32 reference;
    # 1e-2 is the appropriate tolerance for bf16 compute with f32 accumulation.
    if not jnp.allclose(out, ref, atol=1e-2, rtol=1e-2):
        raise AssertionError(
            f"Pallas kernel mismatch: max abs err = {float(jnp.max(jnp.abs(out - ref)))}"
        )
    print("KERNEL_OK")
</pallas_src>

<mosaic_0001>
module attributes {stable_mosaic.version = 11 : i64} {
  func.func @transformer_block_kernel(%arg0: i32, %arg1: memref<1x8x128xf32, #tpu.memory_space<vmem>>, %arg2: memref<1x128xf32, #tpu.memory_space<vmem>>, %arg3: memref<1x128xf32, #tpu.memory_space<vmem>>, %arg4: memref<128x384xbf16, #tpu.memory_space<vmem>>, %arg5: memref<1x384xf32, #tpu.memory_space<vmem>>, %arg6: memref<128x128xbf16, #tpu.memory_space<vmem>>, %arg7: memref<1x128xf32, #tpu.memory_space<vmem>>, %arg8: memref<1x128xf32, #tpu.memory_space<vmem>>, %arg9: memref<1x128xf32, #tpu.memory_space<vmem>>, %arg10: memref<128x512xbf16, #tpu.memory_space<vmem>>, %arg11: memref<1x512xf32, #tpu.memory_space<vmem>>, %arg12: memref<512x128xbf16, #tpu.memory_space<vmem>>, %arg13: memref<1x128xf32, #tpu.memory_space<vmem>>, %arg14: memref<1x8x128xf32, #tpu.memory_space<vmem>>) attributes {dimension_semantics = [#tpu.dimension_semantics<parallel>], iteration_bounds = array<i64: 2>, scalar_prefetch = 0 : i64, scratch_operands = 0 : i64, tpu.core_type = #tpu.core_type<tc>, window_params = [{transform_indices = @transform_0, window_bounds = array<i64: 1, 8, 128>}, {pipeline_mode = #tpu.pipeline_mode<synchronous>, transform_indices = @transform_1, window_bounds = array<i64: 1, 128>}, {pipeline_mode = #tpu.pipeline_mode<synchronous>, transform_indices = @transform_2, window_bounds = array<i64: 1, 128>}, {pipeline_mode = #tpu.pipeline_mode<synchronous>, transform_indices = @transform_3, window_bounds = array<i64: 128, 384>}, {pipeline_mode = #tpu.pipeline_mode<synchronous>, transform_indices = @transform_4, window_bounds = array<i64: 1, 384>}, {pipeline_mode = #tpu.pipeline_mode<synchronous>, transform_indices = @transform_5, window_bounds = array<i64: 128, 128>}, {pipeline_mode = #tpu.pipeline_mode<synchronous>, transform_indices = @transform_6, window_bounds = array<i64: 1, 128>}, {pipeline_mode = #tpu.pipeline_mode<synchronous>, transform_indices = @transform_7, window_bounds = array<i64: 1, 128>}, {pipeline_mode = #tpu.pipeline_mode<synchronous>, transform_indices = @transform_8, window_bounds = array<i64: 1, 128>}, {pipeline_mode = #tpu.pipeline_mode<synchronous>, transform_indices = @transform_9, window_bounds = array<i64: 128, 512>}, {pipeline_mode = #tpu.pipeline_mode<synchronous>, transform_indices = @transform_10, window_bounds = array<i64: 1, 512>}, {pipeline_mode = #tpu.pipeline_mode<synchronous>, transform_indices = @transform_11, window_bounds = array<i64: 512, 128>}, {pipeline_mode = #tpu.pipeline_mode<synchronous>, transform_indices = @transform_12, window_bounds = array<i64: 1, 128>}, {transform_indices = @transform_13, window_bounds = array<i64: 1, 8, 128>}]} {
    %c0 = arith.constant 0 : index
    %c0_0 = arith.constant 0 : index
    %c0_1 = arith.constant 0 : index
    %0 = vector.load %arg1[%c0, %c0_0, %c0_1] : memref<1x8x128xf32, #tpu.memory_space<vmem>>, vector<1x8x128xf32>
    %1 = vector.shape_cast %0 : vector<1x8x128xf32> to vector<8x128xf32>
    %c0_2 = arith.constant 0 : index
    %c0_3 = arith.constant 0 : index
    %2 = vector.load %arg2[%c0_2, %c0_3] : memref<1x128xf32, #tpu.memory_space<vmem>>, vector<1x128xf32>
    %c0_4 = arith.constant 0 : index
    %c0_5 = arith.constant 0 : index
    %3 = vector.load %arg3[%c0_4, %c0_5] : memref<1x128xf32, #tpu.memory_space<vmem>>, vector<1x128xf32>
    %cst = arith.constant dense<0.000000e+00> : vector<8xf32>
    %4 = vector.multi_reduction <add>, %1, %cst [1] : vector<8x128xf32> to vector<8xf32>
    %5 = vector.shape_cast %4 : vector<8xf32> to vector<8x1xf32>
    %cst_6 = arith.constant 1.280000e+02 : f32
    %6 = vector.broadcast %cst_6 : f32 to vector<8x1xf32>
    %7 = arith.divf %5, %6 : vector<8x1xf32>
    %8 = vector.broadcast %7 : vector<8x1xf32> to vector<8x128xf32>
    %9 = arith.subf %1, %8 : vector<8x128xf32>
    %10 = arith.mulf %9, %9 : vector<8x128xf32>
    %cst_7 = arith.constant dense<0.000000e+00> : vector<8xf32>
    %11 = vector.multi_reduction <add>, %10, %cst_7 [1] : vector<8x128xf32> to vector<8xf32>
    %12 = vector.shape_cast %11 : vector<8xf32> to vector<8x1xf32>
    %cst_8 = arith.constant 1.280000e+02 : f32
    %13 = vector.broadcast %cst_8 : f32 to vector<8x1xf32>
    %14 = arith.divf %12, %13 : vector<8x1xf32>
    %15 = vector.broadcast %7 : vector<8x1xf32> to vector<8x128xf32>
    %16 = arith.subf %1, %15 : vector<8x128xf32>
    %cst_9 = arith.constant 9.99999974E-6 : f32
    %17 = vector.broadcast %cst_9 : f32 to vector<8x1xf32>
    %18 = arith.addf %14, %17 : vector<8x1xf32>
    %19 = math.rsqrt %18 : vector<8x1xf32>
    %20 = vector.broadcast %19 : vector<8x1xf32> to vector<8x128xf32>
    %21 = arith.mulf %16, %20 : vector<8x128xf32>
    %22 = vector.broadcast %2 : vector<1x128xf32> to vector<8x128xf32>
    %23 = arith.mulf %21, %22 : vector<8x128xf32>
    %24 = vector.broadcast %3 : vector<1x128xf32> to vector<8x128xf32>
    %25 = arith.addf %23, %24 : vector<8x128xf32>
    %26 = arith.truncf %25 : vector<8x128xf32> to vector<8x128xbf16>
    %c0_10 = arith.constant 0 : index
    %c0_11 = arith.constant 0 : index
    %27 = vector.load %arg4[%c0_10, %c0_11] : memref<128x384xbf16, #tpu.memory_space<vmem>>, vector<128x384xbf16>
    %cst_12 = arith.constant dense<0.000000e+00> : vector<8x384xf32>
    %28 = tpu.matmul %26, %27, %cst_12 {dimension_numbers = #tpu.dot_dimension_numbers<[1], [0], [0], [1], [0, 0, 1, 1], [], []>} : vector<8x128xbf16>, vector<128x384xbf16>, vector<8x384xf32> -> vector<8x384xf32>
    %c0_13 = arith.constant 0 : index
    %c0_14 = arith.constant 0 : index
    %29 = vector.load %arg5[%c0_13, %c0_14] : memref<1x384xf32, #tpu.memory_space<vmem>>, vector<1x384xf32>
    %30 = vector.broadcast %29 : vector<1x384xf32> to vector<8x384xf32>
    %31 = arith.addf %28, %30 : vector<8x384xf32>
    %32 = vector.extract_strided_slice %31 {offsets = [0, 0], sizes = [8, 128], strides = [1, 1]} : vector<8x384xf32> to vector<8x128xf32>
    %33 = vector.shape_cast %32 : vector<8x128xf32> to vector<8x8x16xf32>
    %34 = tpu.transpose %33, [1, 0, 2] : vector<8x8x16xf32> -> vector<8x8x16xf32>
    %35 = arith.truncf %34 : vector<8x8x16xf32> to vector<8x8x16xbf16>
    %36 = vector.extract_strided_slice %31 {offsets = [0, 128], sizes = [8, 128], strides = [1, 1]} : vector<8x384xf32> to vector<8x128xf32>
    %37 = vector.shape_cast %36 : vector<8x128xf32> to vector<8x8x16xf32>
    %38 = tpu.transpose %37, [1, 0, 2] : vector<8x8x16xf32> -> vector<8x8x16xf32>
    %39 = arith.truncf %38 : vector<8x8x16xf32> to vector<8x8x16xbf16>
    %40 = vector.extract_strided_slice %31 {offsets = [0, 256], sizes = [8, 128], strides = [1, 1]} : vector<8x384xf32> to vector<8x128xf32>
    %41 = vector.shape_cast %40 : vector<8x128xf32> to vector<8x8x16xf32>
    %42 = tpu.transpose %41, [1, 0, 2] : vector<8x8x16xf32> -> vector<8x8x16xf32>
    %43 = arith.truncf %42 : vector<8x8x16xf32> to vector<8x8x16xbf16>
    "tpu.trace_start"() <{level = 10 : i32, message = "hqd,hkd->hqk"}> : () -> ()
    %cst_15 = arith.constant dense<0.000000e+00> : vector<8x8x8xf32>
    %44 = tpu.matmul %35, %39, %cst_15 {dimension_numbers = #tpu.dot_dimension_numbers<[2], [2], [1], [1], [0, 0, 0, 1, 1, 1], [0], [0]>} : vector<8x8x16xbf16>, vector<8x8x16xbf16>, vector<8x8x8xf32> -> vector<8x8x8xf32>
    "tpu.trace_stop"() : () -> ()
    %cst_16 = arith.constant 2.500000e-01 : f32
    %45 = vector.broadcast %cst_16 : f32 to vector<8x8x8xf32>
    %46 = arith.mulf %44, %45 : vector<8x8x8xf32>
    %cst_17 = arith.constant dense<0xFF800000> : vector<8x8xf32>
    %47 = vector.multi_reduction <maximumf>, %46, %cst_17 [2] : vector<8x8x8xf32> to vector<8x8xf32>
    %48 = vector.shape_cast %47 : vector<8x8xf32> to vector<8x8x1xf32>
    %49 = vector.broadcast %48 : vector<8x8x1xf32> to vector<8x8x8xf32>
    %50 = arith.subf %46, %49 : vector<8x8x8xf32>
    %51 = math.exp %50 : vector<8x8x8xf32>
    %cst_18 = arith.constant dense<0.000000e+00> : vector<8x8xf32>
    %52 = vector.multi_reduction <add>, %51, %cst_18 [2] : vector<8x8x8xf32> to vector<8x8xf32>
    %53 = vector.shape_cast %52 : vector<8x8xf32> to vector<8x8x1xf32>
    %54 = tpu.reciprocal %53 {approx = true} : vector<8x8x1xf32> -> vector<8x8x1xf32>
    %55 = vector.broadcast %54 : vector<8x8x1xf32> to vector<8x8x8xf32>
    %56 = arith.mulf %51, %55 : vector<8x8x8xf32>
    %57 = arith.truncf %56 : vector<8x8x8xf32> to vector<8x8x8xbf16>
    "tpu.trace_start"() <{level = 10 : i32, message = "hqk,hkd->hqd"}> : () -> ()
    %cst_19 = arith.constant dense<0.000000e+00> : vector<8x8x16xf32>
    %58 = tpu.matmul %57, %43, %cst_19 {dimension_numbers = #tpu.dot_dimension_numbers<[2], [1], [1], [2], [0, 0, 0, 1, 1, 2], [0], [0]>} : vector<8x8x8xbf16>, vector<8x8x16xbf16>, vector<8x8x16xf32> -> vector<8x8x16xf32>
    "tpu.trace_stop"() : () -> ()
    %59 = tpu.transpose %58, [1, 0, 2] : vector<8x8x16xf32> -> vector<8x8x16xf32>
    %60 = vector.shape_cast %59 : vector<8x8x16xf32> to vector<8x128xf32>
    %61 = arith.truncf %60 : vector<8x128xf32> to vector<8x128xbf16>
    %c0_20 = arith.constant 0 : index
    %c0_21 = arith.constant 0 : index
    %62 = vector.load %arg6[%c0_20, %c0_21] : memref<128x128xbf16, #tpu.memory_space<vmem>>, vector<128x128xbf16>
    %cst_22 = arith.constant dense<0.000000e+00> : vector<8x128xf32>
    %63 = tpu.matmul %61, %62, %cst_22 {dimension_numbers = #tpu.dot_dimension_numbers<[1], [0], [0], [1], [0, 0, 1, 1], [], []>} : vector<8x128xbf16>, vector<128x128xbf16>, vector<8x128xf32> -> vector<8x128xf32>
    %c0_23 = arith.constant 0 : index
    %c0_24 = arith.constant 0 : index
    %64 = vector.load %arg7[%c0_23, %c0_24] : memref<1x128xf32, #tpu.memory_space<vmem>>, vector<1x128xf32>
    %65 = vector.broadcast %64 : vector<1x128xf32> to vector<8x128xf32>
    %66 = arith.addf %63, %65 : vector<8x128xf32>
    %67 = arith.addf %1, %66 : vector<8x128xf32>
    %c0_25 = arith.constant 0 : index
    %c0_26 = arith.constant 0 : index
    %68 = vector.load %arg8[%c0_25, %c0_26] : memref<1x128xf32, #tpu.memory_space<vmem>>, vector<1x128xf32>
    %c0_27 = arith.constant 0 : index
    %c0_28 = arith.constant 0 : index
    %69 = vector.load %arg9[%c0_27, %c0_28] : memref<1x128xf32, #tpu.memory_space<vmem>>, vector<1x128xf32>
    %cst_29 = arith.constant dense<0.000000e+00> : vector<8xf32>
    %70 = vector.multi_reduction <add>, %67, %cst_29 [1] : vector<8x128xf32> to vector<8xf32>
    %71 = vector.shape_cast %70 : vector<8xf32> to vector<8x1xf32>
    %cst_30 = arith.constant 1.280000e+02 : f32
    %72 = vector.broadcast %cst_30 : f32 to vector<8x1xf32>
    %73 = arith.divf %71, %72 : vector<8x1xf32>
    %74 = vector.broadcast %73 : vector<8x1xf32> to vector<8x128xf32>
    %75 = arith.subf %67, %74 : vector<8x128xf32>
    %76 = arith.mulf %75, %75 : vector<8x128xf32>
    %cst_31 = arith.constant dense<0.000000e+00> : vector<8xf32>
    %77 = vector.multi_reduction <add>, %76, %cst_31 [1] : vector<8x128xf32> to vector<8xf32>
    %78 = vector.shape_cast %77 : vector<8xf32> to vector<8x1xf32>
    %cst_32 = arith.constant 1.280000e+02 : f32
    %79 = vector.broadcast %cst_32 : f32 to vector<8x1xf32>
    %80 = arith.divf %78, %79 : vector<8x1xf32>
    %81 = vector.broadcast %73 : vector<8x1xf32> to vector<8x128xf32>
    %82 = arith.subf %67, %81 : vector<8x128xf32>
    %cst_33 = arith.constant 9.99999974E-6 : f32
    %83 = vector.broadcast %cst_33 : f32 to vector<8x1xf32>
    %84 = arith.addf %80, %83 : vector<8x1xf32>
    %85 = math.rsqrt %84 : vector<8x1xf32>
    %86 = vector.broadcast %85 : vector<8x1xf32> to vector<8x128xf32>
    %87 = arith.mulf %82, %86 : vector<8x128xf32>
    %88 = vector.broadcast %68 : vector<1x128xf32> to vector<8x128xf32>
    %89 = arith.mulf %87, %88 : vector<8x128xf32>
    %90 = vector.broadcast %69 : vector<1x128xf32> to vector<8x128xf32>
    %91 = arith.addf %89, %90 : vector<8x128xf32>
    %92 = arith.truncf %91 : vector<8x128xf32> to vector<8x128xbf16>
    %c0_34 = arith.constant 0 : index
    %c0_35 = arith.constant 0 : index
    %93 = vector.load %arg10[%c0_34, %c0_35] : memref<128x512xbf16, #tpu.memory_space<vmem>>, vector<128x512xbf16>
    %cst_36 = arith.constant dense<0.000000e+00> : vector<8x512xf32>
    %94 = tpu.matmul %92, %93, %cst_36 {dimension_numbers = #tpu.dot_dimension_numbers<[1], [0], [0], [1], [0, 0, 1, 1], [], []>} : vector<8x128xbf16>, vector<128x512xbf16>, vector<8x512xf32> -> vector<8x512xf32>
    %c0_37 = arith.constant 0 : index
    %c0_38 = arith.constant 0 : index
    %95 = vector.load %arg11[%c0_37, %c0_38] : memref<1x512xf32, #tpu.memory_space<vmem>>, vector<1x512xf32>
    %96 = vector.broadcast %95 : vector<1x512xf32> to vector<8x512xf32>
    %97 = arith.addf %94, %96 : vector<8x512xf32>
    %cst_39 = arith.constant 0.000000e+00 : f32
    %98 = vector.broadcast %cst_39 : f32 to vector<8x512xf32>
    %99 = arith.maximumf %97, %98 : vector<8x512xf32>
    %100 = arith.truncf %99 : vector<8x512xf32> to vector<8x512xbf16>
    %c0_40 = arith.constant 0 : index
    %c0_41 = arith.constant 0 : index
    %101 = vector.load %arg12[%c0_40, %c0_41] : memref<512x128xbf16, #tpu.memory_space<vmem>>, vector<512x128xbf16>
    %cst_42 = arith.constant dense<0.000000e+00> : vector<8x128xf32>
    %102 = tpu.matmul %100, %101, %cst_42 {dimension_numbers = #tpu.dot_dimension_numbers<[1], [0], [0], [1], [0, 0, 1, 1], [], []>} : vector<8x512xbf16>, vector<512x128xbf16>, vector<8x128xf32> -> vector<8x128xf32>
    %c0_43 = arith.constant 0 : index
    %c0_44 = arith.constant 0 : index
    %103 = vector.load %arg13[%c0_43, %c0_44] : memref<1x128xf32, #tpu.memory_space<vmem>>, vector<1x128xf32>
    %104 = vector.broadcast %103 : vector<1x128xf32> to vector<8x128xf32>
    %105 = arith.addf %102, %104 : vector<8x128xf32>
    %106 = arith.addf %67, %105 : vector<8x128xf32>
    %c0_45 = arith.constant 0 : index
    %c0_46 = arith.constant 0 : index
    %c0_47 = arith.constant 0 : index
    %107 = vector.load %arg14[%c0_45, %c0_46, %c0_47] : memref<1x8x128xf32, #tpu.memory_space<vmem>>, vector<1x8x128xf32>
    %108 = vector.shape_cast %107 : vector<1x8x128xf32> to vector<8x128xf32>
    %109 = vector.shape_cast %106 : vector<8x128xf32> to vector<1x8x128xf32>
    tpu.vector_store %arg14[%c0_45, %c0_46, %c0_47], %109 {strides = array<i32>} : memref<1x8x128xf32, #tpu.memory_space<vmem>>, vector<1x8x128xf32>,
    return
  }
  func.func @transform_0(%arg0: i32) -> (i32, i32, i32) {
    %c0_i32 = arith.constant 0 : i32
    %c0_i32_0 = arith.constant 0 : i32
    %c0_i32_1 = arith.constant 0 : i32
    return %arg0, %c0_i32, %c0_i32_0 : i32, i32, i32
  }
  func.func @transform_1(%arg0: i32) -> (i32, i32) {
    %c0_i32 = arith.constant 0 : i32
    %c0_i32_0 = arith.constant 0 : i32
    %c0_i32_1 = arith.constant 0 : i32
    return %c0_i32, %c0_i32_0 : i32, i32
  }
  func.func @transform_2(%arg0: i32) -> (i32, i32) {
    %c0_i32 = arith.constant 0 : i32
    %c0_i32_0 = arith.constant 0 : i32
    %c0_i32_1 = arith.constant 0 : i32
    return %c0_i32, %c0_i32_0 : i32, i32
  }
  func.func @transform_3(%arg0: i32) -> (i32, i32) {
    %c0_i32 = arith.constant 0 : i32
    %c0_i32_0 = arith.constant 0 : i32
    %c0_i32_1 = arith.constant 0 : i32
    return %c0_i32, %c0_i32_0 : i32, i32
  }
  func.func @transform_4(%arg0: i32) -> (i32, i32) {
    %c0_i32 = arith.constant 0 : i32
    %c0_i32_0 = arith.constant 0 : i32
    %c0_i32_1 = arith.constant 0 : i32
    return %c0_i32, %c0_i32_0 : i32, i32
  }
  func.func @transform_5(%arg0: i32) -> (i32, i32) {
    %c0_i32 = arith.constant 0 : i32
    %c0_i32_0 = arith.constant 0 : i32
    %c0_i32_1 = arith.constant 0 : i32
    return %c0_i32, %c0_i32_0 : i32, i32
  }
  func.func @transform_6(%arg0: i32) -> (i32, i32) {
    %c0_i32 = arith.constant 0 : i32
    %c0_i32_0 = arith.constant 0 : i32
    %c0_i32_1 = arith.constant 0 : i32
    return %c0_i32, %c0_i32_0 : i32, i32
  }
  func.func @transform_7(%arg0: i32) -> (i32, i32) {
    %c0_i32 = arith.constant 0 : i32
    %c0_i32_0 = arith.constant 0 : i32
    %c0_i32_1 = arith.constant 0 : i32
    return %c0_i32, %c0_i32_0 : i32, i32
  }
  func.func @transform_8(%arg0: i32) -> (i32, i32) {
    %c0_i32 = arith.constant 0 : i32
    %c0_i32_0 = arith.constant 0 : i32
    %c0_i32_1 = arith.constant 0 : i32
    return %c0_i32, %c0_i32_0 : i32, i32
  }
  func.func @transform_9(%arg0: i32) -> (i32, i32) {
    %c0_i32 = arith.constant 0 : i32
    %c0_i32_0 = arith.constant 0 : i32
    %c0_i32_1 = arith.constant 0 : i32
    return %c0_i32, %c0_i32_0 : i32, i32
  }
  func.func @transform_10(%arg0: i32) -> (i32, i32) {
    %c0_i32 = arith.constant 0 : i32
    %c0_i32_0 = arith.constant 0 : i32
    %c0_i32_1 = arith.constant 0 : i32
    return %c0_i32, %c0_i32_0 : i32, i32
  }
  func.func @transform_11(%arg0: i32) -> (i32, i32) {
    %c0_i32 = arith.constant 0 : i32
    %c0_i32_0 = arith.constant 0 : i32
    %c0_i32_1 = arith.constant 0 : i32
    return %c0_i32, %c0_i32_0 : i32, i32
  }
  func.func @transform_12(%arg0: i32) -> (i32, i32) {
    %c0_i32 = arith.constant 0 : i32
    %c0_i32_0 = arith.constant 0 : i32
    %c0_i32_1 = arith.constant 0 : i32
    return %c0_i32, %c0_i32_0 : i32, i32
  }
  func.func @transform_13(%arg0: i32) -> (i32, i32, i32) {
    %c0_i32 = arith.constant 0 : i32
    %c0_i32_0 = arith.constant 0 : i32
    %c0_i32_1 = arith.constant 0 : i32
    return %arg0, %c0_i32, %c0_i32_0 : i32, i32, i32
  }
}

</mosaic_0001>

<llo_original>
// kernel: tpu_custom_call.1
$region0: #{tpu_custom_call.1}
  #allocation0 [shape = 'u32[]', space=smem, size = 0x4, offset = 0x4, fixed_abs, tag = 'smem constant byte address 0x4 - core index']
  #allocation1 [shape = 'u32[144,128]{1,0:T(1,128)}', space=vmem, size = 0x12000, scoped, tag = 'internal scratch']
  %s0 = inlined_call_operand.hbm [shape: f32[2,8,128], index: 0, kind: input, shape index: {}]
  %s1 = inlined_call_operand.hbm [shape: f32[1,128], index: 1, kind: input, shape index: {}]
  %s2 = inlined_call_operand.hbm [shape: f32[1,128], index: 2, kind: input, shape index: {}]
  %s3 = inlined_call_operand.hbm [shape: bf16[128,384], index: 3, kind: input, shape index: {}]
  %s4 = inlined_call_operand.vmem [shape: f32[1,384], index: 4, kind: input, shape index: {}]
  %s5 = inlined_call_operand.hbm [shape: bf16[128,128], index: 5, kind: input, shape index: {}]
  %s6 = inlined_call_operand.vmem [shape: f32[1,128], index: 6, kind: input, shape index: {}]
  %s7 = inlined_call_operand.vmem [shape: f32[1,128], index: 7, kind: input, shape index: {}]
  %s8 = inlined_call_operand.vmem [shape: f32[1,128], index: 8, kind: input, shape index: {}]
  %s9 = inlined_call_operand.hbm [shape: bf16[128,512], index: 9, kind: input, shape index: {}]
  %s10 = inlined_call_operand.vmem [shape: f32[1,512], index: 10, kind: input, shape index: {}]
  %s11 = inlined_call_operand.hbm [shape: bf16[512,128], index: 11, kind: input, shape index: {}]
  %s12 = inlined_call_operand.vmem [shape: f32[1,128], index: 12, kind: input, shape index: {}]
  %s13 = inlined_call_operand.hbm [shape: f32[2,8,128], index: 13, kind: output, shape index: {}]
  %s14 = sld [smem:[#allocation0]]
  $region113: #{tpu_custom_call.1} parent=0
    _
  %s16 = ssub.s32 1, %s14
  %s17 = scalar_select 0, %s16, %s14
  $region1: #{tpu_custom_call.1} parent=0
    #allocation2 [shape = 'u8[8192]{0}', space=vmem, size = 0x2000, scoped, tag = 'input window, operand 0']
    #allocation3 [shape = 's32[2]{0}', space=sflag, size = 0x8, scoped, tag = 'scoped memory for tpu_custom_call.1']
    #allocation4 [shape = 's32[2]{0}', space=sflag, size = 0x8, scoped, tag = 'scoped memory for tpu_custom_call.1']
    #allocation5 [shape = 'u8[512]{0}', space=vmem, size = 0x400, scoped, tag = 'input window, operand 1, single buffered']
    #allocation6 [shape = 's32[1]{0}', space=sflag, size = 0x4, scoped, tag = 'scoped memory for tpu_custom_call.1']
    #allocation7 [shape = 'u8[512]{0}', space=vmem, size = 0x400, scoped, tag = 'input window, operand 2, single buffered']
    #allocation8 [shape = 'u8[98304]{0}', space=vmem, size = 0x18000, scoped, tag = 'input window, operand 3, single buffered']
    #allocation9 [shape = 's32[1]{0}', space=sflag, size = 0x4, scoped, tag = 'scoped memory for tpu_custom_call.1']
    #allocation10 [shape = 'u8[32768]{0}', space=vmem, size = 0x8000, scoped, tag = 'input window, operand 5, single buffered']
    #allocation11 [shape = 'u8[131072]{0}', space=vmem, size = 0x20000, scoped, tag = 'input window, operand 9, single buffered']
    #allocation12 [shape = 's32[1]{0}', space=sflag, size = 0x4, scoped, tag = 'scoped memory for tpu_custom_call.1']
    #allocation13 [shape = 'u8[131072]{0}', space=vmem, size = 0x20000, scoped, tag = 'input window, operand 11, single buffered']
    #allocation14 [shape = 'u8[8192]{0}', space=vmem, size = 0x2000, scoped, tag = 'output window, operand 0']
    %18 = vsyncpa [#allocation3], 0
    %s19 = scalar_lea.sflag [#allocation3], 1
    %20 = vsyncpa %s19, 0
    %21 = vsyncpa [#allocation6], 0
    %22 = vsyncpa [#allocation9], 0
    %23 = vsyncpa [#allocation12], 0
    %24 = vsyncpa [#allocation4], 0
    %s25 = scalar_lea.sflag [#allocation4], 1
    %26 = vsyncpa %s25, 0
    loop: start=0, step=1, limit=4
    $region2: #{tpu_custom_call.1} parent=1 // loop_pre_header
      _
    $region3: #{tpu_custom_call.1} parent=1 // loop_header
      %s28 = sphi 0, %s32
      %p29 = scmp.ge.s32.totalorder %s28, 4
      %s38 = sphi 0, %s40
      %s41 = sphi 0, %s38
      %s42 = sphi 0, %s41
      %s58 = sphi 0, %s42
      %s62 = sphi 0, %s62
      %s64 = sphi 0, %s62
      %s65 = sphi 0, %s64
      %s79 = sphi 0, %s65
      %s83 = sphi 0, %s83
      %s85 = sphi 0, %s83
      %s86 = sphi 0, %s85
      %s100 = sphi 0, %s86
      %s104 = sphi 0, %s104
      %s106 = sphi 0, %s104
      %s107 = sphi 0, %s106
      %s121 = sphi 0, %s107
      %s125 = sphi 0, %s125
      %s127 = sphi 0, %s125
      %s128 = sphi 0, %s127
      %s142 = sphi 0, %s128
      %s146 = sphi 0, %s146
      %s148 = sphi 0, %s146
      %s149 = sphi 0, %s148
      %s163 = sphi 0, %s149
      %s167 = sphi 0, %s167
      %s169 = sphi 0, %s167
      %s170 = sphi 0, %s169
      %s184 = sphi 0, %s170
      %s188 = sphi 0, %s188
      %s190 = sphi 0, %s188
      %s191 = sphi 0, %s190
      %s205 = sphi 0, %s191
      %s209 = sphi 0, %s209
      %s211 = sphi 0, %s209
      %s212 = sphi 0, %s211
      %s226 = sphi 0, %s212
      %s230 = sphi 0, %s230
      %s232 = sphi 0, %s230
      %s233 = sphi 0, %s232
      %s247 = sphi 0, %s233
      %s251 = sphi 0, %s251
      %s253 = sphi 0, %s251
      %s254 = sphi 0, %s253
      %s268 = sphi 0, %s254
      %s272 = sphi 0, %s272
      %s274 = sphi 0, %s272
      %s275 = sphi 0, %s274
      %s289 = sphi 0, %s275
      %s293 = sphi 0, %s293
      %s295 = sphi 0, %s293
      %s296 = sphi 0, %s295
      %s310 = sphi 0, %s296
      %s316 = sphi 0, %s318
      %s319 = sphi 0, %s316
      %s320 = sphi 0, %s319
      %s336 = sphi 0, %s320
    $region4: #{tpu_custom_call.1} parent=1 // loop_header_branch
      %31 = sbr.rel (%p29) target = $region8
    $region5: #{tpu_custom_call.1} parent=1 // loop_body
      %s33 = ssub.s32 %s28, 1
      %s34 = ssub.s32 %s28, 2
      %s35 = sadd.s32 %s28, 1
      %s36 = ssub.s32 %s28, %s35
      %p37 = scmp.eq.s32.totalorder %s36, 0
      %s39 = sadd.s32 %s38, 1
      %s40 = scalar_select %p37, %s38, %s39
      %p43 = pneg %p37
      %p44 = scmp.eq.s32.totalorder %s28, 1
      %p45 = por %p43, %p44
      %p46 = scmp.ne.s32.totalorder %s38, %s41
      %p47 = scmp.eq.s32.totalorder %s28, 0
      %p48 = por %p46, %p47
      %p49 = scmp.ne.s32.totalorder %s38, %s41
      %p50 = scmp.eq.s32.totalorder %s33, 1
      %p51 = por %p49, %p50
      %p52 = scmp.ne.s32.totalorder %s41, %s42
      %p53 = scmp.eq.s32.totalorder %s33, 0
      %p54 = por %p52, %p53
      %p55 = scmp.ne.s32.totalorder %s41, %s42
      %p56 = scmp.eq.s32.totalorder %s34, 1
      %p57 = por %p55, %p56
      %p59 = scmp.ne.s32.totalorder %s42, %s58
      %p60 = scmp.eq.s32.totalorder %s34, 0
      %p61 = por %p59, %p60
      %s63 = sadd.s32 %s62, 1
      %p66 = scmp.eq.s32.totalorder %s28, 1
      %p67 = scmp.ne.s32.totalorder %s62, %s64
      %p68 = scmp.eq.s32.totalorder %s28, 0
      %p69 = por %p67, %p68
      %p70 = scmp.ne.s32.totalorder %s62, %s64
      %p71 = scmp.eq.s32.totalorder %s33, 1
      %p72 = por %p70, %p71
      %p73 = scmp.ne.s32.totalorder %s64, %s65
      %p74 = scmp.eq.s32.totalorder %s33, 0
      %p75 = por %p73, %p74
      %p76 = scmp.ne.s32.totalorder %s64, %s65
      %p77 = scmp.eq.s32.totalorder %s34, 1
      %p78 = por %p76, %p77
      %p80 = scmp.ne.s32.totalorder %s65, %s79
      %p81 = scmp.eq.s32.totalorder %s34, 0
      %p82 = por %p80, %p81
      %s84 = sadd.s32 %s83, 1
      %p87 = scmp.eq.s32.totalorder %s28, 1
      %p88 = scmp.ne.s32.totalorder %s83, %s85
      %p89 = scmp.eq.s32.totalorder %s28, 0
      %p90 = por %p88, %p89
      %p91 = scmp.ne.s32.totalorder %s83, %s85
      %p92 = scmp.eq.s32.totalorder %s33, 1
      %p93 = por %p91, %p92
      %p94 = scmp.ne.s32.totalorder %s85, %s86
      %p95 = scmp.eq.s32.totalorder %s33, 0
      %p96 = por %p94, %p95
      %p97 = scmp.ne.s32.totalorder %s85, %s86
      %p98 = scmp.eq.s32.totalorder %s34, 1
      %p99 = por %p97, %p98
      %p101 = scmp.ne.s32.totalorder %s86, %s100
      %p102 = scmp.eq.s32.totalorder %s34, 0
      %p103 = por %p101, %p102
      %s105 = sadd.s32 %s104, 1
      %p108 = scmp.eq.s32.totalorder %s28, 1
      %p109 = scmp.ne.s32.totalorder %s104, %s106
      %p110 = scmp.eq.s32.totalorder %s28, 0
      %p111 = por %p109, %p110
      %p112 = scmp.ne.s32.totalorder %s104, %s106
      %p113 = scmp.eq.s32.totalorder %s33, 1
      %p114 = por %p112, %p113
      %p115 = scmp.ne.s32.totalorder %s106, %s107
      %p116 = scmp.eq.s32.totalorder %s33, 0
      %p117 = por %p115, %p116
      %p118 = scmp.ne.s32.totalorder %s106, %s107
      %p119 = scmp.eq.s32.totalorder %s34, 1
      %p120 = por %p118, %p119
      %p122 = scmp.ne.s32.totalorder %s107, %s121
      %p123 = scmp.eq.s32.totalorder %s34, 0
      %p124 = por %p122, %p123
      %s126 = sadd.s32 %s125, 1
      %p129 = scmp.eq.s32.totalorder %s28, 1
      %p130 = scmp.ne.s32.totalorder %s125, %s127
      %p131 = scmp.eq.s32.totalorder %s28, 0
      %p132 = por %p130, %p131
      %p133 = scmp.ne.s32.totalorder %s125, %s127
      %p134 = scmp.eq.s32.totalorder %s33, 1
      %p135 = por %p133, %p134
      %p136 = scmp.ne.s32.totalorder %s127, %s128
      %p137 = scmp.eq.s32.totalorder %s33, 0
      %p138 = por %p136, %p137
      %p139 = scmp.ne.s32.totalorder %s127, %s128
      %p140 = scmp.eq.s32.totalorder %s34, 1
      %p141 = por %p139, %p140
      %p143 = scmp.ne.s32.totalorder %s128, %s142
      %p144 = scmp.eq.s32.totalorder %s34, 0
      %p145 = por %p143, %p144
      %s147 = sadd.s32 %s146, 1
      %p150 = scmp.eq.s32.totalorder %s28, 1
      %p151 = scmp.ne.s32.totalorder %s146, %s148
      %p152 = scmp.eq.s32.totalorder %s28, 0
      %p153 = por %p151, %p152
      %p154 = scmp.ne.s32.totalorder %s146, %s148
      %p155 = scmp.eq.s32.totalorder %s33, 1
      %p156 = por %p154, %p155
      %p157 = scmp.ne.s32.totalorder %s148, %s149
      %p158 = scmp.eq.s32.totalorder %s33, 0
      %p159 = por %p157, %p158
      %p160 = scmp.ne.s32.totalorder %s148, %s149
      %p161 = scmp.eq.s32.totalorder %s34, 1
      %p162 = por %p160, %p161
      %p164 = scmp.ne.s32.totalorder %s149, %s163
      %p165 = scmp.eq.s32.totalorder %s34, 0
      %p166 = por %p164, %p165
      %s168 = sadd.s32 %s167, 1
      %p171 = scmp.eq.s32.totalorder %s28, 1
      %p172 = scmp.ne.s32.totalorder %s167, %s169
      %p173 = scmp.eq.s32.totalorder %s28, 0
      %p174 = por %p172, %p173
      %p175 = scmp.ne.s32.totalorder %s167, %s169
      %p176 = scmp.eq.s32.totalorder %s33, 1
      %p177 = por %p175, %p176
      %p178 = scmp.ne.s32.totalorder %s169, %s170
      %p179 = scmp.eq.s32.totalorder %s33, 0
      %p180 = por %p178, %p179
      %p181 = scmp.ne.s32.totalorder %s169, %s170
      %p182 = scmp.eq.s32.totalorder %s34, 1
      %p183 = por %p181, %p182
      %p185 = scmp.ne.s32.totalorder %s170, %s184
      %p186 = scmp.eq.s32.totalorder %s34, 0
      %p187 = por %p185, %p186
      %s189 = sadd.s32 %s188, 1
      %p192 = scmp.eq.s32.totalorder %s28, 1
      %p193 = scmp.ne.s32.totalorder %s188, %s190
      %p194 = scmp.eq.s32.totalorder %s28, 0
      %p195 = por %p193, %p194
      %p196 = scmp.ne.s32.totalorder %s188, %s190
      %p197 = scmp.eq.s32.totalorder %s33, 1
      %p198 = por %p196, %p197
      %p199 = scmp.ne.s32.totalorder %s190, %s191
      %p200 = scmp.eq.s32.totalorder %s33, 0
      %p201 = por %p199, %p200
      %p202 = scmp.ne.s32.totalorder %s190, %s191
      %p203 = scmp.eq.s32.totalorder %s34, 1
      %p204 = por %p202, %p203
      %p206 = scmp.ne.s32.totalorder %s191, %s205
      %p207 = scmp.eq.s32.totalorder %s34, 0
      %p208 = por %p206, %p207
      %s210 = sadd.s32 %s209, 1
      %p213 = scmp.eq.s32.totalorder %s28, 1
      %p214 = scmp.ne.s32.totalorder %s209, %s211
      %p215 = scmp.eq.s32.totalorder %s28, 0
      %p216 = por %p214, %p215
      %p217 = scmp.ne.s32.totalorder %s209, %s211
      %p218 = scmp.eq.s32.totalorder %s33, 1
      %p219 = por %p217, %p218
      %p220 = scmp.ne.s32.totalorder %s211, %s212
      %p221 = scmp.eq.s32.totalorder %s33, 0
      %p222 = por %p220, %p221
      %p223 = scmp.ne.s32.totalorder %s211, %s212
      %p224 = scmp.eq.s32.totalorder %s34, 1
      %p225 = por %p223, %p224
      %p227 = scmp.ne.s32.totalorder %s212, %s226
      %p228 = scmp.eq.s32.totalorder %s34, 0
      %p229 = por %p227, %p228
      %s231 = sadd.s32 %s230, 1
      %p234 = scmp.eq.s32.totalorder %s28, 1
      %p235 = scmp.ne.s32.totalorder %s230, %s232
      %p236 = scmp.eq.s32.totalorder %s28, 0
      %p237 = por %p235, %p236
      %p238 = scmp.ne.s32.totalorder %s230, %s232
      %p239 = scmp.eq.s32.totalorder %s33, 1
      %p240 = por %p238, %p239
      %p241 = scmp.ne.s32.totalorder %s232, %s233
      %p242 = scmp.eq.s32.totalorder %s33, 0
      %p243 = por %p241, %p242
      %p244 = scmp.ne.s32.totalorder %s232, %s233
      %p245 = scmp.eq.s32.totalorder %s34, 1
      %p246 = por %p244, %p245
      %p248 = scmp.ne.s32.totalorder %s233, %s247
      %p249 = scmp.eq.s32.totalorder %s34, 0
      %p250 = por %p248, %p249
      %s252 = sadd.s32 %s251, 1
      %p255 = scmp.eq.s32.totalorder %s28, 1
      %p256 = scmp.ne.s32.totalorder %s251, %s253
      %p257 = scmp.eq.s32.totalorder %s28, 0
      %p258 = por %p256, %p257
      %p259 = scmp.ne.s32.totalorder %s251, %s253
      %p260 = scmp.eq.s32.totalorder %s33, 1
      %p261 = por %p259, %p260
      %p262 = scmp.ne.s32.totalorder %s253, %s254
      %p263 = scmp.eq.s32.totalorder %s33, 0
      %p264 = por %p262, %p263
      %p265 = scmp.ne.s32.totalorder %s253, %s254
      %p266 = scmp.eq.s32.totalorder %s34, 1
      %p267 = por %p265, %p266
      %p269 = scmp.ne.s32.totalorder %s254, %s268
      %p270 = scmp.eq.s32.totalorder %s34, 0
      %p271 = por %p269, %p270
      %s273 = sadd.s32 %s272, 1
      %p276 = scmp.eq.s32.totalorder %s28, 1
      %p277 = scmp.ne.s32.totalorder %s272, %s274
      %p278 = scmp.eq.s32.totalorder %s28, 0
      %p279 = por %p277, %p278
      %p280 = scmp.ne.s32.totalorder %s272, %s274
      %p281 = scmp.eq.s32.totalorder %s33, 1
      %p282 = por %p280, %p281
      %p283 = scmp.ne.s32.totalorder %s274, %s275
      %p284 = scmp.eq.s32.totalorder %s33, 0
      %p285 = por %p283, %p284
      %p286 = scmp.ne.s32.totalorder %s274, %s275
      %p287 = scmp.eq.s32.totalorder %s34, 1
      %p288 = por %p286, %p287
      %p290 = scmp.ne.s32.totalorder %s275, %s289
      %p291 = scmp.eq.s32.totalorder %s34, 0
      %p292 = por %p290, %p291
      %s294 = sadd.s32 %s293, 1
      %p297 = scmp.eq.s32.totalorder %s28, 1
      %p298 = scmp.ne.s32.totalorder %s293, %s295
      %p299 = scmp.eq.s32.totalorder %s28, 0
      %p300 = por %p298, %p299
      %p301 = scmp.ne.s32.totalorder %s293, %s295
      %p302 = scmp.eq.s32.totalorder %s33, 1
      %p303 = por %p301, %p302
      %p304 = scmp.ne.s32.totalorder %s295, %s296
      %p305 = scmp.eq.s32.totalorder %s33, 0
      %p306 = por %p304, %p305
      %p307 = scmp.ne.s32.totalorder %s295, %s296
      %p308 = scmp.eq.s32.totalorder %s34, 1
      %p309 = por %p307, %p308
      %p311 = scmp.ne.s32.totalorder %s296, %s310
      %p312 = scmp.eq.s32.totalorder %s34, 0
      %p313 = por %p311, %p312
      %s314 = ssub.s32 %s28, %s35
      %p315 = scmp.eq.s32.totalorder %s314, 0
      %s317 = sadd.s32 %s316, 1
      %s318 = scalar_select %p315, %s316, %s317
      %p321 = pneg %p315
      %p322 = scmp.eq.s32.totalorder %s28, 1
      %p323 = por %p321, %p322
      %p324 = scmp.ne.s32.totalorder %s316, %s319
      %p325 = scmp.eq.s32.totalorder %s28, 0
      %p326 = por %p324, %p325
      %p327 = scmp.ne.s32.totalorder %s316, %s319
      %p328 = scmp.eq.s32.totalorder %s33, 1
      %p329 = por %p327, %p328
      %p330 = scmp.ne.s32.totalorder %s319, %s320
      %p331 = scmp.eq.s32.totalorder %s33, 0
      %p332 = por %p330, %p331
      %p333 = scmp.ne.s32.totalorder %s319, %s320
      %p334 = scmp.eq.s32.totalorder %s34, 1
      %p335 = por %p333, %p334
      %p337 = scmp.ne.s32.totalorder %s320, %s336
      %p338 = scmp.eq.s32.totalorder %s34, 0
      %p339 = por %p337, %p338
      %p340 = scmp.le.s32.totalorder 1, %s28
      %p341 = scmp.lt.s32.totalorder %s28, 3
      %p342 = pnand %p340, %p341
      %p343 = pneg %p342
      // Predicated region
      $region9: #{tpu_custom_call.1} parent=5 // pred_check
        _
      $region10: #{tpu_custom_call.1} parent=5 // pred_check_branch
        %345 = sbr.rel (%p342) target = $region12
      $region11: #{tpu_custom_call.1} parent=5 // pred_region
        %s346 = ssub.s32 %s28, 1
        // Predicated region
        $region13: #{tpu_custom_call.1} parent=11 // pred_check
          %p347 = pneg %p75
        $region14: #{tpu_custom_call.1} parent=11 // pred_check_branch
          %349 = sbr.rel (%p347) target = $region16
        $region15: #{tpu_custom_call.1} parent=11 // pred_region
          %s351 = ssub.s32 16, 16
          %352 = vsyncadd [#allocation6], %s351
          %s354 = sshll.u32 [#allocation5], 4
          %s355 = int_to_ptr.vmem [resolvable:$true] %s354
          %357 = dma.hbm_to_vmem [thread:$0]  %s1, 16, %s355, [#allocation6]
        $region16: #{tpu_custom_call.1} parent=11 // pred_fallthru
          _
        // Predicated region
        $region17: #{tpu_custom_call.1} parent=11 // pred_check
          %p358 = pneg %p96
        $region18: #{tpu_custom_call.1} parent=11 // pred_check_branch
          %360 = sbr.rel (%p358) target = $region20
        $region19: #{tpu_custom_call.1} parent=11 // pred_region
          %s362 = ssub.s32 16, 16
          %363 = vsyncadd [#allocation6], %s362
          %s365 = sshll.u32 [#allocation7], 4
          %s366 = int_to_ptr.vmem [resolvable:$true] %s365
          %368 = dma.hbm_to_vmem [thread:$0]  %s2, 16, %s366, [#allocation6]
        $region20: #{tpu_custom_call.1} parent=11 // pred_fallthru
          _
        // Predicated region
        $region21: #{tpu_custom_call.1} parent=11 // pred_check
          %p369 = pneg %p117
        $region22: #{tpu_custom_call.1} parent=11 // pred_check_branch
          %371 = sbr.rel (%p369) target = $region24
        $region23: #{tpu_custom_call.1} parent=11 // pred_region
          %s373 = ssub.s32 3072, 3072
          %374 = vsyncadd [#allocation9], %s373
          %s375 = sshll.u32 [#allocation8], 4
          %s376 = int_to_ptr.vmem [resolvable:$true] %s375
          %381 = dma.hbm_to_vmem [thread:$0]  %s3, 3072, %s376, [#allocation9], 192, 192, 12
        $region24: #{tpu_custom_call.1} parent=11 // pred_fallthru
          _
        // Predicated region
        $region25: #{tpu_custom_call.1} parent=11 // pred_check
          %p382 = pneg %p138
        $region26: #{tpu_custom_call.1} parent=11 // pred_check_branch
          %384 = sbr.rel (%p382) target = $region28
        $region27: #{tpu_custom_call.1} parent=11 // pred_region
          _
        $region28: #{tpu_custom_call.1} parent=11 // pred_fallthru
          _
        // Predicated region
        $region29: #{tpu_custom_call.1} parent=11 // pred_check
          %p385 = pneg %p159
        $region30: #{tpu_custom_call.1} parent=11 // pred_check_branch
          %387 = sbr.rel (%p385) target = $region32
        $region31: #{tpu_custom_call.1} parent=11 // pred_region
          %s389 = ssub.s32 1024, 1024
          %390 = vsyncadd [#allocation9], %s389
          %s391 = sshll.u32 [#allocation10], 4
          %s392 = int_to_ptr.vmem [resolvable:$true] %s391
          %397 = dma.hbm_to_vmem [thread:$0]  %s5, 1024, %s392, [#allocation9], 64, 64, 4
        $region32: #{tpu_custom_call.1} parent=11 // pred_fallthru
          _
        // Predicated region
        $region33: #{tpu_custom_call.1} parent=11 // pred_check
          %p398 = pneg %p180
        $region34: #{tpu_custom_call.1} parent=11 // pred_check_branch
          %400 = sbr.rel (%p398) target = $region36
        $region35: #{tpu_custom_call.1} parent=11 // pred_region
          _
        $region36: #{tpu_custom_call.1} parent=11 // pred_fallthru
          _
        // Predicated region
        $region37: #{tpu_custom_call.1} parent=11 // pred_check
          %p401 = pneg %p201
        $region38: #{tpu_custom_call.1} parent=11 // pred_check_branch
          %403 = sbr.rel (%p401) target = $region40
        $region39: #{tpu_custom_call.1} parent=11 // pred_region
          _
        $region40: #{tpu_custom_call.1} parent=11 // pred_fallthru
          _
        // Predicated region
        $region41: #{tpu_custom_call.1} parent=11 // pred_check
          %p404 = pneg %p222
        $region42: #{tpu_custom_call.1} parent=11 // pred_check_branch
          %406 = sbr.rel (%p404) target = $region44
        $region43: #{tpu_custom_call.1} parent=11 // pred_region
          _
        $region44: #{tpu_custom_call.1} parent=11 // pred_fallthru
          _
        // Predicated region
        $region45: #{tpu_custom_call.1} parent=11 // pred_check
          %p407 = pneg %p243
        $region46: #{tpu_custom_call.1} parent=11 // pred_check_branch
          %409 = sbr.rel (%p407) target = $region48
        $region47: #{tpu_custom_call.1} parent=11 // pred_region
          %s411 = ssub.s32 4096, 4096
          %412 = vsyncadd [#allocation12], %s411
          %s413 = sshll.u32 [#allocation11], 4
          %s414 = int_to_ptr.vmem [resolvable:$true] %s413
          %419 = dma.hbm_to_vmem [thread:$0]  %s9, 4096, %s414, [#allocation12], 256, 256, 16
        $region48: #{tpu_custom_call.1} parent=11 // pred_fallthru
          _
        // Predicated region
        $region49: #{tpu_custom_call.1} parent=11 // pred_check
          %p420 = pneg %p264
        $region50: #{tpu_custom_call.1} parent=11 // pred_check_branch
          %422 = sbr.rel (%p420) target = $region52
        $region51: #{tpu_custom_call.1} parent=11 // pred_region
          _
        $region52: #{tpu_custom_call.1} parent=11 // pred_fallthru
          _
        // Predicated region
        $region53: #{tpu_custom_call.1} parent=11 // pred_check
          %p423 = pneg %p285
        $region54: #{tpu_custom_call.1} parent=11 // pred_check_branch
          %425 = sbr.rel (%p423) target = $region56
        $region55: #{tpu_custom_call.1} parent=11 // pred_region
          %s427 = ssub.s32 4096, 4096
          %428 = vsyncadd [#allocation12], %s427
          %s429 = sshll.u32 [#allocation13], 4
          %s430 = int_to_ptr.vmem [resolvable:$true] %s429
          %435 = dma.hbm_to_vmem [thread:$0]  %s11, 4096, %s430, [#allocation12], 64, 64, 4
        $region56: #{tpu_custom_call.1} parent=11 // pred_fallthru
          _
        // Predicated region
        $region57: #{tpu_custom_call.1} parent=11 // pred_check
          %p436 = pneg %p306
        $region58: #{tpu_custom_call.1} parent=11 // pred_check_branch
          %438 = sbr.rel (%p436) target = $region60
        $region59: #{tpu_custom_call.1} parent=11 // pred_region
          _
        $region60: #{tpu_custom_call.1} parent=11 // pred_fallthru
          _
      $region12: #{tpu_custom_call.1} parent=5 // pred_fallthru
        _
      %p439 = scmp.lt.s32.totalorder %s28, 2
      // Predicated region
      $region61: #{tpu_custom_call.1} parent=5 // pred_check
        %p440 = pneg %p439
      $region62: #{tpu_custom_call.1} parent=5 // pred_check_branch
        %442 = sbr.rel (%p440) target = $region64
      $region63: #{tpu_custom_call.1} parent=5 // pred_region
        // Predicated region
        $region65: #{tpu_custom_call.1} parent=63 // pred_check
          %p443 = pneg %p48
        $region66: #{tpu_custom_call.1} parent=63 // pred_check_branch
          %445 = sbr.rel (%p443) target = $region68
        $region67: #{tpu_custom_call.1} parent=63 // pred_region
          %s446 = sand.u32 %s38, 1
          %s447 = scalar_lea.sflag [#allocation3], %s446
          %s448 = sand.u32 %s38, 1
          %s449 = smul.addr %s448, 8
          %s450 = scalar_lea.vmem [#allocation2], %s449
          %s452 = ssub.s32 128, 128
          %453 = vsyncadd %s447, %s452
          %s454 = smul.addr %s28, 128
          %s455 = scalar_lea.hbm %s0, %s454
          %s457 = sshll.u32 %s450, 4
          %s458 = int_to_ptr.vmem [resolvable:$true] %s457
          %460 = dma.hbm_to_vmem [thread:$0]  %s455, 128, %s458, %s447
        $region68: #{tpu_custom_call.1} parent=63 // pred_fallthru
          _
      $region64: #{tpu_custom_call.1} parent=5 // pred_fallthru
        _
      %p461 = scmp.le.s32.totalorder 1, %s28
      %p462 = scmp.lt.s32.totalorder %s28, 3
      %p463 = pnand %p461, %p462
      %p464 = pneg %p463
      // Predicated region
      $region69: #{tpu_custom_call.1} parent=5 // pred_check
        _
      $region70: #{tpu_custom_call.1} parent=5 // pred_check_branch
        %466 = sbr.rel (%p463) target = $region72
      $region71: #{tpu_custom_call.1} parent=5 // pred_region
        %s467 = ssub.s32 %s28, 1
        %s468 = sand.u32 %s41, 1
        %s469 = scalar_lea.sflag [#allocation3], %s468
        %s470 = sand.u32 %s41, 1
        %s471 = smul.addr %s470, 8
        %s472 = scalar_lea.vmem [#allocation2], %s471
        // Predicated region
        $region73: #{tpu_custom_call.1} parent=71 // pred_check
          %p473 = pneg %p54
        $region74: #{tpu_custom_call.1} parent=71 // pred_check_branch
          %475 = sbr.rel (%p473) target = $region76
        $region75: #{tpu_custom_call.1} parent=71 // pred_region
          %476 = dma.done %s469, 128
        $region76: #{tpu_custom_call.1} parent=71 // pred_fallthru
          _
        // Predicated region
        $region77: #{tpu_custom_call.1} parent=71 // pred_check
          %p477 = pneg %p75
        $region78: #{tpu_custom_call.1} parent=71 // pred_check_branch
          %479 = sbr.rel (%p477) target = $region80
        $region79: #{tpu_custom_call.1} parent=71 // pred_region
          %480 = dma.done [#allocation6], 16
        $region80: #{tpu_custom_call.1} parent=71 // pred_fallthru
          _
        // Predicated region
        $region81: #{tpu_custom_call.1} parent=71 // pred_check
          %p481 = pneg %p96
        $region82: #{tpu_custom_call.1} parent=71 // pred_check_branch
          %483 = sbr.rel (%p481) target = $region84
        $region83: #{tpu_custom_call.1} parent=71 // pred_region
          %484 = dma.done [#allocation6], 16
        $region84: #{tpu_custom_call.1} parent=71 // pred_fallthru
          _
        // Predicated region
        $region85: #{tpu_custom_call.1} parent=71 // pred_check
          %p485 = pneg %p117
        $region86: #{tpu_custom_call.1} parent=71 // pred_check_branch
          %487 = sbr.rel (%p485) target = $region88
        $region87: #{tpu_custom_call.1} parent=71 // pred_region
          %488 = dma.done [#allocation9], 3072
        $region88: #{tpu_custom_call.1} parent=71 // pred_fallthru
          _
        // Predicated region
        $region89: #{tpu_custom_call.1} parent=71 // pred_check
          %p489 = pneg %p159
        $region90: #{tpu_custom_call.1} parent=71 // pred_check_branch
          %491 = sbr.rel (%p489) target = $region92
        $region91: #{tpu_custom_call.1} parent=71 // pred_region
          %492 = dma.done [#allocation9], 1024
        $region92: #{tpu_custom_call.1} parent=71 // pred_fallthru
          _
        // Predicated region
        $region93: #{tpu_custom_call.1} parent=71 // pred_check
          %p493 = pneg %p243
        $region94: #{tpu_custom_call.1} parent=71 // pred_check_branch
          %495 = sbr.rel (%p493) target = $region96
        $region95: #{tpu_custom_call.1} parent=71 // pred_region
          %496 = dma.done [#allocation12], 4096
        $region96: #{tpu_custom_call.1} parent=71 // pred_fallthru
          _
        // Predicated region
        $region97: #{tpu_custom_call.1} parent=71 // pred_check
          %p497 = pneg %p285
        $region98: #{tpu_custom_call.1} parent=71 // pred_check_branch
          %499 = sbr.rel (%p497) target = $region100
        $region99: #{tpu_custom_call.1} parent=71 // pred_region
          %500 = dma.done [#allocation12], 4096
        $region100: #{tpu_custom_call.1} parent=71 // pred_fallthru
          _
        %s501 = sand.u32 %s41, 1
        %s502 = scalar_lea.sflag [#allocation3], %s501
        %s503 = sand.u32 %s41, 1
        %s504 = smul.addr %s503, 8
        %s505 = scalar_lea.vmem [#allocation2], %s504
        %p506 = pneg %p54
        %p507 = pneg %p51
        %p508 = pneg %p75
        %p509 = pneg %p72
        %p510 = pneg %p96
        %p511 = pneg %p93
        %p512 = pneg %p117
        %p513 = pneg %p114
        %p514 = pneg %p138
        %p515 = pneg %p135
        %p516 = pneg %p159
        %p517 = pneg %p156
        %p518 = pneg %p180
        %p519 = pneg %p177
        %p520 = pneg %p201
        %p521 = pneg %p198
        %p522 = pneg %p222
        %p523 = pneg %p219
        %p524 = pneg %p243
        %p525 = pneg %p240
        %p526 = pneg %p264
        %p527 = pneg %p261
        %p528 = pneg %p285
        %p529 = pneg %p282
        %p530 = pneg %p306
        %p531 = pneg %p303
        %p532 = pneg %p332
        %p533 = pneg %p329
        %s534 = sand.u32 %s319, 1
        %s535 = scalar_lea.sflag [#allocation4], %s534
        %s536 = sand.u32 %s319, 1
        %s537 = smul.addr %s536, 8
        %s538 = scalar_lea.vmem [#allocation14], %s537
        %v540 = vld [vmem:[%s472] sm:$0xff]
        %v541 = vld [vmem:[#allocation5] sm:$0x1]
        %v542 = vld [vmem:[#allocation7] sm:$0x1]
        %543 = vadd.xlane.f32.xlu0 %v540
        %v544 = vpop.xlane.xlu0 %543
        %v545 = vrcp.pop 128.0
        %v546 = vmul.f32 %v544, %v545
        %v547 = vsub.f32 %v540, %v546
        %v548 = vmul.f32 %v547, %v547
        %549 = vadd.xlane.f32.xlu0 %v548
        %v550 = vpop.xlane.xlu0 %549
        %v551 = vmul.f32 %v550, %v545
        %v552 = vadd.f32 %v551, 1e-05
        %v553 = vrsqrt.pop %v552
        %v554 = vmul.f32 %v547, %v553
        %v556 = vlaneseq
        %v557 = vshrl.u32 %v556, 7
        %v558 = vsub.s32 0, %v557
        %v559 = vrot.slane %v541, %v558
        %v561 = vmul.f32 %v554, %v559
        %v563 = vlaneseq
        %v564 = vshrl.u32 %v563, 7
        %v565 = vsub.s32 0, %v564
        %v566 = vrot.slane %v542, %v565
        %v568 = vadd.f32 %v561, %v566
        %v569 = vpack.c.bf16 %v568, %v568
        %v570 = vld [vmem:[#allocation8] sm:$0xff]
        %v571 = vld [vmem:[#allocation8 + $0x8] sm:$0xf]
        %v572 = vld [vmem:[#allocation8 + $0xc] sm:$0xff]
        %v573 = vld [vmem:[#allocation8 + $0x14] sm:$0xf]
        %v574 = vld [vmem:[#allocation8 + $0x18] sm:$0xff]
        %v575 = vld [vmem:[#allocation8 + $0x20] sm:$0xf]
        %v576 = vld [vmem:[#allocation8 + $0x24] sm:$0xff]
        %v577 = vld [vmem:[#allocation8 + $0x2c] sm:$0xf]
        %v578 = vld [vmem:[#allocation8 + $0x30] sm:$0xff]
        %v579 = vld [vmem:[#allocation8 + $0x38] sm:$0xf]
        %v580 = vld [vmem:[#allocation8 + $0x3c] sm:$0xff]
        %v581 = vld [vmem:[#allocation8 + $0x44] sm:$0xf]
        %v582 = vld [vmem:[#allocation8 + $0x48] sm:$0xff]
        %v583 = vld [vmem:[#allocation8 + $0x50] sm:$0xf]
        %v584 = vld [vmem:[#allocation8 + $0x54] sm:$0xff]
        %v585 = vld [vmem:[#allocation8 + $0x5c] sm:$0xf]
        %v586 = vld [vmem:[#allocation8 + $0x60] sm:$0xff]
        %v587 = vld [vmem:[#allocation8 + $0x68] sm:$0xf]
        %v588 = vld [vmem:[#allocation8 + $0x6c] sm:$0xff]
        %v589 = vld [vmem:[#allocation8 + $0x74] sm:$0xf]
        %v590 = vld [vmem:[#allocation8 + $0x78] sm:$0xff]
        %v591 = vld [vmem:[#allocation8 + $0x80] sm:$0xf]
        %v592 = vld [vmem:[#allocation8 + $0x84] sm:$0xff]
        %v593 = vld [vmem:[#allocation8 + $0x8c] sm:$0xf]
        %v594 = vld [vmem:[#allocation8 + $0x90] sm:$0xff]
        %v595 = vld [vmem:[#allocation8 + $0x98] sm:$0xf]
        %v596 = vld [vmem:[#allocation8 + $0x9c] sm:$0xff]
        %v597 = vld [vmem:[#allocation8 + $0xa4] sm:$0xf]
        %v598 = vld [vmem:[#allocation8 + $0xa8] sm:$0xff]
        %v599 = vld [vmem:[#allocation8 + $0xb0] sm:$0xf]
        %v600 = vld [vmem:[#allocation8 + $0xb4] sm:$0xff]
        %v601 = vld [vmem:[#allocation8 + $0xbc] sm:$0xf]
        %v602 = vld [vmem:[%s4] sm:$0x7]
        %v604 = vlaneseq
        %v605 = vshrl.u32 %v604, 7
        %v606 = vsub.s32 0, %v605
        %v607 = vrot.slane %v602, %v606
        %v608 = vlaneseq
        %v609 = vshrl.u32 %v608, 7
        %v610 = vsub.s32 1, %v609
        %v611 = vrot.slane %v602, %v610
        %v612 = vlaneseq
        %v613 = vshrl.u32 %v612, 7
        %v614 = vsub.s32 2, %v613
        %v615 = vrot.slane %v602, %v614
        %v651 = vunpack.c.l.b16 %v570
        %v652 = vunpack.c.h.b16 %v570
        %v653 = vunpack.c.l.b16 %v571
        %v654 = vunpack.c.l.b16 %v572
        %v655 = vunpack.c.h.b16 %v572
        %v656 = vunpack.c.l.b16 %v573
        %v657 = vunpack.c.l.b16 %v574
        %v658 = vunpack.c.h.b16 %v574
        %v659 = vunpack.c.l.b16 %v575
        %v660 = vunpack.c.l.b16 %v576
        %v661 = vunpack.c.h.b16 %v576
        %v662 = vunpack.c.l.b16 %v577
        %v663 = vunpack.c.l.b16 %v578
        %v664 = vunpack.c.h.b16 %v578
        %v665 = vunpack.c.l.b16 %v579
        %v666 = vunpack.c.l.b16 %v580
        %v667 = vunpack.c.h.b16 %v580
        %v668 = vunpack.c.l.b16 %v581
        %v669 = vunpack.c.l.b16 %v582
        %v670 = vunpack.c.h.b16 %v582
        %v671 = vunpack.c.l.b16 %v583
        %v672 = vunpack.c.l.b16 %v584
        %v673 = vunpack.c.h.b16 %v584
        %v674 = vunpack.c.l.b16 %v585
        %v675 = vunpack.c.l.b16 %v586
        %v676 = vunpack.c.h.b16 %v586
        %v677 = vunpack.c.l.b16 %v587
        %v678 = vunpack.c.l.b16 %v588
        %v679 = vunpack.c.h.b16 %v588
        %v680 = vunpack.c.l.b16 %v589
        %v681 = vunpack.c.l.b16 %v590
        %v682 = vunpack.c.h.b16 %v590
        %v683 = vunpack.c.l.b16 %v591
        %v684 = vunpack.c.l.b16 %v592
        %v685 = vunpack.c.h.b16 %v592
        %v686 = vunpack.c.l.b16 %v593
        %v687 = vunpack.c.l.b16 %v594
        %v688 = vunpack.c.h.b16 %v594
        %v689 = vunpack.c.l.b16 %v595
        %v690 = vunpack.c.l.b16 %v596
        %v691 = vunpack.c.h.b16 %v596
        %v692 = vunpack.c.l.b16 %v597
        %v693 = vunpack.c.l.b16 %v598
        %v694 = vunpack.c.h.b16 %v598
        %v695 = vunpack.c.l.b16 %v599
        %v696 = vunpack.c.l.b16 %v600
        %v697 = vunpack.c.h.b16 %v600
        %v698 = vunpack.c.l.b16 %v601
        %v699 = vpack.c.b16 %v654, %v651
        %v700 = vpack.c.b16 %v655, %v652
        %v701 = vpack.c.b16 %v656, %v653
        %v702 = vpack.c.b16 %v660, %v657
        %v703 = vpack.c.b16 %v661, %v658
        %v704 = vpack.c.b16 %v662, %v659
        %v705 = vpack.c.b16 %v666, %v663
        %v706 = vpack.c.b16 %v667, %v664
        %v707 = vpack.c.b16 %v668, %v665
        %v708 = vpack.c.b16 %v672, %v669
        %v709 = vpack.c.b16 %v673, %v670
        %v710 = vpack.c.b16 %v674, %v671
        %v711 = vpack.c.b16 %v678, %v675
        %v712 = vpack.c.b16 %v679, %v676
        %v713 = vpack.c.b16 %v680, %v677
        %v714 = vpack.c.b16 %v684, %v681
        %v715 = vpack.c.b16 %v685, %v682
        %v716 = vpack.c.b16 %v686, %v683
        %v717 = vpack.c.b16 %v690, %v687
        %v718 = vpack.c.b16 %v691, %v688
        %v719 = vpack.c.b16 %v692, %v689
        %v720 = vpack.c.b16 %v696, %v693
        %v721 = vpack.c.b16 %v697, %v694
        %v722 = vpack.c.b16 %v698, %v695
        %747 = vmatprep.subr.bf16.mxu0 %v700
        %748 = vmatpush1.bf16.msra.mxu0 %v699
        %749 = vmatprep.subr.bf16.mxu0 %v703
        %750 = vmatpush1.bf16.msra.mxu0 %v702
        %751 = vmatprep.subr.bf16.mxu0 %v706
        %752 = vmatpush1.bf16.msra.mxu0 %v705
        %753 = vmatprep.subr.bf16.mxu0 %v709
        %754 = vmatpush1.bf16.msra.mxu0 %v708
        %755 = vmatprep.subr.bf16.mxu0 %v712
        %756 = vmatpush1.bf16.msra.mxu0 %v711
        %757 = vmatprep.subr.bf16.mxu0 %v715
        %758 = vmatpush1.bf16.msra.mxu0 %v714
        %759 = vmatprep.subr.bf16.mxu0 %v718
        %760 = vmatpush1.bf16.msra.mxu0 %v717
        %761 = vmatprep.subr.bf16.mxu0 %v721
        %762 = vmatpush1.bf16.msra.mxu0 %v720
        %763 = vmatprep.subr.bf16.mxu0 0
        %764 = vmatpush1.bf16.msra.mxu0 0
        %765 = vmatprep.subr.bf16.mxu0 0
        %766 = vmatpush1.bf16.msra.mxu0 0
        %767 = vmatprep.subr.bf16.mxu0 0
        %768 = vmatpush1.bf16.msra.mxu0 0
        %769 = vmatprep.subr.bf16.mxu0 0
        %770 = vmatpush1.bf16.msra.mxu0 0
        %771 = vmatprep.subr.bf16.mxu0 0
        %772 = vmatpush1.bf16.msra.mxu0 0
        %773 = vmatprep.subr.bf16.mxu0 0
        %774 = vmatpush1.bf16.msra.mxu0 0
        %775 = vmatprep.subr.bf16.mxu0 0
        %776 = vmatpush1.bf16.msra.mxu0 0
        %777 = vmatprep.subr.bf16.mxu0 0
        %778 = vmatpush1.bf16.msra.mxu0 0
        %779 = vmatprep.mubr.bf16.mxu0 0
        %780 = vmatmul.mubr.bf16.gmra.mrb[0].mxu0 %v569
        %v781 = vpop.f32.mrb[0].mxu0
        %v782 = vadd.f32 %v607, %v781
        %v783 = vpop.f32.mrb[0].mxu0
        %v784 = vadd.f32 %v611, %v783
        %v785 = vpop.f32.mrb[0].mxu0
        %v786 = vpop.f32.mrb[0].mxu0
        %787 = vdwg.mxu0
        %788 = vmatprep.subr.bf16.mxu0 0
        %789 = vmatpush1.bf16.msra.mxu0 %v701
        %790 = vmatprep.subr.bf16.mxu0 0
        %791 = vmatpush1.bf16.msra.mxu0 %v704
        %792 = vmatprep.subr.bf16.mxu0 0
        %793 = vmatpush1.bf16.msra.mxu0 %v707
        %794 = vmatprep.subr.bf16.mxu0 0
        %795 = vmatpush1.bf16.msra.mxu0 %v710
        %796 = vmatprep.subr.bf16.mxu0 0
        %797 = vmatpush1.bf16.msra.mxu0 %v713
        %798 = vmatprep.subr.bf16.mxu0 0
        %799 = vmatpush1.bf16.msra.mxu0 %v716
        %800 = vmatprep.subr.bf16.mxu0 0
        %801 = vmatpush1.bf16.msra.mxu0 %v719
        %802 = vmatprep.subr.bf16.mxu0 0
        %803 = vmatpush1.bf16.msra.mxu0 %v722
        %804 = vmatprep.subr.bf16.mxu0 0
        %805 = vmatpush1.bf16.msra.mxu0 0
        %806 = vmatprep.subr.bf16.mxu0 0
        %807 = vmatpush1.bf16.msra.mxu0 0
        %808 = vmatprep.subr.bf16.mxu0 0
        %809 = vmatpush1.bf16.msra.mxu0 0
        %810 = vmatprep.subr.bf16.mxu0 0
        %811 = vmatpush1.bf16.msra.mxu0 0
        %812 = vmatprep.subr.bf16.mxu0 0
        %813 = vmatpush1.bf16.msra.mxu0 0
        %814 = vmatprep.subr.bf16.mxu0 0
        %815 = vmatpush1.bf16.msra.mxu0 0
        %816 = vmatprep.subr.bf16.mxu0 0
        %817 = vmatpush1.bf16.msra.mxu0 0
        %818 = vmatprep.subr.bf16.mxu0 0
        %819 = vmatpush1.bf16.msra.mxu0 0
        %820 = vmatprep.mubr.bf16.mxu0 0
        %821 = vmatmul.mubr.bf16.gmra.mrb[0].mxu0 %v569
        %v822 = vpop.f32.mrb[0].mxu0
        %v823 = vadd.f32 %v615, %v822
        %v824 = vpop.f32.mrb[0].mxu0
        %v825 = vpop.f32.mrb[0].mxu0
        %v826 = vpop.f32.mrb[0].mxu0
        %827 = vdwg.mxu0
        %829 = vrot.lane.b32.xlu0 %v782, 112
        %v830 = vpop.permute.xlu0 %829
        %832 = vrot.lane.b32.xlu0 %v782, 96
        %v833 = vpop.permute.xlu0 %832
        %835 = vrot.lane.b32.xlu0 %v782, 80
        %v836 = vpop.permute.xlu0 %835
        %838 = vrot.lane.b32.xlu0 %v782, 64
        %v839 = vpop.permute.xlu0 %838
        %841 = vrot.lane.b32.xlu0 %v782, 48
        %v842 = vpop.permute.xlu0 %841
        %844 = vrot.lane.b32.xlu0 %v782, 32
        %v845 = vpop.permute.xlu0 %844
        %847 = vrot.lane.b32.xlu0 %v782, 16
        %v848 = vpop.permute.xlu0 %847
        %v850 = vcombine.low %v782, %v833
        %v851 = vcombine.high %v782, %v833
        %v853 = vunpack.c.l.s4 1983009808
        %v854 = vunpack.c.0.s8 %v853
        %v855 = vlaneseq
        %v856 = vshrl.u32 %v855, 7
        %v857 = vsub.s32 %v854, %v856
        %v858 = vrot.slane %v850, %v857
        %v860 = vunpack.c.l.s4 1983009808
        %v861 = vunpack.c.0.s8 %v860
        %v862 = vlaneseq
        %v863 = vshrl.u32 %v862, 7
        %v864 = vsub.s32 %v861, %v863
        %v865 = vrot.slane %v851, %v864
        %v866 = vcombine.low %v830, %v836
        %v867 = vcombine.high %v830, %v836
        %v869 = vunpack.c.l.s4 1983009808
        %v870 = vunpack.c.0.s8 %v869
        %v871 = vlaneseq
        %v872 = vshrl.u32 %v871, 7
        %v873 = vsub.s32 %v870, %v872
        %v874 = vrot.slane %v866, %v873
        %v876 = vunpack.c.l.s4 1983009808
        %v877 = vunpack.c.0.s8 %v876
        %v878 = vlaneseq
        %v879 = vshrl.u32 %v878, 7
        %v880 = vsub.s32 %v877, %v879
        %v881 = vrot.slane %v867, %v880
        %v882 = vcombine.low %v839, %v845
        %v883 = vcombine.high %v839, %v845
        %v885 = vunpack.c.l.s4 1983009808
        %v886 = vunpack.c.0.s8 %v885
        %v887 = vlaneseq
        %v888 = vshrl.u32 %v887, 7
        %v889 = vsub.s32 %v886, %v888
        %v890 = vrot.slane %v882, %v889
        %v892 = vunpack.c.l.s4 1983009808
        %v893 = vunpack.c.0.s8 %v892
        %v894 = vlaneseq
        %v895 = vshrl.u32 %v894, 7
        %v896 = vsub.s32 %v893, %v895
        %v897 = vrot.slane %v883, %v896
        %v898 = vcombine.low %v842, %v848
        %v899 = vcombine.high %v842, %v848
        %v901 = vunpack.c.l.s4 1983009808
        %v902 = vunpack.c.0.s8 %v901
        %v903 = vlaneseq
        %v904 = vshrl.u32 %v903, 7
        %v905 = vsub.s32 %v902, %v904
        %v906 = vrot.slane %v898, %v905
        %v908 = vunpack.c.l.s4 1983009808
        %v909 = vunpack.c.0.s8 %v908
        %v910 = vlaneseq
        %v911 = vshrl.u32 %v910, 7
        %v912 = vsub.s32 %v909, %v911
        %v913 = vrot.slane %v899, %v912
        %v914 = vcombine.low %v858, %v874
        %v915 = vcombine.high %v858, %v874
        %v917 = vunpack.c.l.s4 1934713408
        %v918 = vunpack.c.0.s8 %v917
        %v919 = vlaneseq
        %v920 = vshrl.u32 %v919, 7
        %v921 = vsub.s32 %v918, %v920
        %v922 = vrot.slane %v914, %v921
        %v924 = vunpack.c.l.s4 1934713408
        %v925 = vunpack.c.0.s8 %v924
        %v926 = vlaneseq
        %v927 = vshrl.u32 %v926, 7
        %v928 = vsub.s32 %v925, %v927
        %v929 = vrot.slane %v915, %v928
        %v930 = vcombine.low %v865, %v881
        %v931 = vcombine.high %v865, %v881
        %v933 = vunpack.c.l.s4 1934713408
        %v934 = vunpack.c.0.s8 %v933
        %v935 = vlaneseq
        %v936 = vshrl.u32 %v935, 7
        %v937 = vsub.s32 %v934, %v936
        %v938 = vrot.slane %v930, %v937
        %v940 = vunpack.c.l.s4 1934713408
        %v941 = vunpack.c.0.s8 %v940
        %v942 = vlaneseq
        %v943 = vshrl.u32 %v942, 7
        %v944 = vsub.s32 %v941, %v943
        %v945 = vrot.slane %v931, %v944
        %v946 = vcombine.low %v890, %v906
        %v947 = vcombine.high %v890, %v906
        %v949 = vunpack.c.l.s4 1934713408
        %v950 = vunpack.c.0.s8 %v949
        %v951 = vlaneseq
        %v952 = vshrl.u32 %v951, 7
        %v953 = vsub.s32 %v950, %v952
        %v954 = vrot.slane %v946, %v953
        %v956 = vunpack.c.l.s4 1934713408
        %v957 = vunpack.c.0.s8 %v956
        %v958 = vlaneseq
        %v959 = vshrl.u32 %v958, 7
        %v960 = vsub.s32 %v957, %v959
        %v961 = vrot.slane %v947, %v960
        %v962 = vcombine.low %v897, %v913
        %v963 = vcombine.high %v897, %v913
        %v965 = vunpack.c.l.s4 1934713408
        %v966 = vunpack.c.0.s8 %v965
        %v967 = vlaneseq
        %v968 = vshrl.u32 %v967, 7
        %v969 = vsub.s32 %v966, %v968
        %v970 = vrot.slane %v962, %v969
        %v972 = vunpack.c.l.s4 1934713408
        %v973 = vunpack.c.0.s8 %v972
        %v974 = vlaneseq
        %v975 = vshrl.u32 %v974, 7
        %v976 = vsub.s32 %v973, %v975
        %v977 = vrot.slane %v963, %v976
        %v978 = vcombine.low %v922, %v954
        %v979 = vcombine.high %v922, %v954
        %v980 = vcombine.low %v929, %v961
        %v981 = vcombine.high %v929, %v961
        %v982 = vcombine.low %v938, %v970
        %v983 = vcombine.high %v938, %v970
        %v984 = vcombine.low %v945, %v977
        %v985 = vcombine.high %v945, %v977
        %v986 = vcombine.low %v978, %v980
        %v987 = vcombine.high %v978, %v980
        %v989 = vunpack.c.l.s4 1983009808
        %v990 = vunpack.c.0.s8 %v989
        %v991 = vlaneseq
        %v992 = vshrl.u32 %v991, 7
        %v993 = vsub.s32 %v990, %v992
        %v994 = vrot.slane %v986, %v993
        %v996 = vunpack.c.l.s4 1983009808
        %v997 = vunpack.c.0.s8 %v996
        %v998 = vlaneseq
        %v999 = vshrl.u32 %v998, 7
        %v1000 = vsub.s32 %v997, %v999
        %v1001 = vrot.slane %v987, %v1000
        %v1002 = vcombine.low %v979, %v981
        %v1003 = vcombine.high %v979, %v981
        %v1005 = vunpack.c.l.s4 1983009808
        %v1006 = vunpack.c.0.s8 %v1005
        %v1007 = vlaneseq
        %v1008 = vshrl.u32 %v1007, 7
        %v1009 = vsub.s32 %v1006, %v1008
        %v1010 = vrot.slane %v1002, %v1009
        %v1012 = vunpack.c.l.s4 1983009808
        %v1013 = vunpack.c.0.s8 %v1012
        %v1014 = vlaneseq
        %v1015 = vshrl.u32 %v1014, 7
        %v1016 = vsub.s32 %v1013, %v1015
        %v1017 = vrot.slane %v1003, %v1016
        %v1018 = vcombine.low %v982, %v984
        %v1019 = vcombine.high %v982, %v984
        %v1021 = vunpack.c.l.s4 1983009808
        %v1022 = vunpack.c.0.s8 %v1021
        %v1023 = vlaneseq
        %v1024 = vshrl.u32 %v1023, 7
        %v1025 = vsub.s32 %v1022, %v1024
        %v1026 = vrot.slane %v1018, %v1025
        %v1028 = vunpack.c.l.s4 1983009808
        %v1029 = vunpack.c.0.s8 %v1028
        %v1030 = vlaneseq
        %v1031 = vshrl.u32 %v1030, 7
        %v1032 = vsub.s32 %v1029, %v1031
        %v1033 = vrot.slane %v1019, %v1032
        %v1034 = vcombine.low %v983, %v985
        %v1035 = vcombine.high %v983, %v985
        %v1037 = vunpack.c.l.s4 1983009808
        %v1038 = vunpack.c.0.s8 %v1037
        %v1039 = vlaneseq
        %v1040 = vshrl.u32 %v1039, 7
        %v1041 = vsub.s32 %v1038, %v1040
        %v1042 = vrot.slane %v1034, %v1041
        %v1044 = vunpack.c.l.s4 1983009808
        %v1045 = vunpack.c.0.s8 %v1044
        %v1046 = vlaneseq
        %v1047 = vshrl.u32 %v1046, 7
        %v1048 = vsub.s32 %v1045, %v1047
        %v1049 = vrot.slane %v1035, %v1048
        %v1050 = vcombine.low %v994, %v1010
        %v1051 = vcombine.high %v994, %v1010
        %v1053 = vunpack.c.l.s4 1934713408
        %v1054 = vunpack.c.0.s8 %v1053
        %v1055 = vlaneseq
        %v1056 = vshrl.u32 %v1055, 7
        %v1057 = vsub.s32 %v1054, %v1056
        %v1058 = vrot.slane %v1050, %v1057
        %v1060 = vunpack.c.l.s4 1934713408
        %v1061 = vunpack.c.0.s8 %v1060
        %v1062 = vlaneseq
        %v1063 = vshrl.u32 %v1062, 7
        %v1064 = vsub.s32 %v1061, %v1063
        %v1065 = vrot.slane %v1051, %v1064
        %v1066 = vcombine.low %v1001, %v1017
        %v1067 = vcombine.high %v1001, %v1017
        %v1069 = vunpack.c.l.s4 1934713408
        %v1070 = vunpack.c.0.s8 %v1069
        %v1071 = vlaneseq
        %v1072 = vshrl.u32 %v1071, 7
        %v1073 = vsub.s32 %v1070, %v1072
        %v1074 = vrot.slane %v1066, %v1073
        %v1076 = vunpack.c.l.s4 1934713408
        %v1077 = vunpack.c.0.s8 %v1076
        %v1078 = vlaneseq
        %v1079 = vshrl.u32 %v1078, 7
        %v1080 = vsub.s32 %v1077, %v1079
        %v1081 = vrot.slane %v1067, %v1080
        %v1082 = vcombine.low %v1026, %v1042
        %v1083 = vcombine.high %v1026, %v1042
        %v1085 = vunpack.c.l.s4 1934713408
        %v1086 = vunpack.c.0.s8 %v1085
        %v1087 = vlaneseq
        %v1088 = vshrl.u32 %v1087, 7
        %v1089 = vsub.s32 %v1086, %v1088
        %v1090 = vrot.slane %v1082, %v1089
        %v1092 = vunpack.c.l.s4 1934713408
        %v1093 = vunpack.c.0.s8 %v1092
        %v1094 = vlaneseq
        %v1095 = vshrl.u32 %v1094, 7
        %v1096 = vsub.s32 %v1093, %v1095
        %v1097 = vrot.slane %v1083, %v1096
        %v1098 = vcombine.low %v1033, %v1049
        %v1099 = vcombine.high %v1033, %v1049
        %v1101 = vunpack.c.l.s4 1934713408
        %v1102 = vunpack.c.0.s8 %v1101
        %v1103 = vlaneseq
        %v1104 = vshrl.u32 %v1103, 7
        %v1105 = vsub.s32 %v1102, %v1104
        %v1106 = vrot.slane %v1098, %v1105
        %v1108 = vunpack.c.l.s4 1934713408
        %v1109 = vunpack.c.0.s8 %v1108
        %v1110 = vlaneseq
        %v1111 = vshrl.u32 %v1110, 7
        %v1112 = vsub.s32 %v1109, %v1111
        %v1113 = vrot.slane %v1099, %v1112
        %v1114 = vcombine.low %v1058, %v1090
        %v1115 = vcombine.high %v1058, %v1090
        %v1116 = vcombine.low %v1065, %v1097
        %v1117 = vcombine.high %v1065, %v1097
        %v1118 = vcombine.low %v1074, %v1106
        %v1119 = vcombine.high %v1074, %v1106
        %v1120 = vcombine.low %v1081, %v1113
        %v1121 = vcombine.high %v1081, %v1113
        %v1122 = vpack.c.bf16 %v1114, %v1114
        %v1123 = vpack.c.bf16 %v1115, %v1115
        %v1124 = vpack.c.bf16 %v1116, %v1116
        %v1125 = vpack.c.bf16 %v1117, %v1117
        %v1126 = vpack.c.bf16 %v1118, %v1118
        %v1127 = vpack.c.bf16 %v1119, %v1119
        %v1128 = vpack.c.bf16 %v1120, %v1120
        %v1129 = vpack.c.bf16 %v1121, %v1121
        %1131 = vrot.lane.b32.xlu0 %v784, 112
        %v1132 = vpop.permute.xlu0 %1131
        %1134 = vrot.lane.b32.xlu0 %v784, 96
        %v1135 = vpop.permute.xlu0 %1134
        %1137 = vrot.lane.b32.xlu0 %v784, 80
        %v1138 = vpop.permute.xlu0 %1137
        %1140 = vrot.lane.b32.xlu0 %v784, 64
        %v1141 = vpop.permute.xlu0 %1140
        %1143 = vrot.lane.b32.xlu0 %v784, 48
        %v1144 = vpop.permute.xlu0 %1143
        %1146 = vrot.lane.b32.xlu0 %v784, 32
        %v1147 = vpop.permute.xlu0 %1146
        %1149 = vrot.lane.b32.xlu0 %v784, 16
        %v1150 = vpop.permute.xlu0 %1149
        %v1152 = vcombine.low %v784, %v1135
        %v1153 = vcombine.high %v784, %v1135
        %v1155 = vunpack.c.l.s4 1983009808
        %v1156 = vunpack.c.0.s8 %v1155
        %v1157 = vlaneseq
        %v1158 = vshrl.u32 %v1157, 7
        %v1159 = vsub.s32 %v1156, %v1158
        %v1160 = vrot.slane %v1152, %v1159
        %v1162 = vunpack.c.l.s4 1983009808
        %v1163 = vunpack.c.0.s8 %v1162
        %v1164 = vlaneseq
        %v1165 = vshrl.u32 %v1164, 7
        %v1166 = vsub.s32 %v1163, %v1165
        %v1167 = vrot.slane %v1153, %v1166
        %v1168 = vcombine.low %v1132, %v1138
        %v1169 = vcombine.high %v1132, %v1138
        %v1171 = vunpack.c.l.s4 1983009808
        %v1172 = vunpack.c.0.s8 %v1171
        %v1173 = vlaneseq
        %v1174 = vshrl.u32 %v1173, 7
        %v1175 = vsub.s32 %v1172, %v1174
        %v1176 = vrot.slane %v1168, %v1175
        %v1178 = vunpack.c.l.s4 1983009808
        %v1179 = vunpack.c.0.s8 %v1178
        %v1180 = vlaneseq
        %v1181 = vshrl.u32 %v1180, 7
        %v1182 = vsub.s32 %v1179, %v1181
        %v1183 = vrot.slane %v1169, %v1182
        %v1184 = vcombine.low %v1141, %v1147
        %v1185 = vcombine.high %v1141, %v1147
        %v1187 = vunpack.c.l.s4 1983009808
        %v1188 = vunpack.c.0.s8 %v1187
        %v1189 = vlaneseq
        %v1190 = vshrl.u32 %v1189, 7
        %v1191 = vsub.s32 %v1188, %v1190
        %v1192 = vrot.slane %v1184, %v1191
        %v1194 = vunpack.c.l.s4 1983009808
        %v1195 = vunpack.c.0.s8 %v1194
        %v1196 = vlaneseq
        %v1197 = vshrl.u32 %v1196, 7
        %v1198 = vsub.s32 %v1195, %v1197
        %v1199 = vrot.slane %v1185, %v1198
        %v1200 = vcombine.low %v1144, %v1150
        %v1201 = vcombine.high %v1144, %v1150
        %v1203 = vunpack.c.l.s4 1983009808
        %v1204 = vunpack.c.0.s8 %v1203
        %v1205 = vlaneseq
        %v1206 = vshrl.u32 %v1205, 7
        %v1207 = vsub.s32 %v1204, %v1206
        %v1208 = vrot.slane %v1200, %v1207
        %v1210 = vunpack.c.l.s4 1983009808
        %v1211 = vunpack.c.0.s8 %v1210
        %v1212 = vlaneseq
        %v1213 = vshrl.u32 %v1212, 7
        %v1214 = vsub.s32 %v1211, %v1213
        %v1215 = vrot.slane %v1201, %v1214
        %v1216 = vcombine.low %v1160, %v1176
        %v1217 = vcombine.high %v1160, %v1176
        %v1219 = vunpack.c.l.s4 1934713408
        %v1220 = vunpack.c.0.s8 %v1219
        %v1221 = vlaneseq
        %v1222 = vshrl.u32 %v1221, 7
        %v1223 = vsub.s32 %v1220, %v1222
        %v1224 = vrot.slane %v1216, %v1223
        %v1226 = vunpack.c.l.s4 1934713408
        %v1227 = vunpack.c.0.s8 %v1226
        %v1228 = vlaneseq
        %v1229 = vshrl.u32 %v1228, 7
        %v1230 = vsub.s32 %v1227, %v1229
        %v1231 = vrot.slane %v1217, %v1230
        %v1232 = vcombine.low %v1167, %v1183
        %v1233 = vcombine.high %v1167, %v1183
        %v1235 = vunpack.c.l.s4 1934713408
        %v1236 = vunpack.c.0.s8 %v1235
        %v1237 = vlaneseq
        %v1238 = vshrl.u32 %v1237, 7
        %v1239 = vsub.s32 %v1236, %v1238
        %v1240 = vrot.slane %v1232, %v1239
        %v1242 = vunpack.c.l.s4 1934713408
        %v1243 = vunpack.c.0.s8 %v1242
        %v1244 = vlaneseq
        %v1245 = vshrl.u32 %v1244, 7
        %v1246 = vsub.s32 %v1243, %v1245
        %v1247 = vrot.slane %v1233, %v1246
        %v1248 = vcombine.low %v1192, %v1208
        %v1249 = vcombine.high %v1192, %v1208
        %v1251 = vunpack.c.l.s4 1934713408
        %v1252 = vunpack.c.0.s8 %v1251
        %v1253 = vlaneseq
        %v1254 = vshrl.u32 %v1253, 7
        %v1255 = vsub.s32 %v1252, %v1254
        %v1256 = vrot.slane %v1248, %v1255
        %v1258 = vunpack.c.l.s4 1934713408
        %v1259 = vunpack.c.0.s8 %v1258
        %v1260 = vlaneseq
        %v1261 = vshrl.u32 %v1260, 7
        %v1262 = vsub.s32 %v1259, %v1261
        %v1263 = vrot.slane %v1249, %v1262
        %v1264 = vcombine.low %v1199, %v1215
        %v1265 = vcombine.high %v1199, %v1215
        %v1267 = vunpack.c.l.s4 1934713408
        %v1268 = vunpack.c.0.s8 %v1267
        %v1269 = vlaneseq
        %v1270 = vshrl.u32 %v1269, 7
        %v1271 = vsub.s32 %v1268, %v1270
        %v1272 = vrot.slane %v1264, %v1271
        %v1274 = vunpack.c.l.s4 1934713408
        %v1275 = vunpack.c.0.s8 %v1274
        %v1276 = vlaneseq
        %v1277 = vshrl.u32 %v1276, 7
        %v1278 = vsub.s32 %v1275, %v1277
        %v1279 = vrot.slane %v1265, %v1278
        %v1280 = vcombine.low %v1224, %v1256
        %v1281 = vcombine.high %v1224, %v1256
        %v1282 = vcombine.low %v1231, %v1263
        %v1283 = vcombine.high %v1231, %v1263
        %v1284 = vcombine.low %v1240, %v1272
        %v1285 = vcombine.high %v1240, %v1272
        %v1286 = vcombine.low %v1247, %v1279
        %v1287 = vcombine.high %v1247, %v1279
        %v1288 = vcombine.low %v1280, %v1282
        %v1289 = vcombine.high %v1280, %v1282
        %v1291 = vunpack.c.l.s4 1983009808
        %v1292 = vunpack.c.0.s8 %v1291
        %v1293 = vlaneseq
        %v1294 = vshrl.u32 %v1293, 7
        %v1295 = vsub.s32 %v1292, %v1294
        %v1296 = vrot.slane %v1288, %v1295
        %v1298 = vunpack.c.l.s4 1983009808
        %v1299 = vunpack.c.0.s8 %v1298
        %v1300 = vlaneseq
        %v1301 = vshrl.u32 %v1300, 7
        %v1302 = vsub.s32 %v1299, %v1301
        %v1303 = vrot.slane %v1289, %v1302
        %v1304 = vcombine.low %v1281, %v1283
        %v1305 = vcombine.high %v1281, %v1283
        %v1307 = vunpack.c.l.s4 1983009808
        %v1308 = vunpack.c.0.s8 %v1307
        %v1309 = vlaneseq
        %v1310 = vshrl.u32 %v1309, 7
        %v1311 = vsub.s32 %v1308, %v1310
        %v1312 = vrot.slane %v1304, %v1311
        %v1314 = vunpack.c.l.s4 1983009808
        %v1315 = vunpack.c.0.s8 %v1314
        %v1316 = vlaneseq
        %v1317 = vshrl.u32 %v1316, 7
        %v1318 = vsub.s32 %v1315, %v1317
        %v1319 = vrot.slane %v1305, %v1318
        %v1320 = vcombine.low %v1284, %v1286
        %v1321 = vcombine.high %v1284, %v1286
        %v1323 = vunpack.c.l.s4 1983009808
        %v1324 = vunpack.c.0.s8 %v1323
        %v1325 = vlaneseq
        %v1326 = vshrl.u32 %v1325, 7
        %v1327 = vsub.s32 %v1324, %v1326
        %v1328 = vrot.slane %v1320, %v1327
        %v1330 = vunpack.c.l.s4 1983009808
        %v1331 = vunpack.c.0.s8 %v1330
        %v1332 = vlaneseq
        %v1333 = vshrl.u32 %v1332, 7
        %v1334 = vsub.s32 %v1331, %v1333
        %v1335 = vrot.slane %v1321, %v1334
        %v1336 = vcombine.low %v1285, %v1287
        %v1337 = vcombine.high %v1285, %v1287
        %v1339 = vunpack.c.l.s4 1983009808
        %v1340 = vunpack.c.0.s8 %v1339
        %v1341 = vlaneseq
        %v1342 = vshrl.u32 %v1341, 7
        %v1343 = vsub.s32 %v1340, %v1342
        %v1344 = vrot.slane %v1336, %v1343
        %v1346 = vunpack.c.l.s4 1983009808
        %v1347 = vunpack.c.0.s8 %v1346
        %v1348 = vlaneseq
        %v1349 = vshrl.u32 %v1348, 7
        %v1350 = vsub.s32 %v1347, %v1349
        %v1351 = vrot.slane %v1337, %v1350
        %v1352 = vcombine.low %v1296, %v1312
        %v1353 = vcombine.high %v1296, %v1312
        %v1355 = vunpack.c.l.s4 1934713408
        %v1356 = vunpack.c.0.s8 %v1355
        %v1357 = vlaneseq
        %v1358 = vshrl.u32 %v1357, 7
        %v1359 = vsub.s32 %v1356, %v1358
        %v1360 = vrot.slane %v1352, %v1359
        %v1362 = vunpack.c.l.s4 1934713408
        %v1363 = vunpack.c.0.s8 %v1362
        %v1364 = vlaneseq
        %v1365 = vshrl.u32 %v1364, 7
        %v1366 = vsub.s32 %v1363, %v1365
        %v1367 = vrot.slane %v1353, %v1366
        %v1368 = vcombine.low %v1303, %v1319
        %v1369 = vcombine.high %v1303, %v1319
        %v1371 = vunpack.c.l.s4 1934713408
        %v1372 = vunpack.c.0.s8 %v1371
        %v1373 = vlaneseq
        %v1374 = vshrl.u32 %v1373, 7
        %v1375 = vsub.s32 %v1372, %v1374
        %v1376 = vrot.slane %v1368, %v1375
        %v1378 = vunpack.c.l.s4 1934713408
        %v1379 = vunpack.c.0.s8 %v1378
        %v1380 = vlaneseq
        %v1381 = vshrl.u32 %v1380, 7
        %v1382 = vsub.s32 %v1379, %v1381
        %v1383 = vrot.slane %v1369, %v1382
        %v1384 = vcombine.low %v1328, %v1344
        %v1385 = vcombine.high %v1328, %v1344
        %v1387 = vunpack.c.l.s4 1934713408
        %v1388 = vunpack.c.0.s8 %v1387
        %v1389 = vlaneseq
        %v1390 = vshrl.u32 %v1389, 7
        %v1391 = vsub.s32 %v1388, %v1390
        %v1392 = vrot.slane %v1384, %v1391
        %v1394 = vunpack.c.l.s4 1934713408
        %v1395 = vunpack.c.0.s8 %v1394
        %v1396 = vlaneseq
        %v1397 = vshrl.u32 %v1396, 7
        %v1398 = vsub.s32 %v1395, %v1397
        %v1399 = vrot.slane %v1385, %v1398
        %v1400 = vcombine.low %v1335, %v1351
        %v1401 = vcombine.high %v1335, %v1351
        %v1403 = vunpack.c.l.s4 1934713408
        %v1404 = vunpack.c.0.s8 %v1403
        %v1405 = vlaneseq
        %v1406 = vshrl.u32 %v1405, 7
        %v1407 = vsub.s32 %v1404, %v1406
        %v1408 = vrot.slane %v1400, %v1407
        %v1410 = vunpack.c.l.s4 1934713408
        %v1411 = vunpack.c.0.s8 %v1410
        %v1412 = vlaneseq
        %v1413 = vshrl.u32 %v1412, 7
        %v1414 = vsub.s32 %v1411, %v1413
        %v1415 = vrot.slane %v1401, %v1414
        %v1416 = vcombine.low %v1360, %v1392
        %v1417 = vcombine.high %v1360, %v1392
        %v1418 = vcombine.low %v1367, %v1399
        %v1419 = vcombine.high %v1367, %v1399
        %v1420 = vcombine.low %v1376, %v1408
        %v1421 = vcombine.high %v1376, %v1408
        %v1422 = vcombine.low %v1383, %v1415
        %v1423 = vcombine.high %v1383, %v1415
        %v1424 = vpack.c.bf16 %v1416, %v1416
        %v1425 = vpack.c.bf16 %v1417, %v1417
        %v1426 = vpack.c.bf16 %v1418, %v1418
        %v1427 = vpack.c.bf16 %v1419, %v1419
        %v1428 = vpack.c.bf16 %v1420, %v1420
        %v1429 = vpack.c.bf16 %v1421, %v1421
        %v1430 = vpack.c.bf16 %v1422, %v1422
        %v1431 = vpack.c.bf16 %v1423, %v1423
        %1433 = vrot.lane.b32.xlu0 %v823, 112
        %v1434 = vpop.permute.xlu0 %1433
        %1436 = vrot.lane.b32.xlu0 %v823, 96
        %v1437 = vpop.permute.xlu0 %1436
        %1439 = vrot.lane.b32.xlu0 %v823, 80
        %v1440 = vpop.permute.xlu0 %1439
        %1442 = vrot.lane.b32.xlu0 %v823, 64
        %v1443 = vpop.permute.xlu0 %1442
        %1445 = vrot.lane.b32.xlu0 %v823, 48
        %v1446 = vpop.permute.xlu0 %1445
        %1448 = vrot.lane.b32.xlu0 %v823, 32
        %v1449 = vpop.permute.xlu0 %1448
        %1451 = vrot.lane.b32.xlu0 %v823, 16
        %v1452 = vpop.permute.xlu0 %1451
        %v1454 = vcombine.low %v823, %v1437
        %v1455 = vcombine.high %v823, %v1437
        %v1457 = vunpack.c.l.s4 1983009808
        %v1458 = vunpack.c.0.s8 %v1457
        %v1459 = vlaneseq
        %v1460 = vshrl.u32 %v1459, 7
        %v1461 = vsub.s32 %v1458, %v1460
        %v1462 = vrot.slane %v1454, %v1461
        %v1464 = vunpack.c.l.s4 1983009808
        %v1465 = vunpack.c.0.s8 %v1464
        %v1466 = vlaneseq
        %v1467 = vshrl.u32 %v1466, 7
        %v1468 = vsub.s32 %v1465, %v1467
        %v1469 = vrot.slane %v1455, %v1468
        %v1470 = vcombine.low %v1434, %v1440
        %v1471 = vcombine.high %v1434, %v1440
        %v1473 = vunpack.c.l.s4 1983009808
        %v1474 = vunpack.c.0.s8 %v1473
        %v1475 = vlaneseq
        %v1476 = vshrl.u32 %v1475, 7
        %v1477 = vsub.s32 %v1474, %v1476
        %v1478 = vrot.slane %v1470, %v1477
        %v1480 = vunpack.c.l.s4 1983009808
        %v1481 = vunpack.c.0.s8 %v1480
        %v1482 = vlaneseq
        %v1483 = vshrl.u32 %v1482, 7
        %v1484 = vsub.s32 %v1481, %v1483
        %v1485 = vrot.slane %v1471, %v1484
        %v1486 = vcombine.low %v1443, %v1449
        %v1487 = vcombine.high %v1443, %v1449
        %v1489 = vunpack.c.l.s4 1983009808
        %v1490 = vunpack.c.0.s8 %v1489
        %v1491 = vlaneseq
        %v1492 = vshrl.u32 %v1491, 7
        %v1493 = vsub.s32 %v1490, %v1492
        %v1494 = vrot.slane %v1486, %v1493
        %v1496 = vunpack.c.l.s4 1983009808
        %v1497 = vunpack.c.0.s8 %v1496
        %v1498 = vlaneseq
        %v1499 = vshrl.u32 %v1498, 7
        %v1500 = vsub.s32 %v1497, %v1499
        %v1501 = vrot.slane %v1487, %v1500
        %v1502 = vcombine.low %v1446, %v1452
        %v1503 = vcombine.high %v1446, %v1452
        %v1505 = vunpack.c.l.s4 1983009808
        %v1506 = vunpack.c.0.s8 %v1505
        %v1507 = vlaneseq
        %v1508 = vshrl.u32 %v1507, 7
        %v1509 = vsub.s32 %v1506, %v1508
        %v1510 = vrot.slane %v1502, %v1509
        %v1512 = vunpack.c.l.s4 1983009808
        %v1513 = vunpack.c.0.s8 %v1512
        %v1514 = vlaneseq
        %v1515 = vshrl.u32 %v1514, 7
        %v1516 = vsub.s32 %v1513, %v1515
        %v1517 = vrot.slane %v1503, %v1516
        %v1518 = vcombine.low %v1462, %v1478
        %v1519 = vcombine.high %v1462, %v1478
        %v1521 = vunpack.c.l.s4 1934713408
        %v1522 = vunpack.c.0.s8 %v1521
        %v1523 = vlaneseq
        %v1524 = vshrl.u32 %v1523, 7
        %v1525 = vsub.s32 %v1522, %v1524
        %v1526 = vrot.slane %v1518, %v1525
        %v1528 = vunpack.c.l.s4 1934713408
        %v1529 = vunpack.c.0.s8 %v1528
        %v1530 = vlaneseq
        %v1531 = vshrl.u32 %v1530, 7
        %v1532 = vsub.s32 %v1529, %v1531
        %v1533 = vrot.slane %v1519, %v1532
        %v1534 = vcombine.low %v1469, %v1485
        %v1535 = vcombine.high %v1469, %v1485
        %v1537 = vunpack.c.l.s4 1934713408
        %v1538 = vunpack.c.0.s8 %v1537
        %v1539 = vlaneseq
        %v1540 = vshrl.u32 %v1539, 7
        %v1541 = vsub.s32 %v1538, %v1540
        %v1542 = vrot.slane %v1534, %v1541
        %v1544 = vunpack.c.l.s4 1934713408
        %v1545 = vunpack.c.0.s8 %v1544
        %v1546 = vlaneseq
        %v1547 = vshrl.u32 %v1546, 7
        %v1548 = vsub.s32 %v1545, %v1547
        %v1549 = vrot.slane %v1535, %v1548
        %v1550 = vcombine.low %v1494, %v1510
        %v1551 = vcombine.high %v1494, %v1510
        %v1553 = vunpack.c.l.s4 1934713408
        %v1554 = vunpack.c.0.s8 %v1553
        %v1555 = vlaneseq
        %v1556 = vshrl.u32 %v1555, 7
        %v1557 = vsub.s32 %v1554, %v1556
        %v1558 = vrot.slane %v1550, %v1557
        %v1560 = vunpack.c.l.s4 1934713408
        %v1561 = vunpack.c.0.s8 %v1560
        %v1562 = vlaneseq
        %v1563 = vshrl.u32 %v1562, 7
        %v1564 = vsub.s32 %v1561, %v1563
        %v1565 = vrot.slane %v1551, %v1564
        %v1566 = vcombine.low %v1501, %v1517
        %v1567 = vcombine.high %v1501, %v1517
        %v1569 = vunpack.c.l.s4 1934713408
        %v1570 = vunpack.c.0.s8 %v1569
        %v1571 = vlaneseq
        %v1572 = vshrl.u32 %v1571, 7
        %v1573 = vsub.s32 %v1570, %v1572
        %v1574 = vrot.slane %v1566, %v1573
        %v1576 = vunpack.c.l.s4 1934713408
        %v1577 = vunpack.c.0.s8 %v1576
        %v1578 = vlaneseq
        %v1579 = vshrl.u32 %v1578, 7
        %v1580 = vsub.s32 %v1577, %v1579
        %v1581 = vrot.slane %v1567, %v1580
        %v1582 = vcombine.low %v1526, %v1558
        %v1583 = vcombine.high %v1526, %v1558
        %v1584 = vcombine.low %v1533, %v1565
        %v1585 = vcombine.high %v1533, %v1565
        %v1586 = vcombine.low %v1542, %v1574
        %v1587 = vcombine.high %v1542, %v1574
        %v1588 = vcombine.low %v1549, %v1581
        %v1589 = vcombine.high %v1549, %v1581
        %v1590 = vcombine.low %v1582, %v1584
        %v1591 = vcombine.high %v1582, %v1584
        %v1593 = vunpack.c.l.s4 1983009808
        %v1594 = vunpack.c.0.s8 %v1593
        %v1595 = vlaneseq
        %v1596 = vshrl.u32 %v1595, 7
        %v1597 = vsub.s32 %v1594, %v1596
        %v1598 = vrot.slane %v1590, %v1597
        %v1600 = vunpack.c.l.s4 1983009808
        %v1601 = vunpack.c.0.s8 %v1600
        %v1602 = vlaneseq
        %v1603 = vshrl.u32 %v1602, 7
        %v1604 = vsub.s32 %v1601, %v1603
        %v1605 = vrot.slane %v1591, %v1604
        %v1606 = vcombine.low %v1583, %v1585
        %v1607 = vcombine.high %v1583, %v1585
        %v1609 = vunpack.c.l.s4 1983009808
        %v1610 = vunpack.c.0.s8 %v1609
        %v1611 = vlaneseq
        %v1612 = vshrl.u32 %v1611, 7
        %v1613 = vsub.s32 %v1610, %v1612
        %v1614 = vrot.slane %v1606, %v1613
        %v1616 = vunpack.c.l.s4 1983009808
        %v1617 = vunpack.c.0.s8 %v1616
        %v1618 = vlaneseq
        %v1619 = vshrl.u32 %v1618, 7
        %v1620 = vsub.s32 %v1617, %v1619
        %v1621 = vrot.slane %v1607, %v1620
        %v1622 = vcombine.low %v1586, %v1588
        %v1623 = vcombine.high %v1586, %v1588
        %v1625 = vunpack.c.l.s4 1983009808
        %v1626 = vunpack.c.0.s8 %v1625
        %v1627 = vlaneseq
        %v1628 = vshrl.u32 %v1627, 7
        %v1629 = vsub.s32 %v1626, %v1628
        %v1630 = vrot.slane %v1622, %v1629
        %v1632 = vunpack.c.l.s4 1983009808
        %v1633 = vunpack.c.0.s8 %v1632
        %v1634 = vlaneseq
        %v1635 = vshrl.u32 %v1634, 7
        %v1636 = vsub.s32 %v1633, %v1635
        %v1637 = vrot.slane %v1623, %v1636
        %v1638 = vcombine.low %v1587, %v1589
        %v1639 = vcombine.high %v1587, %v1589
        %v1641 = vunpack.c.l.s4 1983009808
        %v1642 = vunpack.c.0.s8 %v1641
        %v1643 = vlaneseq
        %v1644 = vshrl.u32 %v1643, 7
        %v1645 = vsub.s32 %v1642, %v1644
        %v1646 = vrot.slane %v1638, %v1645
        %v1648 = vunpack.c.l.s4 1983009808
        %v1649 = vunpack.c.0.s8 %v1648
        %v1650 = vlaneseq
        %v1651 = vshrl.u32 %v1650, 7
        %v1652 = vsub.s32 %v1649, %v1651
        %v1653 = vrot.slane %v1639, %v1652
        %v1654 = vcombine.low %v1598, %v1614
        %v1655 = vcombine.high %v1598, %v1614
        %v1657 = vunpack.c.l.s4 1934713408
        %v1658 = vunpack.c.0.s8 %v1657
        %v1659 = vlaneseq
        %v1660 = vshrl.u32 %v1659, 7
        %v1661 = vsub.s32 %v1658, %v1660
        %v1662 = vrot.slane %v1654, %v1661
        %v1664 = vunpack.c.l.s4 1934713408
        %v1665 = vunpack.c.0.s8 %v1664
        %v1666 = vlaneseq
        %v1667 = vshrl.u32 %v1666, 7
        %v1668 = vsub.s32 %v1665, %v1667
        %v1669 = vrot.slane %v1655, %v1668
        %v1670 = vcombine.low %v1605, %v1621
        %v1671 = vcombine.high %v1605, %v1621
        %v1673 = vunpack.c.l.s4 1934713408
        %v1674 = vunpack.c.0.s8 %v1673
        %v1675 = vlaneseq
        %v1676 = vshrl.u32 %v1675, 7
        %v1677 = vsub.s32 %v1674, %v1676
        %v1678 = vrot.slane %v1670, %v1677
        %v1680 = vunpack.c.l.s4 1934713408
        %v1681 = vunpack.c.0.s8 %v1680
        %v1682 = vlaneseq
        %v1683 = vshrl.u32 %v1682, 7
        %v1684 = vsub.s32 %v1681, %v1683
        %v1685 = vrot.slane %v1671, %v1684
        %v1686 = vcombine.low %v1630, %v1646
        %v1687 = vcombine.high %v1630, %v1646
        %v1689 = vunpack.c.l.s4 1934713408
        %v1690 = vunpack.c.0.s8 %v1689
        %v1691 = vlaneseq
        %v1692 = vshrl.u32 %v1691, 7
        %v1693 = vsub.s32 %v1690, %v1692
        %v1694 = vrot.slane %v1686, %v1693
        %v1696 = vunpack.c.l.s4 1934713408
        %v1697 = vunpack.c.0.s8 %v1696
        %v1698 = vlaneseq
        %v1699 = vshrl.u32 %v1698, 7
        %v1700 = vsub.s32 %v1697, %v1699
        %v1701 = vrot.slane %v1687, %v1700
        %v1702 = vcombine.low %v1637, %v1653
        %v1703 = vcombine.high %v1637, %v1653
        %v1705 = vunpack.c.l.s4 1934713408
        %v1706 = vunpack.c.0.s8 %v1705
        %v1707 = vlaneseq
        %v1708 = vshrl.u32 %v1707, 7
        %v1709 = vsub.s32 %v1706, %v1708
        %v1710 = vrot.slane %v1702, %v1709
        %v1712 = vunpack.c.l.s4 1934713408
        %v1713 = vunpack.c.0.s8 %v1712
        %v1714 = vlaneseq
        %v1715 = vshrl.u32 %v1714, 7
        %v1716 = vsub.s32 %v1713, %v1715
        %v1717 = vrot.slane %v1703, %v1716
        %v1718 = vcombine.low %v1662, %v1694
        %v1719 = vcombine.high %v1662, %v1694
        %v1720 = vcombine.low %v1669, %v1701
        %v1721 = vcombine.high %v1669, %v1701
        %v1722 = vcombine.low %v1678, %v1710
        %v1723 = vcombine.high %v1678, %v1710
        %v1724 = vcombine.low %v1685, %v1717
        %v1725 = vcombine.high %v1685, %v1717
        %v1726 = vpack.c.bf16 %v1718, %v1718
        %v1727 = vpack.c.bf16 %v1719, %v1719
        %v1728 = vpack.c.bf16 %v1720, %v1720
        %v1729 = vpack.c.bf16 %v1721, %v1721
        %v1730 = vpack.c.bf16 %v1722, %v1722
        %v1731 = vpack.c.bf16 %v1723, %v1723
        %v1732 = vpack.c.bf16 %v1724, %v1724
        %v1733 = vpack.c.bf16 %v1725, %v1725
        %vm1734 = vcmask 130048
        %v1736 = vsel %vm1734, %v1122, 0
        %v1739 = vsel %vm1734, %v1424, 0
        %1741 = vmatprep.subr.bf16.mxu0 0
        %1742 = vmatpush1.bf16.xpose.msra.mxu0 %v1739
        %1743 = vmatprep.subr.bf16.mxu0 0
        %1744 = vmatpush1.bf16.xpose.msra.mxu0 0
        %1745 = vmatprep.subr.bf16.mxu0 0
        %1746 = vmatpush1.bf16.xpose.msra.mxu0 0
        %1747 = vmatprep.subr.bf16.mxu0 0
        %1748 = vmatpush1.bf16.xpose.msra.mxu0 0
        %1749 = vmatprep.subr.bf16.mxu0 0
        %1750 = vmatpush1.bf16.xpose.msra.mxu0 0
        %1751 = vmatprep.subr.bf16.mxu0 0
        %1752 = vmatpush1.bf16.xpose.msra.mxu0 0
        %1753 = vmatprep.subr.bf16.mxu0 0
        %1754 = vmatpush1.bf16.xpose.msra.mxu0 0
        %1755 = vmatprep.subr.bf16.mxu0 0
        %1756 = vmatpush1.bf16.xpose.msra.mxu0 0
        %1757 = vmatprep.subr.bf16.mxu0 0
        %1758 = vmatpush1.bf16.xpose.msra.mxu0 0
        %1759 = vmatprep.subr.bf16.mxu0 0
        %1760 = vmatpush1.bf16.xpose.msra.mxu0 0
        %1761 = vmatprep.subr.bf16.mxu0 0
        %1762 = vmatpush1.bf16.xpose.msra.mxu0 0
        %1763 = vmatprep.subr.bf16.mxu0 0
        %1764 = vmatpush1.bf16.xpose.msra.mxu0 0
        %1765 = vmatprep.subr.bf16.mxu0 0
        %1766 = vmatpush1.bf16.xpose.msra.mxu0 0
        %1767 = vmatprep.subr.bf16.mxu0 0
        %1768 = vmatpush1.bf16.xpose.msra.mxu0 0
        %1769 = vmatprep.subr.bf16.mxu0 0
        %1770 = vmatpush1.bf16.xpose.msra.mxu0 0
        %1771 = vmatprep.subr.bf16.mxu0 0
        %1772 = vmatpush1.bf16.xpose.msra.mxu0 0
        %1773 = vmatprep.mubr.bf16.mxu0 0
        %1774 = vmatmul.mubr.bf16.gmra.mrb[0].mxu0 %v1736
        %v1775 = vpop.f32.mrb[0].mxu0
        %v1776 = vadd.f32 0.0, %v1775
        %v1777 = vpop.f32.mrb[0].mxu0
        %v1778 = vpop.f32.mrb[0].mxu0
        %v1779 = vpop.f32.mrb[0].mxu0
        %1780 = vdwg.mxu0
        %v1782 = vsel %vm1734, %v1123, 0
        %v1785 = vsel %vm1734, %v1425, 0
        %1787 = vmatprep.subr.bf16.mxu0 0
        %1788 = vmatpush1.bf16.xpose.msra.mxu0 %v1785
        %1789 = vmatprep.subr.bf16.mxu0 0
        %1790 = vmatpush1.bf16.xpose.msra.mxu0 0
        %1791 = vmatprep.subr.bf16.mxu0 0
        %1792 = vmatpush1.bf16.xpose.msra.mxu0 0
        %1793 = vmatprep.subr.bf16.mxu0 0
        %1794 = vmatpush1.bf16.xpose.msra.mxu0 0
        %1795 = vmatprep.subr.bf16.mxu0 0
        %1796 = vmatpush1.bf16.xpose.msra.mxu0 0
        %1797 = vmatprep.subr.bf16.mxu0 0
        %1798 = vmatpush1.bf16.xpose.msra.mxu0 0
        %1799 = vmatprep.subr.bf16.mxu0 0
        %1800 = vmatpush1.bf16.xpose.msra.mxu0 0
        %1801 = vmatprep.subr.bf16.mxu0 0
        %1802 = vmatpush1.bf16.xpose.msra.mxu0 0
        %1803 = vmatprep.subr.bf16.mxu0 0
        %1804 = vmatpush1.bf16.xpose.msra.mxu0 0
        %1805 = vmatprep.subr.bf16.mxu0 0
        %1806 = vmatpush1.bf16.xpose.msra.mxu0 0
        %1807 = vmatprep.subr.bf16.mxu0 0
        %1808 = vmatpush1.bf16.xpose.msra.mxu0 0
        %1809 = vmatprep.subr.bf16.mxu0 0
        %1810 = vmatpush1.bf16.xpose.msra.mxu0 0
        %1811 = vmatprep.subr.bf16.mxu0 0
        %1812 = vmatpush1.bf16.xpose.msra.mxu0 0
        %1813 = vmatprep.subr.bf16.mxu0 0
        %1814 = vmatpush1.bf16.xpose.msra.mxu0 0
        %1815 = vmatprep.subr.bf16.mxu0 0
        %1816 = vmatpush1.bf16.xpose.msra.mxu0 0
        %1817 = vmatprep.subr.bf16.mxu0 0
        %1818 = vmatpush1.bf16.xpose.msra.mxu0 0
        %1819 = vmatprep.mubr.bf16.mxu0 0
        %1820 = vmatmul.mubr.bf16.gmra.mrb[0].mxu0 %v1782
        %v1821 = vpop.f32.mrb[0].mxu0
        %v1822 = vadd.f32 0.0, %v1821
        %v1823 = vpop.f32.mrb[0].mxu0
        %v1824 = vpop.f32.mrb[0].mxu0
        %v1825 = vpop.f32.mrb[0].mxu0
        %1826 = vdwg.mxu0
        %v1828 = vsel %vm1734, %v1124, 0
        %v1831 = vsel %vm1734, %v1426, 0
        %1833 = vmatprep.subr.bf16.mxu0 0
        %1834 = vmatpush1.bf16.xpose.msra.mxu0 %v1831
        %1835 = vmatprep.subr.bf16.mxu0 0
        %1836 = vmatpush1.bf16.xpose.msra.mxu0 0
        %1837 = vmatprep.subr.bf16.mxu0 0
        %1838 = vmatpush1.bf16.xpose.msra.mxu0 0
        %1839 = vmatprep.subr.bf16.mxu0 0
        %1840 = vmatpush1.bf16.xpose.msra.mxu0 0
        %1841 = vmatprep.subr.bf16.mxu0 0
        %1842 = vmatpush1.bf16.xpose.msra.mxu0 0
        %1843 = vmatprep.subr.bf16.mxu0 0
        %1844 = vmatpush1.bf16.xpose.msra.mxu0 0
        %1845 = vmatprep.subr.bf16.mxu0 0
        %1846 = vmatpush1.bf16.xpose.msra.mxu0 0
        %1847 = vmatprep.subr.bf16.mxu0 0
        %1848 = vmatpush1.bf16.xpose.msra.mxu0 0
        %1849 = vmatprep.subr.bf16.mxu0 0
        %1850 = vmatpush1.bf16.xpose.msra.mxu0 0
        %1851 = vmatprep.subr.bf16.mxu0 0
        %1852 = vmatpush1.bf16.xpose.msra.mxu0 0
        %1853 = vmatprep.subr.bf16.mxu0 0
        %1854 = vmatpush1.bf16.xpose.msra.mxu0 0
        %1855 = vmatprep.subr.bf16.mxu0 0
        %1856 = vmatpush1.bf16.xpose.msra.mxu0 0
        %1857 = vmatprep.subr.bf16.mxu0 0
        %1858 = vmatpush1.bf16.xpose.msra.mxu0 0
        %1859 = vmatprep.subr.bf16.mxu0 0
        %1860 = vmatpush1.bf16.xpose.msra.mxu0 0
        %1861 = vmatprep.subr.bf16.mxu0 0
        %1862 = vmatpush1.bf16.xpose.msra.mxu0 0
        %1863 = vmatprep.subr.bf16.mxu0 0
        %1864 = vmatpush1.bf16.xpose.msra.mxu0 0
        %1865 = vmatprep.mubr.bf16.mxu0 0
        %1866 = vmatmul.mubr.bf16.gmra.mrb[0].mxu0 %v1828
        %v1867 = vpop.f32.mrb[0].mxu0
        %v1868 = vadd.f32 0.0, %v1867
        %v1869 = vpop.f32.mrb[0].mxu0
        %v1870 = vpop.f32.mrb[0].mxu0
        %v1871 = vpop.f32.mrb[0].mxu0
        %1872 = vdwg.mxu0
        %v1874 = vsel %vm1734, %v1125, 0
        %v1877 = vsel %vm1734, %v1427, 0
        %1879 = vmatprep.subr.bf16.mxu0 0
        %1880 = vmatpush1.bf16.xpose.msra.mxu0 %v1877
        %1881 = vmatprep.subr.bf16.mxu0 0
        %1882 = vmatpush1.bf16.xpose.msra.mxu0 0
        %1883 = vmatprep.subr.bf16.mxu0 0
        %1884 = vmatpush1.bf16.xpose.msra.mxu0 0
        %1885 = vmatprep.subr.bf16.mxu0 0
        %1886 = vmatpush1.bf16.xpose.msra.mxu0 0
        %1887 = vmatprep.subr.bf16.mxu0 0
        %1888 = vmatpush1.bf16.xpose.msra.mxu0 0
        %1889 = vmatprep.subr.bf16.mxu0 0
        %1890 = vmatpush1.bf16.xpose.msra.mxu0 0
        %1891 = vmatprep.subr.bf16.mxu0 0
        %1892 = vmatpush1.bf16.xpose.msra.mxu0 0
        %1893 = vmatprep.subr.bf16.mxu0 0
        %1894 = vmatpush1.bf16.xpose.msra.mxu0 0
        %1895 = vmatprep.subr.bf16.mxu0 0
        %1896 = vmatpush1.bf16.xpose.msra.mxu0 0
        %1897 = vmatprep.subr.bf16.mxu0 0
        %1898 = vmatpush1.bf16.xpose.msra.mxu0 0
        %1899 = vmatprep.subr.bf16.mxu0 0
        %1900 = vmatpush1.bf16.xpose.msra.mxu0 0
        %1901 = vmatprep.subr.bf16.mxu0 0
        %1902 = vmatpush1.bf16.xpose.msra.mxu0 0
        %1903 = vmatprep.subr.bf16.mxu0 0
        %1904 = vmatpush1.bf16.xpose.msra.mxu0 0
        %1905 = vmatprep.subr.bf16.mxu0 0
        %1906 = vmatpush1.bf16.xpose.msra.mxu0 0
        %1907 = vmatprep.subr.bf16.mxu0 0
        %1908 = vmatpush1.bf16.xpose.msra.mxu0 0
        %1909 = vmatprep.subr.bf16.mxu0 0
        %1910 = vmatpush1.bf16.xpose.msra.mxu0 0
        %1911 = vmatprep.mubr.bf16.mxu0 0
        %1912 = vmatmul.mubr.bf16.gmra.mrb[0].mxu0 %v1874
        %v1913 = vpop.f32.mrb[0].mxu0
        %v1914 = vadd.f32 0.0, %v1913
        %v1915 = vpop.f32.mrb[0].mxu0
        %v1916 = vpop.f32.mrb[0].mxu0
        %v1917 = vpop.f32.mrb[0].mxu0
        %1918 = vdwg.mxu0
        %v1920 = vsel %vm1734, %v1126, 0
        %v1923 = vsel %vm1734, %v1428, 0
        %1925 = vmatprep.subr.bf16.mxu0 0
        %1926 = vmatpush1.bf16.xpose.msra.mxu0 %v1923
        %1927 = vmatprep.subr.bf16.mxu0 0
        %1928 = vmatpush1.bf16.xpose.msra.mxu0 0
        %1929 = vmatprep.subr.bf16.mxu0 0
        %1930 = vmatpush1.bf16.xpose.msra.mxu0 0
        %1931 = vmatprep.subr.bf16.mxu0 0
        %1932 = vmatpush1.bf16.xpose.msra.mxu0 0
        %1933 = vmatprep.subr.bf16.mxu0 0
        %1934 = vmatpush1.bf16.xpose.msra.mxu0 0
        %1935 = vmatprep.subr.bf16.mxu0 0
        %1936 = vmatpush1.bf16.xpose.msra.mxu0 0
        %1937 = vmatprep.subr.bf16.mxu0 0
        %1938 = vmatpush1.bf16.xpose.msra.mxu0 0
        %1939 = vmatprep.subr.bf16.mxu0 0
        %1940 = vmatpush1.bf16.xpose.msra.mxu0 0
        %1941 = vmatprep.subr.bf16.mxu0 0
        %1942 = vmatpush1.bf16.xpose.msra.mxu0 0
        %1943 = vmatprep.subr.bf16.mxu0 0
        %1944 = vmatpush1.bf16.xpose.msra.mxu0 0
        %1945 = vmatprep.subr.bf16.mxu0 0
        %1946 = vmatpush1.bf16.xpose.msra.mxu0 0
        %1947 = vmatprep.subr.bf16.mxu0 0
        %1948 = vmatpush1.bf16.xpose.msra.mxu0 0
        %1949 = vmatprep.subr.bf16.mxu0 0
        %1950 = vmatpush1.bf16.xpose.msra.mxu0 0
        %1951 = vmatprep.subr.bf16.mxu0 0
        %1952 = vmatpush1.bf16.xpose.msra.mxu0 0
        %1953 = vmatprep.subr.bf16.mxu0 0
        %1954 = vmatpush1.bf16.xpose.msra.mxu0 0
        %1955 = vmatprep.subr.bf16.mxu0 0
        %1956 = vmatpush1.bf16.xpose.msra.mxu0 0
        %1957 = vmatprep.mubr.bf16.mxu0 0
        %1958 = vmatmul.mubr.bf16.gmra.mrb[0].mxu0 %v1920
        %v1959 = vpop.f32.mrb[0].mxu0
        %v1960 = vadd.f32 0.0, %v1959
        %v1961 = vpop.f32.mrb[0].mxu0
        %v1962 = vpop.f32.mrb[0].mxu0
        %v1963 = vpop.f32.mrb[0].mxu0
        %1964 = vdwg.mxu0
        %v1966 = vsel %vm1734, %v1127, 0
        %v1969 = vsel %vm1734, %v1429, 0
        %1971 = vmatprep.subr.bf16.mxu0 0
        %1972 = vmatpush1.bf16.xpose.msra.mxu0 %v1969
        %1973 = vmatprep.subr.bf16.mxu0 0
        %1974 = vmatpush1.bf16.xpose.msra.mxu0 0
        %1975 = vmatprep.subr.bf16.mxu0 0
        %1976 = vmatpush1.bf16.xpose.msra.mxu0 0
        %1977 = vmatprep.subr.bf16.mxu0 0
        %1978 = vmatpush1.bf16.xpose.msra.mxu0 0
        %1979 = vmatprep.subr.bf16.mxu0 0
        %1980 = vmatpush1.bf16.xpose.msra.mxu0 0
        %1981 = vmatprep.subr.bf16.mxu0 0
        %1982 = vmatpush1.bf16.xpose.msra.mxu0 0
        %1983 = vmatprep.subr.bf16.mxu0 0
        %1984 = vmatpush1.bf16.xpose.msra.mxu0 0
        %1985 = vmatprep.subr.bf16.mxu0 0
        %1986 = vmatpush1.bf16.xpose.msra.mxu0 0
        %1987 = vmatprep.subr.bf16.mxu0 0
        %1988 = vmatpush1.bf16.xpose.msra.mxu0 0
        %1989 = vmatprep.subr.bf16.mxu0 0
        %1990 = vmatpush1.bf16.xpose.msra.mxu0 0
        %1991 = vmatprep.subr.bf16.mxu0 0
        %1992 = vmatpush1.bf16.xpose.msra.mxu0 0
        %1993 = vmatprep.subr.bf16.mxu0 0
        %1994 = vmatpush1.bf16.xpose.msra.mxu0 0
        %1995 = vmatprep.subr.bf16.mxu0 0
        %1996 = vmatpush1.bf16.xpose.msra.mxu0 0
        %1997 = vmatprep.subr.bf16.mxu0 0
        %1998 = vmatpush1.bf16.xpose.msra.mxu0 0
        %1999 = vmatprep.subr.bf16.mxu0 0
        %2000 = vmatpush1.bf16.xpose.msra.mxu0 0
        %2001 = vmatprep.subr.bf16.mxu0 0
        %2002 = vmatpush1.bf16.xpose.msra.mxu0 0
        %2003 = vmatprep.mubr.bf16.mxu0 0
        %2004 = vmatmul.mubr.bf16.gmra.mrb[0].mxu0 %v1966
        %v2005 = vpop.f32.mrb[0].mxu0
        %v2006 = vadd.f32 0.0, %v2005
        %v2007 = vpop.f32.mrb[0].mxu0
        %v2008 = vpop.f32.mrb[0].mxu0
        %v2009 = vpop.f32.mrb[0].mxu0
        %2010 = vdwg.mxu0
        %v2012 = vsel %vm1734, %v1128, 0
        %v2015 = vsel %vm1734, %v1430, 0
        %2017 = vmatprep.subr.bf16.mxu0 0
        %2018 = vmatpush1.bf16.xpose.msra.mxu0 %v2015
        %2019 = vmatprep.subr.bf16.mxu0 0
        %2020 = vmatpush1.bf16.xpose.msra.mxu0 0
        %2021 = vmatprep.subr.bf16.mxu0 0
        %2022 = vmatpush1.bf16.xpose.msra.mxu0 0
        %2023 = vmatprep.subr.bf16.mxu0 0
        %2024 = vmatpush1.bf16.xpose.msra.mxu0 0
        %2025 = vmatprep.subr.bf16.mxu0 0
        %2026 = vmatpush1.bf16.xpose.msra.mxu0 0
        %2027 = vmatprep.subr.bf16.mxu0 0
        %2028 = vmatpush1.bf16.xpose.msra.mxu0 0
        %2029 = vmatprep.subr.bf16.mxu0 0
        %2030 = vmatpush1.bf16.xpose.msra.mxu0 0
        %2031 = vmatprep.subr.bf16.mxu0 0
        %2032 = vmatpush1.bf16.xpose.msra.mxu0 0
        %2033 = vmatprep.subr.bf16.mxu0 0
        %2034 = vmatpush1.bf16.xpose.msra.mxu0 0
        %2035 = vmatprep.subr.bf16.mxu0 0
        %2036 = vmatpush1.bf16.xpose.msra.mxu0 0
        %2037 = vmatprep.subr.bf16.mxu0 0
        %2038 = vmatpush1.bf16.xpose.msra.mxu0 0
        %2039 = vmatprep.subr.bf16.mxu0 0
        %2040 = vmatpush1.bf16.xpose.msra.mxu0 0
        %2041 = vmatprep.subr.bf16.mxu0 0
        %2042 = vmatpush1.bf16.xpose.msra.mxu0 0
        %2043 = vmatprep.subr.bf16.mxu0 0
        %2044 = vmatpush1.bf16.xpose.msra.mxu0 0
        %2045 = vmatprep.subr.bf16.mxu0 0
        %2046 = vmatpush1.bf16.xpose.msra.mxu0 0
        %2047 = vmatprep.subr.bf16.mxu0 0
        %2048 = vmatpush1.bf16.xpose.msra.mxu0 0
        %2049 = vmatprep.mubr.bf16.mxu0 0
        %2050 = vmatmul.mubr.bf16.gmra.mrb[0].mxu0 %v2012
        %v2051 = vpop.f32.mrb[0].mxu0
        %v2052 = vadd.f32 0.0, %v2051
        %v2053 = vpop.f32.mrb[0].mxu0
        %v2054 = vpop.f32.mrb[0].mxu0
        %v2055 = vpop.f32.mrb[0].mxu0
        %2056 = vdwg.mxu0
        %v2058 = vsel %vm1734, %v1129, 0
        %v2061 = vsel %vm1734, %v1431, 0
        %2063 = vmatprep.subr.bf16.mxu0 0
        %2064 = vmatpush1.bf16.xpose.msra.mxu0 %v2061
        %2065 = vmatprep.subr.bf16.mxu0 0
        %2066 = vmatpush1.bf16.xpose.msra.mxu0 0
        %2067 = vmatprep.subr.bf16.mxu0 0
        %2068 = vmatpush1.bf16.xpose.msra.mxu0 0
        %2069 = vmatprep.subr.bf16.mxu0 0
        %2070 = vmatpush1.bf16.xpose.msra.mxu0 0
        %2071 = vmatprep.subr.bf16.mxu0 0
        %2072 = vmatpush1.bf16.xpose.msra.mxu0 0
        %2073 = vmatprep.subr.bf16.mxu0 0
        %2074 = vmatpush1.bf16.xpose.msra.mxu0 0
        %2075 = vmatprep.subr.bf16.mxu0 0
        %2076 = vmatpush1.bf16.xpose.msra.mxu0 0
        %2077 = vmatprep.subr.bf16.mxu0 0
        %2078 = vmatpush1.bf16.xpose.msra.mxu0 0
        %2079 = vmatprep.subr.bf16.mxu0 0
        %2080 = vmatpush1.bf16.xpose.msra.mxu0 0
        %2081 = vmatprep.subr.bf16.mxu0 0
        %2082 = vmatpush1.bf16.xpose.msra.mxu0 0
        %2083 = vmatprep.subr.bf16.mxu0 0
        %2084 = vmatpush1.bf16.xpose.msra.mxu0 0
        %2085 = vmatprep.subr.bf16.mxu0 0
        %2086 = vmatpush1.bf16.xpose.msra.mxu0 0
        %2087 = vmatprep.subr.bf16.mxu0 0
        %2088 = vmatpush1.bf16.xpose.msra.mxu0 0
        %2089 = vmatprep.subr.bf16.mxu0 0
        %2090 = vmatpush1.bf16.xpose.msra.mxu0 0
        %2091 = vmatprep.subr.bf16.mxu0 0
        %2092 = vmatpush1.bf16.xpose.msra.mxu0 0
        %2093 = vmatprep.subr.bf16.mxu0 0
        %2094 = vmatpush1.bf16.xpose.msra.mxu0 0
        %2095 = vmatprep.mubr.bf16.mxu0 0
        %2096 = vmatmul.mubr.bf16.gmra.mrb[0].mxu0 %v2058
        %v2097 = vpop.f32.mrb[0].mxu0
        %v2098 = vadd.f32 0.0, %v2097
        %v2099 = vpop.f32.mrb[0].mxu0
        %v2100 = vpop.f32.mrb[0].mxu0
        %v2101 = vpop.f32.mrb[0].mxu0
        %2102 = vdwg.mxu0
        %v2103 = vmul.f32 %v1776, 0.25
        %v2104 = vmul.f32 %v1822, 0.25
        %v2105 = vmul.f32 %v1868, 0.25
        %v2106 = vmul.f32 %v1914, 0.25
        %v2107 = vmul.f32 %v1960, 0.25
        %v2108 = vmul.f32 %v2006, 0.25
        %v2109 = vmul.f32 %v2052, 0.25
        %v2110 = vmul.f32 %v2098, 0.25
        %vm2111 = vcmask 64512
        %v2112 = vsel %vm2111, %v2103, -inf
        %2113 = vmax.xlane.f32.xlu0 %v2112
        %v2114 = vpop.xlane.xlu0 %2113
        %v2115 = vsel %vm2111, %v2104, -inf
        %2116 = vmax.xlane.f32.xlu0 %v2115
        %v2117 = vpop.xlane.xlu0 %2116
        %v2118 = vsel %vm2111, %v2105, -inf
        %2119 = vmax.xlane.f32.xlu0 %v2118
        %v2120 = vpop.xlane.xlu0 %2119
        %v2121 = vsel %vm2111, %v2106, -inf
        %2122 = vmax.xlane.f32.xlu0 %v2121
        %v2123 = vpop.xlane.xlu0 %2122
        %v2124 = vsel %vm2111, %v2107, -inf
        %2125 = vmax.xlane.f32.xlu0 %v2124
        %v2126 = vpop.xlane.xlu0 %2125
        %v2127 = vsel %vm2111, %v2108, -inf
        %2128 = vmax.xlane.f32.xlu0 %v2127
        %v2129 = vpop.xlane.xlu0 %2128
        %v2130 = vsel %vm2111, %v2109, -inf
        %2131 = vmax.xlane.f32.xlu0 %v2130
        %v2132 = vpop.xlane.xlu0 %2131
        %v2133 = vsel %vm2111, %v2110, -inf
        %2134 = vmax.xlane.f32.xlu0 %v2133
        %v2135 = vpop.xlane.xlu0 %2134
        %v2136 = vsub.f32 %v2103, %v2114
        %v2137 = vsub.f32 %v2104, %v2117
        %v2138 = vsub.f32 %v2105, %v2120
        %v2139 = vsub.f32 %v2106, %v2123
        %v2140 = vsub.f32 %v2107, %v2126
        %v2141 = vsub.f32 %v2108, %v2129
        %v2142 = vsub.f32 %v2109, %v2132
        %v2143 = vsub.f32 %v2110, %v2135
        %v2144 = vmul.f32 %v2136, 1.442695
        %v2145 = vpow.pop %v2144
        %v2146 = vmul.f32 %v2137, 1.442695
        %v2147 = vpow.pop %v2146
        %v2148 = vmul.f32 %v2138, 1.442695
        %v2149 = vpow.pop %v2148
        %v2150 = vmul.f32 %v2139, 1.442695
        %v2151 = vpow.pop %v2150
        %v2152 = vmul.f32 %v2140, 1.442695
        %v2153 = vpow.pop %v2152
        %v2154 = vmul.f32 %v2141, 1.442695
        %v2155 = vpow.pop %v2154
        %v2156 = vmul.f32 %v2142, 1.442695
        %v2157 = vpow.pop %v2156
        %v2158 = vmul.f32 %v2143, 1.442695
        %v2159 = vpow.pop %v2158
        %v2160 = vsel %vm2111, %v2145, 0.0
        %2161 = vadd.xlane.f32.xlu0 %v2160
        %v2162 = vpop.xlane.xlu0 %2161
        %v2163 = vsel %vm2111, %v2147, 0.0
        %2164 = vadd.xlane.f32.xlu0 %v2163
        %v2165 = vpop.xlane.xlu0 %2164
        %v2166 = vsel %vm2111, %v2149, 0.0
        %2167 = vadd.xlane.f32.xlu0 %v2166
        %v2168 = vpop.xlane.xlu0 %2167
        %v2169 = vsel %vm2111, %v2151, 0.0
        %2170 = vadd.xlane.f32.xlu0 %v2169
        %v2171 = vpop.xlane.xlu0 %2170
        %v2172 = vsel %vm2111, %v2153, 0.0
        %2173 = vadd.xlane.f32.xlu0 %v2172
        %v2174 = vpop.xlane.xlu0 %2173
        %v2175 = vsel %vm2111, %v2155, 0.0
        %2176 = vadd.xlane.f32.xlu0 %v2175
        %v2177 = vpop.xlane.xlu0 %2176
        %v2178 = vsel %vm2111, %v2157, 0.0
        %2179 = vadd.xlane.f32.xlu0 %v2178
        %v2180 = vpop.xlane.xlu0 %2179
        %v2181 = vsel %vm2111, %v2159, 0.0
        %2182 = vadd.xlane.f32.xlu0 %v2181
        %v2183 = vpop.xlane.xlu0 %2182
        %v2184 = vrcp.pop %v2162
        %v2185 = vrcp.pop %v2165
        %v2186 = vrcp.pop %v2168
        %v2187 = vrcp.pop %v2171
        %v2188 = vrcp.pop %v2174
        %v2189 = vrcp.pop %v2177
        %v2190 = vrcp.pop %v2180
        %v2191 = vrcp.pop %v2183
        %v2192 = vmul.f32 %v2145, %v2184
        %v2193 = vmul.f32 %v2147, %v2185
        %v2194 = vmul.f32 %v2149, %v2186
        %v2195 = vmul.f32 %v2151, %v2187
        %v2196 = vmul.f32 %v2153, %v2188
        %v2197 = vmul.f32 %v2155, %v2189
        %v2198 = vmul.f32 %v2157, %v2190
        %v2199 = vmul.f32 %v2159, %v2191
        %v2200 = vpack.c.bf16 %v2192, %v2192
        %v2201 = vpack.c.bf16 %v2193, %v2193
        %v2202 = vpack.c.bf16 %v2194, %v2194
        %v2203 = vpack.c.bf16 %v2195, %v2195
        %v2204 = vpack.c.bf16 %v2196, %v2196
        %v2205 = vpack.c.bf16 %v2197, %v2197
        %v2206 = vpack.c.bf16 %v2198, %v2198
        %v2207 = vpack.c.bf16 %v2199, %v2199
        %v2209 = vsel %vm2111, %v2200, 0
        %vm2211 = vcmask 1043456
        %v2213 = vsel %vm2211, %v1726, 0
        %2215 = vmatprep.subr.bf16.mxu0 0
        %2216 = vmatpush1.bf16.msra.mxu0 %v2213
        %2217 = vmatprep.subr.bf16.mxu0 0
        %2218 = vmatpush1.bf16.msra.mxu0 0
        %2219 = vmatprep.subr.bf16.mxu0 0
        %2220 = vmatpush1.bf16.msra.mxu0 0
        %2221 = vmatprep.subr.bf16.mxu0 0
        %2222 = vmatpush1.bf16.msra.mxu0 0
        %2223 = vmatprep.subr.bf16.mxu0 0
        %2224 = vmatpush1.bf16.msra.mxu0 0
        %2225 = vmatprep.subr.bf16.mxu0 0
        %2226 = vmatpush1.bf16.msra.mxu0 0
        %2227 = vmatprep.subr.bf16.mxu0 0
        %2228 = vmatpush1.bf16.msra.mxu0 0
        %2229 = vmatprep.subr.bf16.mxu0 0
        %2230 = vmatpush1.bf16.msra.mxu0 0
        %2231 = vmatprep.subr.bf16.mxu0 0
        %2232 = vmatpush1.bf16.msra.mxu0 0
        %2233 = vmatprep.subr.bf16.mxu0 0
        %2234 = vmatpush1.bf16.msra.mxu0 0
        %2235 = vmatprep.subr.bf16.mxu0 0
        %2236 = vmatpush1.bf16.msra.mxu0 0
        %2237 = vmatprep.subr.bf16.mxu0 0
        %2238 = vmatpush1.bf16.msra.mxu0 0
        %2239 = vmatprep.subr.bf16.mxu0 0
        %2240 = vmatpush1.bf16.msra.mxu0 0
        %2241 = vmatprep.subr.bf16.mxu0 0
        %2242 = vmatpush1.bf16.msra.mxu0 0
        %2243 = vmatprep.subr.bf16.mxu0 0
        %2244 = vmatpush1.bf16.msra.mxu0 0
        %2245 = vmatprep.subr.bf16.mxu0 0
        %2246 = vmatpush1.bf16.msra.mxu0 0
        %2247 = vmatprep.mubr.bf16.mxu0 0
        %2248 = vmatmul.mubr.bf16.gmra.mrb[0].mxu0 %v2209
        %v2249 = vpop.f32.mrb[0].mxu0
        %v2250 = vadd.f32 0.0, %v2249
        %v2251 = vpop.f32.mrb[0].mxu0
        %v2252 = vpop.f32.mrb[0].mxu0
        %v2253 = vpop.f32.mrb[0].mxu0
        %2254 = vdwg.mxu0
        %v2256 = vsel %vm2111, %v2201, 0
        %v2259 = vsel %vm2211, %v1727, 0
        %2261 = vmatprep.subr.bf16.mxu0 0
        %2262 = vmatpush1.bf16.msra.mxu0 %v2259
        %2263 = vmatprep.subr.bf16.mxu0 0
        %2264 = vmatpush1.bf16.msra.mxu0 0
        %2265 = vmatprep.subr.bf16.mxu0 0
        %2266 = vmatpush1.bf16.msra.mxu0 0
        %2267 = vmatprep.subr.bf16.mxu0 0
        %2268 = vmatpush1.bf16.msra.mxu0 0
        %2269 = vmatprep.subr.bf16.mxu0 0
        %2270 = vmatpush1.bf16.msra.mxu0 0
        %2271 = vmatprep.subr.bf16.mxu0 0
        %2272 = vmatpush1.bf16.msra.mxu0 0
        %2273 = vmatprep.subr.bf16.mxu0 0
        %2274 = vmatpush1.bf16.msra.mxu0 0
        %2275 = vmatprep.subr.bf16.mxu0 0
        %2276 = vmatpush1.bf16.msra.mxu0 0
        %2277 = vmatprep.subr.bf16.mxu0 0
        %2278 = vmatpush1.bf16.msra.mxu0 0
        %2279 = vmatprep.subr.bf16.mxu0 0
        %2280 = vmatpush1.bf16.msra.mxu0 0
        %2281 = vmatprep.subr.bf16.mxu0 0
        %2282 = vmatpush1.bf16.msra.mxu0 0
        %2283 = vmatprep.subr.bf16.mxu0 0
        %2284 = vmatpush1.bf16.msra.mxu0 0
        %2285 = vmatprep.subr.bf16.mxu0 0
        %2286 = vmatpush1.bf16.msra.mxu0 0
        %2287 = vmatprep.subr.bf16.mxu0 0
        %2288 = vmatpush1.bf16.msra.mxu0 0
        %2289 = vmatprep.subr.bf16.mxu0 0
        %2290 = vmatpush1.bf16.msra.mxu0 0
        %2291 = vmatprep.subr.bf16.mxu0 0
        %2292 = vmatpush1.bf16.msra.mxu0 0
        %2293 = vmatprep.mubr.bf16.mxu0 0
        %2294 = vmatmul.mubr.bf16.gmra.mrb[0].mxu0 %v2256
        %v2295 = vpop.f32.mrb[0].mxu0
        %v2296 = vadd.f32 0.0, %v2295
        %v2297 = vpop.f32.mrb[0].mxu0
        %v2298 = vpop.f32.mrb[0].mxu0
        %v2299 = vpop.f32.mrb[0].mxu0
        %2300 = vdwg.mxu0
        %v2302 = vsel %vm2111, %v2202, 0
        %v2305 = vsel %vm2211, %v1728, 0
        %2307 = vmatprep.subr.bf16.mxu0 0
        %2308 = vmatpush1.bf16.msra.mxu0 %v2305
        %2309 = vmatprep.subr.bf16.mxu0 0
        %2310 = vmatpush1.bf16.msra.mxu0 0
        %2311 = vmatprep.subr.bf16.mxu0 0
        %2312 = vmatpush1.bf16.msra.mxu0 0
        %2313 = vmatprep.subr.bf16.mxu0 0
        %2314 = vmatpush1.bf16.msra.mxu0 0
        %2315 = vmatprep.subr.bf16.mxu0 0
        %2316 = vmatpush1.bf16.msra.mxu0 0
        %2317 = vmatprep.subr.bf16.mxu0 0
        %2318 = vmatpush1.bf16.msra.mxu0 0
        %2319 = vmatprep.subr.bf16.mxu0 0
        %2320 = vmatpush1.bf16.msra.mxu0 0
        %2321 = vmatprep.subr.bf16.mxu0 0
        %2322 = vmatpush1.bf16.msra.mxu0 0
        %2323 = vmatprep.subr.bf16.mxu0 0
        %2324 = vmatpush1.bf16.msra.mxu0 0
        %2325 = vmatprep.subr.bf16.mxu0 0
        %2326 = vmatpush1.bf16.msra.mxu0 0
        %2327 = vmatprep.subr.bf16.mxu0 0
        %2328 = vmatpush1.bf16.msra.mxu0 0
        %2329 = vmatprep.subr.bf16.mxu0 0
        %2330 = vmatpush1.bf16.msra.mxu0 0
        %2331 = vmatprep.subr.bf16.mxu0 0
        %2332 = vmatpush1.bf16.msra.mxu0 0
        %2333 = vmatprep.subr.bf16.mxu0 0
        %2334 = vmatpush1.bf16.msra.mxu0 0
        %2335 = vmatprep.subr.bf16.mxu0 0
        %2336 = vmatpush1.bf16.msra.mxu0 0
        %2337 = vmatprep.subr.bf16.mxu0 0
        %2338 = vmatpush1.bf16.msra.mxu0 0
        %2339 = vmatprep.mubr.bf16.mxu0 0
        %2340 = vmatmul.mubr.bf16.gmra.mrb[0].mxu0 %v2302
        %v2341 = vpop.f32.mrb[0].mxu0
        %v2342 = vadd.f32 0.0, %v2341
        %v2343 = vpop.f32.mrb[0].mxu0
        %v2344 = vpop.f32.mrb[0].mxu0
        %v2345 = vpop.f32.mrb[0].mxu0
        %2346 = vdwg.mxu0
        %v2348 = vsel %vm2111, %v2203, 0
        %v2351 = vsel %vm2211, %v1729, 0
        %2353 = vmatprep.subr.bf16.mxu0 0
        %2354 = vmatpush1.bf16.msra.mxu0 %v2351
        %2355 = vmatprep.subr.bf16.mxu0 0
        %2356 = vmatpush1.bf16.msra.mxu0 0
        %2357 = vmatprep.subr.bf16.mxu0 0
        %2358 = vmatpush1.bf16.msra.mxu0 0
        %2359 = vmatprep.subr.bf16.mxu0 0
        %2360 = vmatpush1.bf16.msra.mxu0 0
        %2361 = vmatprep.subr.bf16.mxu0 0
        %2362 = vmatpush1.bf16.msra.mxu0 0
        %2363 = vmatprep.subr.bf16.mxu0 0
        %2364 = vmatpush1.bf16.msra.mxu0 0
        %2365 = vmatprep.subr.bf16.mxu0 0
        %2366 = vmatpush1.bf16.msra.mxu0 0
        %2367 = vmatprep.subr.bf16.mxu0 0
        %2368 = vmatpush1.bf16.msra.mxu0 0
        %2369 = vmatprep.subr.bf16.mxu0 0
        %2370 = vmatpush1.bf16.msra.mxu0 0
        %2371 = vmatprep.subr.bf16.mxu0 0
        %2372 = vmatpush1.bf16.msra.mxu0 0
        %2373 = vmatprep.subr.bf16.mxu0 0
        %2374 = vmatpush1.bf16.msra.mxu0 0
        %2375 = vmatprep.subr.bf16.mxu0 0
        %2376 = vmatpush1.bf16.msra.mxu0 0
        %2377 = vmatprep.subr.bf16.mxu0 0
        %2378 = vmatpush1.bf16.msra.mxu0 0
        %2379 = vmatprep.subr.bf16.mxu0 0
        %2380 = vmatpush1.bf16.msra.mxu0 0
        %2381 = vmatprep.subr.bf16.mxu0 0
        %2382 = vmatpush1.bf16.msra.mxu0 0
        %2383 = vmatprep.subr.bf16.mxu0 0
        %2384 = vmatpush1.bf16.msra.mxu0 0
        %2385 = vmatprep.mubr.bf16.mxu0 0
        %2386 = vmatmul.mubr.bf16.gmra.mrb[0].mxu0 %v2348
        %v2387 = vpop.f32.mrb[0].mxu0
        %v2388 = vadd.f32 0.0, %v2387
        %v2389 = vpop.f32.mrb[0].mxu0
        %v2390 = vpop.f32.mrb[0].mxu0
        %v2391 = vpop.f32.mrb[0].mxu0
        %2392 = vdwg.mxu0
        %v2394 = vsel %vm2111, %v2204, 0
        %v2397 = vsel %vm2211, %v1730, 0
        %2399 = vmatprep.subr.bf16.mxu0 0
        %2400 = vmatpush1.bf16.msra.mxu0 %v2397
        %2401 = vmatprep.subr.bf16.mxu0 0
        %2402 = vmatpush1.bf16.msra.mxu0 0
        %2403 = vmatprep.subr.bf16.mxu0 0
        %2404 = vmatpush1.bf16.msra.mxu0 0
        %2405 = vmatprep.subr.bf16.mxu0 0
        %2406 = vmatpush1.bf16.msra.mxu0 0
        %2407 = vmatprep.subr.bf16.mxu0 0
        %2408 = vmatpush1.bf16.msra.mxu0 0
        %2409 = vmatprep.subr.bf16.mxu0 0
        %2410 = vmatpush1.bf16.msra.mxu0 0
        %2411 = vmatprep.subr.bf16.mxu0 0
        %2412 = vmatpush1.bf16.msra.mxu0 0
        %2413 = vmatprep.subr.bf16.mxu0 0
        %2414 = vmatpush1.bf16.msra.mxu0 0
        %2415 = vmatprep.subr.bf16.mxu0 0
        %2416 = vmatpush1.bf16.msra.mxu0 0
        %2417 = vmatprep.subr.bf16.mxu0 0
        %2418 = vmatpush1.bf16.msra.mxu0 0
        %2419 = vmatprep.subr.bf16.mxu0 0
        %2420 = vmatpush1.bf16.msra.mxu0 0
        %2421 = vmatprep.subr.bf16.mxu0 0
        %2422 = vmatpush1.bf16.msra.mxu0 0
        %2423 = vmatprep.subr.bf16.mxu0 0
        %2424 = vmatpush1.bf16.msra.mxu0 0
        %2425 = vmatprep.subr.bf16.mxu0 0
        %2426 = vmatpush1.bf16.msra.mxu0 0
        %2427 = vmatprep.subr.bf16.mxu0 0
        %2428 = vmatpush1.bf16.msra.mxu0 0
        %2429 = vmatprep.subr.bf16.mxu0 0
        %2430 = vmatpush1.bf16.msra.mxu0 0
        %2431 = vmatprep.mubr.bf16.mxu0 0
        %2432 = vmatmul.mubr.bf16.gmra.mrb[0].mxu0 %v2394
        %v2433 = vpop.f32.mrb[0].mxu0
        %v2434 = vadd.f32 0.0, %v2433
        %v2435 = vpop.f32.mrb[0].mxu0
        %v2436 = vpop.f32.mrb[0].mxu0
        %v2437 = vpop.f32.mrb[0].mxu0
        %2438 = vdwg.mxu0
        %v2440 = vsel %vm2111, %v2205, 0
        %v2443 = vsel %vm2211, %v1731, 0
        %2445 = vmatprep.subr.bf16.mxu0 0
        %2446 = vmatpush1.bf16.msra.mxu0 %v2443
        %2447 = vmatprep.subr.bf16.mxu0 0
        %2448 = vmatpush1.bf16.msra.mxu0 0
        %2449 = vmatprep.subr.bf16.mxu0 0
        %2450 = vmatpush1.bf16.msra.mxu0 0
        %2451 = vmatprep.subr.bf16.mxu0 0
        %2452 = vmatpush1.bf16.msra.mxu0 0
        %2453 = vmatprep.subr.bf16.mxu0 0
        %2454 = vmatpush1.bf16.msra.mxu0 0
        %2455 = vmatprep.subr.bf16.mxu0 0
        %2456 = vmatpush1.bf16.msra.mxu0 0
        %2457 = vmatprep.subr.bf16.mxu0 0
        %2458 = vmatpush1.bf16.msra.mxu0 0
        %2459 = vmatprep.subr.bf16.mxu0 0
        %2460 = vmatpush1.bf16.msra.mxu0 0
        %2461 = vmatprep.subr.bf16.mxu0 0
        %2462 = vmatpush1.bf16.msra.mxu0 0
        %2463 = vmatprep.subr.bf16.mxu0 0
        %2464 = vmatpush1.bf16.msra.mxu0 0
        %2465 = vmatprep.subr.bf16.mxu0 0
        %2466 = vmatpush1.bf16.msra.mxu0 0
        %2467 = vmatprep.subr.bf16.mxu0 0
        %2468 = vmatpush1.bf16.msra.mxu0 0
        %2469 = vmatprep.subr.bf16.mxu0 0
        %2470 = vmatpush1.bf16.msra.mxu0 0
        %2471 = vmatprep.subr.bf16.mxu0 0
        %2472 = vmatpush1.bf16.msra.mxu0 0
        %2473 = vmatprep.subr.bf16.mxu0 0
        %2474 = vmatpush1.bf16.msra.mxu0 0
        %2475 = vmatprep.subr.bf16.mxu0 0
        %2476 = vmatpush1.bf16.msra.mxu0 0
        %2477 = vmatprep.mubr.bf16.mxu0 0
        %2478 = vmatmul.mubr.bf16.gmra.mrb[0].mxu0 %v2440
        %v2479 = vpop.f32.mrb[0].mxu0
        %v2480 = vadd.f32 0.0, %v2479
        %v2481 = vpop.f32.mrb[0].mxu0
        %v2482 = vpop.f32.mrb[0].mxu0
        %v2483 = vpop.f32.mrb[0].mxu0
        %2484 = vdwg.mxu0
        %v2486 = vsel %vm2111, %v2206, 0
        %v2489 = vsel %vm2211, %v1732, 0
        %2491 = vmatprep.subr.bf16.mxu0 0
        %2492 = vmatpush1.bf16.msra.mxu0 %v2489
        %2493 = vmatprep.subr.bf16.mxu0 0
        %2494 = vmatpush1.bf16.msra.mxu0 0
        %2495 = vmatprep.subr.bf16.mxu0 0
        %2496 = vmatpush1.bf16.msra.mxu0 0
        %2497 = vmatprep.subr.bf16.mxu0 0
        %2498 = vmatpush1.bf16.msra.mxu0 0
        %2499 = vmatprep.subr.bf16.mxu0 0
        %2500 = vmatpush1.bf16.msra.mxu0 0
        %2501 = vmatprep.subr.bf16.mxu0 0
        %2502 = vmatpush1.bf16.msra.mxu0 0
        %2503 = vmatprep.subr.bf16.mxu0 0
        %2504 = vmatpush1.bf16.msra.mxu0 0
        %2505 = vmatprep.subr.bf16.mxu0 0
        %2506 = vmatpush1.bf16.msra.mxu0 0
        %2507 = vmatprep.subr.bf16.mxu0 0
        %2508 = vmatpush1.bf16.msra.mxu0 0
        %2509 = vmatprep.subr.bf16.mxu0 0
        %2510 = vmatpush1.bf16.msra.mxu0 0
        %2511 = vmatprep.subr.bf16.mxu0 0
        %2512 = vmatpush1.bf16.msra.mxu0 0
        %2513 = vmatprep.subr.bf16.mxu0 0
        %2514 = vmatpush1.bf16.msra.mxu0 0
        %2515 = vmatprep.subr.bf16.mxu0 0
        %2516 = vmatpush1.bf16.msra.mxu0 0
        %2517 = vmatprep.subr.bf16.mxu0 0
        %2518 = vmatpush1.bf16.msra.mxu0 0
        %2519 = vmatprep.subr.bf16.mxu0 0
        %2520 = vmatpush1.bf16.msra.mxu0 0
        %2521 = vmatprep.subr.bf16.mxu0 0
        %2522 = vmatpush1.bf16.msra.mxu0 0
        %2523 = vmatprep.mubr.bf16.mxu0 0
        %2524 = vmatmul.mubr.bf16.gmra.mrb[0].mxu0 %v2486
        %v2525 = vpop.f32.mrb[0].mxu0
        %v2526 = vadd.f32 0.0, %v2525
        %v2527 = vpop.f32.mrb[0].mxu0
        %v2528 = vpop.f32.mrb[0].mxu0
        %v2529 = vpop.f32.mrb[0].mxu0
        %2530 = vdwg.mxu0
        %v2532 = vsel %vm2111, %v2207, 0
        %v2535 = vsel %vm2211, %v1733, 0
        %2537 = vmatprep.subr.bf16.mxu0 0
        %2538 = vmatpush1.bf16.msra.mxu0 %v2535
        %2539 = vmatprep.subr.bf16.mxu0 0
        %2540 = vmatpush1.bf16.msra.mxu0 0
        %2541 = vmatprep.subr.bf16.mxu0 0
        %2542 = vmatpush1.bf16.msra.mxu0 0
        %2543 = vmatprep.subr.bf16.mxu0 0
        %2544 = vmatpush1.bf16.msra.mxu0 0
        %2545 = vmatprep.subr.bf16.mxu0 0
        %2546 = vmatpush1.bf16.msra.mxu0 0
        %2547 = vmatprep.subr.bf16.mxu0 0
        %2548 = vmatpush1.bf16.msra.mxu0 0
        %2549 = vmatprep.subr.bf16.mxu0 0
        %2550 = vmatpush1.bf16.msra.mxu0 0
        %2551 = vmatprep.subr.bf16.mxu0 0
        %2552 = vmatpush1.bf16.msra.mxu0 0
        %2553 = vmatprep.subr.bf16.mxu0 0
        %2554 = vmatpush1.bf16.msra.mxu0 0
        %2555 = vmatprep.subr.bf16.mxu0 0
        %2556 = vmatpush1.bf16.msra.mxu0 0
        %2557 = vmatprep.subr.bf16.mxu0 0
        %2558 = vmatpush1.bf16.msra.mxu0 0
        %2559 = vmatprep.subr.bf16.mxu0 0
        %2560 = vmatpush1.bf16.msra.mxu0 0
        %2561 = vmatprep.subr.bf16.mxu0 0
        %2562 = vmatpush1.bf16.msra.mxu0 0
        %2563 = vmatprep.subr.bf16.mxu0 0
        %2564 = vmatpush1.bf16.msra.mxu0 0
        %2565 = vmatprep.subr.bf16.mxu0 0
        %2566 = vmatpush1.bf16.msra.mxu0 0
        %2567 = vmatprep.subr.bf16.mxu0 0
        %2568 = vmatpush1.bf16.msra.mxu0 0
        %2569 = vmatprep.mubr.bf16.mxu0 0
        %2570 = vmatmul.mubr.bf16.gmra.mrb[0].mxu0 %v2532
        %v2571 = vpop.f32.mrb[0].mxu0
        %v2572 = vadd.f32 0.0, %v2571
        %v2573 = vpop.f32.mrb[0].mxu0
        %v2574 = vpop.f32.mrb[0].mxu0
        %v2575 = vpop.f32.mrb[0].mxu0
        %2576 = vdwg.mxu0
        %v2577 = vcombine.low %v2250, %v2342
        %v2578 = vcombine.high %v2250, %v2342
        %v2580 = vunpack.c.l.s4 1983009808
        %v2581 = vunpack.c.0.s8 %v2580
        %v2582 = vlaneseq
        %v2583 = vshrl.u32 %v2582, 7
        %v2584 = vsub.s32 %v2581, %v2583
        %v2585 = vrot.slane %v2577, %v2584
        %v2587 = vunpack.c.l.s4 1983009808
        %v2588 = vunpack.c.0.s8 %v2587
        %v2589 = vlaneseq
        %v2590 = vshrl.u32 %v2589, 7
        %v2591 = vsub.s32 %v2588, %v2590
        %v2592 = vrot.slane %v2578, %v2591
        %v2593 = vcombine.low %v2296, %v2388
        %v2594 = vcombine.high %v2296, %v2388
        %v2596 = vunpack.c.l.s4 1983009808
        %v2597 = vunpack.c.0.s8 %v2596
        %v2598 = vlaneseq
        %v2599 = vshrl.u32 %v2598, 7
        %v2600 = vsub.s32 %v2597, %v2599
        %v2601 = vrot.slane %v2593, %v2600
        %v2603 = vunpack.c.l.s4 1983009808
        %v2604 = vunpack.c.0.s8 %v2603
        %v2605 = vlaneseq
        %v2606 = vshrl.u32 %v2605, 7
        %v2607 = vsub.s32 %v2604, %v2606
        %v2608 = vrot.slane %v2594, %v2607
        %v2609 = vcombine.low %v2434, %v2526
        %v2610 = vcombine.high %v2434, %v2526
        %v2612 = vunpack.c.l.s4 1983009808
        %v2613 = vunpack.c.0.s8 %v2612
        %v2614 = vlaneseq
        %v2615 = vshrl.u32 %v2614, 7
        %v2616 = vsub.s32 %v2613, %v2615
        %v2617 = vrot.slane %v2609, %v2616
        %v2619 = vunpack.c.l.s4 1983009808
        %v2620 = vunpack.c.0.s8 %v2619
        %v2621 = vlaneseq
        %v2622 = vshrl.u32 %v2621, 7
        %v2623 = vsub.s32 %v2620, %v2622
        %v2624 = vrot.slane %v2610, %v2623
        %v2625 = vcombine.low %v2480, %v2572
        %v2626 = vcombine.high %v2480, %v2572
        %v2628 = vunpack.c.l.s4 1983009808
        %v2629 = vunpack.c.0.s8 %v2628
        %v2630 = vlaneseq
        %v2631 = vshrl.u32 %v2630, 7
        %v2632 = vsub.s32 %v2629, %v2631
        %v2633 = vrot.slane %v2625, %v2632
        %v2635 = vunpack.c.l.s4 1983009808
        %v2636 = vunpack.c.0.s8 %v2635
        %v2637 = vlaneseq
        %v2638 = vshrl.u32 %v2637, 7
        %v2639 = vsub.s32 %v2636, %v2638
        %v2640 = vrot.slane %v2626, %v2639
        %v2641 = vcombine.low %v2585, %v2601
        %v2642 = vcombine.high %v2585, %v2601
        %v2644 = vunpack.c.l.s4 1934713408
        %v2645 = vunpack.c.0.s8 %v2644
        %v2646 = vlaneseq
        %v2647 = vshrl.u32 %v2646, 7
        %v2648 = vsub.s32 %v2645, %v2647
        %v2649 = vrot.slane %v2641, %v2648
        %v2651 = vunpack.c.l.s4 1934713408
        %v2652 = vunpack.c.0.s8 %v2651
        %v2653 = vlaneseq
        %v2654 = vshrl.u32 %v2653, 7
        %v2655 = vsub.s32 %v2652, %v2654
        %v2656 = vrot.slane %v2642, %v2655
        %v2657 = vcombine.low %v2592, %v2608
        %v2658 = vcombine.high %v2592, %v2608
        %v2660 = vunpack.c.l.s4 1934713408
        %v2661 = vunpack.c.0.s8 %v2660
        %v2662 = vlaneseq
        %v2663 = vshrl.u32 %v2662, 7
        %v2664 = vsub.s32 %v2661, %v2663
        %v2665 = vrot.slane %v2657, %v2664
        %v2667 = vunpack.c.l.s4 1934713408
        %v2668 = vunpack.c.0.s8 %v2667
        %v2669 = vlaneseq
        %v2670 = vshrl.u32 %v2669, 7
        %v2671 = vsub.s32 %v2668, %v2670
        %v2672 = vrot.slane %v2658, %v2671
        %v2673 = vcombine.low %v2617, %v2633
        %v2674 = vcombine.high %v2617, %v2633
        %v2676 = vunpack.c.l.s4 1934713408
        %v2677 = vunpack.c.0.s8 %v2676
        %v2678 = vlaneseq
        %v2679 = vshrl.u32 %v2678, 7
        %v2680 = vsub.s32 %v2677, %v2679
        %v2681 = vrot.slane %v2673, %v2680
        %v2683 = vunpack.c.l.s4 1934713408
        %v2684 = vunpack.c.0.s8 %v2683
        %v2685 = vlaneseq
        %v2686 = vshrl.u32 %v2685, 7
        %v2687 = vsub.s32 %v2684, %v2686
        %v2688 = vrot.slane %v2674, %v2687
        %v2689 = vcombine.low %v2624, %v2640
        %v2690 = vcombine.high %v2624, %v2640
        %v2692 = vunpack.c.l.s4 1934713408
        %v2693 = vunpack.c.0.s8 %v2692
        %v2694 = vlaneseq
        %v2695 = vshrl.u32 %v2694, 7
        %v2696 = vsub.s32 %v2693, %v2695
        %v2697 = vrot.slane %v2689, %v2696
        %v2699 = vunpack.c.l.s4 1934713408
        %v2700 = vunpack.c.0.s8 %v2699
        %v2701 = vlaneseq
        %v2702 = vshrl.u32 %v2701, 7
        %v2703 = vsub.s32 %v2700, %v2702
        %v2704 = vrot.slane %v2690, %v2703
        %v2705 = vcombine.low %v2649, %v2681
        %v2706 = vcombine.high %v2649, %v2681
        %v2707 = vcombine.low %v2656, %v2688
        %v2708 = vcombine.high %v2656, %v2688
        %v2709 = vcombine.low %v2665, %v2697
        %v2710 = vcombine.high %v2665, %v2697
        %v2711 = vcombine.low %v2672, %v2704
        %v2712 = vcombine.high %v2672, %v2704
        %v2713 = vcombine.low %v2705, %v2707
        %v2714 = vcombine.high %v2705, %v2707
        %v2716 = vunpack.c.l.s4 1983009808
        %v2717 = vunpack.c.0.s8 %v2716
        %v2718 = vlaneseq
        %v2719 = vshrl.u32 %v2718, 7
        %v2720 = vsub.s32 %v2717, %v2719
        %v2721 = vrot.slane %v2713, %v2720
        %v2723 = vunpack.c.l.s4 1983009808
        %v2724 = vunpack.c.0.s8 %v2723
        %v2725 = vlaneseq
        %v2726 = vshrl.u32 %v2725, 7
        %v2727 = vsub.s32 %v2724, %v2726
        %v2728 = vrot.slane %v2714, %v2727
        %v2729 = vcombine.low %v2706, %v2708
        %v2730 = vcombine.high %v2706, %v2708
        %v2732 = vunpack.c.l.s4 1983009808
        %v2733 = vunpack.c.0.s8 %v2732
        %v2734 = vlaneseq
        %v2735 = vshrl.u32 %v2734, 7
        %v2736 = vsub.s32 %v2733, %v2735
        %v2737 = vrot.slane %v2729, %v2736
        %v2739 = vunpack.c.l.s4 1983009808
        %v2740 = vunpack.c.0.s8 %v2739
        %v2741 = vlaneseq
        %v2742 = vshrl.u32 %v2741, 7
        %v2743 = vsub.s32 %v2740, %v2742
        %v2744 = vrot.slane %v2730, %v2743
        %v2745 = vcombine.low %v2709, %v2711
        %v2746 = vcombine.high %v2709, %v2711
        %v2748 = vunpack.c.l.s4 1983009808
        %v2749 = vunpack.c.0.s8 %v2748
        %v2750 = vlaneseq
        %v2751 = vshrl.u32 %v2750, 7
        %v2752 = vsub.s32 %v2749, %v2751
        %v2753 = vrot.slane %v2745, %v2752
        %v2755 = vunpack.c.l.s4 1983009808
        %v2756 = vunpack.c.0.s8 %v2755
        %v2757 = vlaneseq
        %v2758 = vshrl.u32 %v2757, 7
        %v2759 = vsub.s32 %v2756, %v2758
        %v2760 = vrot.slane %v2746, %v2759
        %v2761 = vcombine.low %v2710, %v2712
        %v2762 = vcombine.high %v2710, %v2712
        %v2764 = vunpack.c.l.s4 1983009808
        %v2765 = vunpack.c.0.s8 %v2764
        %v2766 = vlaneseq
        %v2767 = vshrl.u32 %v2766, 7
        %v2768 = vsub.s32 %v2765, %v2767
        %v2769 = vrot.slane %v2761, %v2768
        %v2771 = vunpack.c.l.s4 1983009808
        %v2772 = vunpack.c.0.s8 %v2771
        %v2773 = vlaneseq
        %v2774 = vshrl.u32 %v2773, 7
        %v2775 = vsub.s32 %v2772, %v2774
        %v2776 = vrot.slane %v2762, %v2775
        %v2777 = vcombine.low %v2721, %v2737
        %v2778 = vcombine.high %v2721, %v2737
        %v2780 = vunpack.c.l.s4 1934713408
        %v2781 = vunpack.c.0.s8 %v2780
        %v2782 = vlaneseq
        %v2783 = vshrl.u32 %v2782, 7
        %v2784 = vsub.s32 %v2781, %v2783
        %v2785 = vrot.slane %v2777, %v2784
        %v2787 = vunpack.c.l.s4 1934713408
        %v2788 = vunpack.c.0.s8 %v2787
        %v2789 = vlaneseq
        %v2790 = vshrl.u32 %v2789, 7
        %v2791 = vsub.s32 %v2788, %v2790
        %v2792 = vrot.slane %v2778, %v2791
        %v2793 = vcombine.low %v2728, %v2744
        %v2794 = vcombine.high %v2728, %v2744
        %v2796 = vunpack.c.l.s4 1934713408
        %v2797 = vunpack.c.0.s8 %v2796
        %v2798 = vlaneseq
        %v2799 = vshrl.u32 %v2798, 7
        %v2800 = vsub.s32 %v2797, %v2799
        %v2801 = vrot.slane %v2793, %v2800
        %v2803 = vunpack.c.l.s4 1934713408
        %v2804 = vunpack.c.0.s8 %v2803
        %v2805 = vlaneseq
        %v2806 = vshrl.u32 %v2805, 7
        %v2807 = vsub.s32 %v2804, %v2806
        %v2808 = vrot.slane %v2794, %v2807
        %v2809 = vcombine.low %v2753, %v2769
        %v2810 = vcombine.high %v2753, %v2769
        %v2812 = vunpack.c.l.s4 1934713408
        %v2813 = vunpack.c.0.s8 %v2812
        %v2814 = vlaneseq
        %v2815 = vshrl.u32 %v2814, 7
        %v2816 = vsub.s32 %v2813, %v2815
        %v2817 = vrot.slane %v2809, %v2816
        %v2819 = vunpack.c.l.s4 1934713408
        %v2820 = vunpack.c.0.s8 %v2819
        %v2821 = vlaneseq
        %v2822 = vshrl.u32 %v2821, 7
        %v2823 = vsub.s32 %v2820, %v2822
        %v2824 = vrot.slane %v2810, %v2823
        %v2825 = vcombine.low %v2760, %v2776
        %v2826 = vcombine.high %v2760, %v2776
        %v2828 = vunpack.c.l.s4 1934713408
        %v2829 = vunpack.c.0.s8 %v2828
        %v2830 = vlaneseq
        %v2831 = vshrl.u32 %v2830, 7
        %v2832 = vsub.s32 %v2829, %v2831
        %v2833 = vrot.slane %v2825, %v2832
        %v2835 = vunpack.c.l.s4 1934713408
        %v2836 = vunpack.c.0.s8 %v2835
        %v2837 = vlaneseq
        %v2838 = vshrl.u32 %v2837, 7
        %v2839 = vsub.s32 %v2836, %v2838
        %v2840 = vrot.slane %v2826, %v2839
        %v2841 = vcombine.low %v2785, %v2817
        %v2842 = vcombine.high %v2785, %v2817
        %v2843 = vcombine.low %v2792, %v2824
        %v2844 = vcombine.high %v2792, %v2824
        %v2845 = vcombine.low %v2801, %v2833
        %v2846 = vcombine.high %v2801, %v2833
        %v2847 = vcombine.low %v2808, %v2840
        %v2848 = vcombine.high %v2808, %v2840
        %2850 = vrot.lane.b32.xlu0 %v2842, 16
        %v2851 = vpop.permute.xlu0 %2850
        %2854 = vrot.lane.b32.xlu0 %v2843, 32
        %v2855 = vpop.permute.xlu0 %2854
        %2858 = vrot.lane.b32.xlu0 %v2844, 48
        %v2859 = vpop.permute.xlu0 %2858
        %2862 = vrot.lane.b32.xlu0 %v2845, 64
        %v2863 = vpop.permute.xlu0 %2862
        %2866 = vrot.lane.b32.xlu0 %v2846, 80
        %v2867 = vpop.permute.xlu0 %2866
        %2870 = vrot.lane.b32.xlu0 %v2847, 96
        %v2871 = vpop.permute.xlu0 %2870
        %2874 = vrot.lane.b32.xlu0 %v2848, 112
        %v2875 = vpop.permute.xlu0 %2874
        %v2877 = vsel %vm1734, %v2841, %v2851
        %vm2878 = vcmask 261120
        %v2879 = vsel %vm2878, %v2877, %v2855
        %vm2880 = vcmask 392192
        %v2881 = vsel %vm2880, %v2879, %v2859
        %vm2882 = vcmask 523264
        %v2883 = vsel %vm2882, %v2881, %v2863
        %vm2884 = vcmask 654336
        %v2885 = vsel %vm2884, %v2883, %v2867
        %vm2886 = vcmask 785408
        %v2887 = vsel %vm2886, %v2885, %v2871
        %vm2888 = vcmask 916480
        %v2889 = vsel %vm2888, %v2887, %v2875
        %v2890 = vpack.c.bf16 %v2889, %v2889
        %v2891 = vld [vmem:[#allocation10] sm:$0xf]
        %v2892 = vld [vmem:[#allocation10 + $0x4] sm:$0xf]
        %v2893 = vld [vmem:[#allocation10 + $0x8] sm:$0xf]
        %v2894 = vld [vmem:[#allocation10 + $0xc] sm:$0xf]
        %v2895 = vld [vmem:[#allocation10 + $0x10] sm:$0xf]
        %v2896 = vld [vmem:[#allocation10 + $0x14] sm:$0xf]
        %v2897 = vld [vmem:[#allocation10 + $0x18] sm:$0xf]
        %v2898 = vld [vmem:[#allocation10 + $0x1c] sm:$0xf]
        %v2899 = vld [vmem:[#allocation10 + $0x20] sm:$0xf]
        %v2900 = vld [vmem:[#allocation10 + $0x24] sm:$0xf]
        %v2901 = vld [vmem:[#allocation10 + $0x28] sm:$0xf]
        %v2902 = vld [vmem:[#allocation10 + $0x2c] sm:$0xf]
        %v2903 = vld [vmem:[#allocation10 + $0x30] sm:$0xf]
        %v2904 = vld [vmem:[#allocation10 + $0x34] sm:$0xf]
        %v2905 = vld [vmem:[#allocation10 + $0x38] sm:$0xf]
        %v2906 = vld [vmem:[#allocation10 + $0x3c] sm:$0xf]
        %v2907 = vld [vmem:[%s6] sm:$0x1]
        %v2909 = vlaneseq
        %v2910 = vshrl.u32 %v2909, 7
        %v2911 = vsub.s32 0, %v2910
        %v2912 = vrot.slane %v2907, %v2911
        %v2930 = vunpack.c.l.b16 %v2891
        %v2931 = vunpack.c.l.b16 %v2892
        %v2932 = vunpack.c.l.b16 %v2893
        %v2933 = vunpack.c.l.b16 %v2894
        %v2934 = vunpack.c.l.b16 %v2895
        %v2935 = vunpack.c.l.b16 %v2896
        %v2936 = vunpack.c.l.b16 %v2897
        %v2937 = vunpack.c.l.b16 %v2898
        %v2938 = vunpack.c.l.b16 %v2899
        %v2939 = vunpack.c.l.b16 %v2900
        %v2940 = vunpack.c.l.b16 %v2901
        %v2941 = vunpack.c.l.b16 %v2902
        %v2942 = vunpack.c.l.b16 %v2903
        %v2943 = vunpack.c.l.b16 %v2904
        %v2944 = vunpack.c.l.b16 %v2905
        %v2945 = vunpack.c.l.b16 %v2906
        %v2946 = vpack.c.b16 %v2931, %v2930
        %v2947 = vpack.c.b16 %v2933, %v2932
        %v2948 = vpack.c.b16 %v2935, %v2934
        %v2949 = vpack.c.b16 %v2937, %v2936
        %v2950 = vpack.c.b16 %v2939, %v2938
        %v2951 = vpack.c.b16 %v2941, %v2940
        %v2952 = vpack.c.b16 %v2943, %v2942
        %v2953 = vpack.c.b16 %v2945, %v2944
        %2962 = vmatprep.subr.bf16.mxu0 0
        %2963 = vmatpush1.bf16.msra.mxu0 %v2946
        %2964 = vmatprep.subr.bf16.mxu0 0
        %2965 = vmatpush1.bf16.msra.mxu0 %v2947
        %2966 = vmatprep.subr.bf16.mxu0 0
        %2967 = vmatpush1.bf16.msra.mxu0 %v2948
        %2968 = vmatprep.subr.bf16.mxu0 0
        %2969 = vmatpush1.bf16.msra.mxu0 %v2949
        %2970 = vmatprep.subr.bf16.mxu0 0
        %2971 = vmatpush1.bf16.msra.mxu0 %v2950
        %2972 = vmatprep.subr.bf16.mxu0 0
        %2973 = vmatpush1.bf16.msra.mxu0 %v2951
        %2974 = vmatprep.subr.bf16.mxu0 0
        %2975 = vmatpush1.bf16.msra.mxu0 %v2952
        %2976 = vmatprep.subr.bf16.mxu0 0
        %2977 = vmatpush1.bf16.msra.mxu0 %v2953
        %2978 = vmatprep.subr.bf16.mxu0 0
        %2979 = vmatpush1.bf16.msra.mxu0 0
        %2980 = vmatprep.subr.bf16.mxu0 0
        %2981 = vmatpush1.bf16.msra.mxu0 0
        %2982 = vmatprep.subr.bf16.mxu0 0
        %2983 = vmatpush1.bf16.msra.mxu0 0
        %2984 = vmatprep.subr.bf16.mxu0 0
        %2985 = vmatpush1.bf16.msra.mxu0 0
        %2986 = vmatprep.subr.bf16.mxu0 0
        %2987 = vmatpush1.bf16.msra.mxu0 0
        %2988 = vmatprep.subr.bf16.mxu0 0
        %2989 = vmatpush1.bf16.msra.mxu0 0
        %2990 = vmatprep.subr.bf16.mxu0 0
        %2991 = vmatpush1.bf16.msra.mxu0 0
        %2992 = vmatprep.subr.bf16.mxu0 0
        %2993 = vmatpush1.bf16.msra.mxu0 0
        %2994 = vmatprep.mubr.bf16.mxu0 0
        %2995 = vmatmul.mubr.bf16.gmra.mrb[0].mxu0 %v2890
        %v2996 = vpop.f32.mrb[0].mxu0
        %v2997 = vadd.f32 %v2912, %v2996
        %v2998 = vpop.f32.mrb[0].mxu0
        %v2999 = vpop.f32.mrb[0].mxu0
        %v3000 = vpop.f32.mrb[0].mxu0
        %3001 = vdwg.mxu0
        %v3002 = vadd.f32 %v540, %v2997
        %v3003 = vld [vmem:[%s7] sm:$0x1]
        %v3004 = vld [vmem:[%s8] sm:$0x1]
        %3005 = vadd.xlane.f32.xlu0 %v3002
        %v3006 = vpop.xlane.xlu0 %3005
        %v3007 = vmul.f32 %v3006, %v545
        %v3008 = vsub.f32 %v3002, %v3007
        %v3009 = vmul.f32 %v3008, %v3008
        %3010 = vadd.xlane.f32.xlu0 %v3009
        %v3011 = vpop.xlane.xlu0 %3010
        %v3012 = vmul.f32 %v3011, %v545
        %v3013 = vadd.f32 %v3012, 1e-05
        %v3014 = vrsqrt.pop %v3013
        %v3015 = vmul.f32 %v3008, %v3014
        %v3017 = vlaneseq
        %v3018 = vshrl.u32 %v3017, 7
        %v3019 = vsub.s32 0, %v3018
        %v3020 = vrot.slane %v3003, %v3019
        %v3022 = vmul.f32 %v3015, %v3020
        %v3024 = vlaneseq
        %v3025 = vshrl.u32 %v3024, 7
        %v3026 = vsub.s32 0, %v3025
        %v3027 = vrot.slane %v3004, %v3026
        %v3029 = vadd.f32 %v3022, %v3027
        %v3030 = vpack.c.bf16 %v3029, %v3029
        %v3031 = vld [vmem:[#allocation11] sm:$0xff]
        %v3032 = vld [vmem:[#allocation11 + $0x8] sm:$0xff]
        %v3033 = vld [vmem:[#allocation11 + $0x10] sm:$0xff]
        %v3034 = vld [vmem:[#allocation11 + $0x18] sm:$0xff]
        %v3035 = vld [vmem:[#allocation11 + $0x20] sm:$0xff]
        %v3036 = vld [vmem:[#allocation11 + $0x28] sm:$0xff]
        %v3037 = vld [vmem:[#allocation11 + $0x30] sm:$0xff]
        %v3038 = vld [vmem:[#allocation11 + $0x38] sm:$0xff]
        %v3039 = vld [vmem:[#allocation11 + $0x40] sm:$0xff]
        %v3040 = vld [vmem:[#allocation11 + $0x48] sm:$0xff]
        %v3041 = vld [vmem:[#allocation11 + $0x50] sm:$0xff]
        %v3042 = vld [vmem:[#allocation11 + $0x58] sm:$0xff]
        %v3043 = vld [vmem:[#allocation11 + $0x60] sm:$0xff]
        %v3044 = vld [vmem:[#allocation11 + $0x68] sm:$0xff]
        %v3045 = vld [vmem:[#allocation11 + $0x70] sm:$0xff]
        %v3046 = vld [vmem:[#allocation11 + $0x78] sm:$0xff]
        %v3047 = vld [vmem:[#allocation11 + $0x80] sm:$0xff]
        %v3048 = vld [vmem:[#allocation11 + $0x88] sm:$0xff]
        %v3049 = vld [vmem:[#allocation11 + $0x90] sm:$0xff]
        %v3050 = vld [vmem:[#allocation11 + $0x98] sm:$0xff]
        %v3051 = vld [vmem:[#allocation11 + $0xa0] sm:$0xff]
        %v3052 = vld [vmem:[#allocation11 + $0xa8] sm:$0xff]
        %v3053 = vld [vmem:[#allocation11 + $0xb0] sm:$0xff]
        %v3054 = vld [vmem:[#allocation11 + $0xb8] sm:$0xff]
        %v3055 = vld [vmem:[#allocation11 + $0xc0] sm:$0xff]
        %v3056 = vld [vmem:[#allocation11 + $0xc8] sm:$0xff]
        %v3057 = vld [vmem:[#allocation11 + $0xd0] sm:$0xff]
        %v3058 = vld [vmem:[#allocation11 + $0xd8] sm:$0xff]
        %v3059 = vld [vmem:[#allocation11 + $0xe0] sm:$0xff]
        %v3060 = vld [vmem:[#allocation11 + $0xe8] sm:$0xff]
        %v3061 = vld [vmem:[#allocation11 + $0xf0] sm:$0xff]
        %v3062 = vld [vmem:[#allocation11 + $0xf8] sm:$0xff]
        %v3063 = vld [vmem:[%s10] sm:$0xf]
        %v3065 = vlaneseq
        %v3066 = vshrl.u32 %v3065, 7
        %v3067 = vsub.s32 0, %v3066
        %v3068 = vrot.slane %v3063, %v3067
        %v3069 = vlaneseq
        %v3070 = vshrl.u32 %v3069, 7
        %v3071 = vsub.s32 1, %v3070
        %v3072 = vrot.slane %v3063, %v3071
        %v3073 = vlaneseq
        %v3074 = vshrl.u32 %v3073, 7
        %v3075 = vsub.s32 2, %v3074
        %v3076 = vrot.slane %v3063, %v3075
        %v3077 = vlaneseq
        %v3078 = vshrl.u32 %v3077, 7
        %v3079 = vsub.s32 3, %v3078
        %v3080 = vrot.slane %v3063, %v3079
        %v3117 = vunpack.c.l.b16 %v3031
        %v3118 = vunpack.c.h.b16 %v3031
        %v3119 = vunpack.c.l.b16 %v3032
        %v3120 = vunpack.c.h.b16 %v3032
        %v3121 = vunpack.c.l.b16 %v3033
        %v3122 = vunpack.c.h.b16 %v3033
        %v3123 = vunpack.c.l.b16 %v3034
        %v3124 = vunpack.c.h.b16 %v3034
        %v3125 = vunpack.c.l.b16 %v3035
        %v3126 = vunpack.c.h.b16 %v3035
        %v3127 = vunpack.c.l.b16 %v3036
        %v3128 = vunpack.c.h.b16 %v3036
        %v3129 = vunpack.c.l.b16 %v3037
        %v3130 = vunpack.c.h.b16 %v3037
        %v3131 = vunpack.c.l.b16 %v3038
        %v3132 = vunpack.c.h.b16 %v3038
        %v3133 = vunpack.c.l.b16 %v3039
        %v3134 = vunpack.c.h.b16 %v3039
        %v3135 = vunpack.c.l.b16 %v3040
        %v3136 = vunpack.c.h.b16 %v3040
        %v3137 = vunpack.c.l.b16 %v3041
        %v3138 = vunpack.c.h.b16 %v3041
        %v3139 = vunpack.c.l.b16 %v3042
        %v3140 = vunpack.c.h.b16 %v3042
        %v3141 = vunpack.c.l.b16 %v3043
        %v3142 = vunpack.c.h.b16 %v3043
        %v3143 = vunpack.c.l.b16 %v3044
        %v3144 = vunpack.c.h.b16 %v3044
        %v3145 = vunpack.c.l.b16 %v3045
        %v3146 = vunpack.c.h.b16 %v3045
        %v3147 = vunpack.c.l.b16 %v3046
        %v3148 = vunpack.c.h.b16 %v3046
        %v3149 = vunpack.c.l.b16 %v3047
        %v3150 = vunpack.c.h.b16 %v3047
        %v3151 = vunpack.c.l.b16 %v3048
        %v3152 = vunpack.c.h.b16 %v3048
        %v3153 = vunpack.c.l.b16 %v3049
        %v3154 = vunpack.c.h.b16 %v3049
        %v3155 = vunpack.c.l.b16 %v3050
        %v3156 = vunpack.c.h.b16 %v3050
        %v3157 = vunpack.c.l.b16 %v3051
        %v3158 = vunpack.c.h.b16 %v3051
        %v3159 = vunpack.c.l.b16 %v3052
        %v3160 = vunpack.c.h.b16 %v3052
        %v3161 = vunpack.c.l.b16 %v3053
        %v3162 = vunpack.c.h.b16 %v3053
        %v3163 = vunpack.c.l.b16 %v3054
        %v3164 = vunpack.c.h.b16 %v3054
        %v3165 = vunpack.c.l.b16 %v3055
        %v3166 = vunpack.c.h.b16 %v3055
        %v3167 = vunpack.c.l.b16 %v3056
        %v3168 = vunpack.c.h.b16 %v3056
        %v3169 = vunpack.c.l.b16 %v3057
        %v3170 = vunpack.c.h.b16 %v3057
        %v3171 = vunpack.c.l.b16 %v3058
        %v3172 = vunpack.c.h.b16 %v3058
        %v3173 = vunpack.c.l.b16 %v3059
        %v3174 = vunpack.c.h.b16 %v3059
        %v3175 = vunpack.c.l.b16 %v3060
        %v3176 = vunpack.c.h.b16 %v3060
        %v3177 = vunpack.c.l.b16 %v3061
        %v3178 = vunpack.c.h.b16 %v3061
        %v3179 = vunpack.c.l.b16 %v3062
        %v3180 = vunpack.c.h.b16 %v3062
        %v3181 = vpack.c.b16 %v3121, %v3117
        %v3182 = vpack.c.b16 %v3122, %v3118
        %v3183 = vpack.c.b16 %v3123, %v3119
        %v3184 = vpack.c.b16 %v3124, %v3120
        %v3185 = vpack.c.b16 %v3129, %v3125
        %v3186 = vpack.c.b16 %v3130, %v3126
        %v3187 = vpack.c.b16 %v3131, %v3127
        %v3188 = vpack.c.b16 %v3132, %v3128
        %v3189 = vpack.c.b16 %v3137, %v3133
        %v3190 = vpack.c.b16 %v3138, %v3134
        %v3191 = vpack.c.b16 %v3139, %v3135
        %v3192 = vpack.c.b16 %v3140, %v3136
        %v3193 = vpack.c.b16 %v3145, %v3141
        %v3194 = vpack.c.b16 %v3146, %v3142
        %v3195 = vpack.c.b16 %v3147, %v3143
        %v3196 = vpack.c.b16 %v3148, %v3144
        %v3197 = vpack.c.b16 %v3153, %v3149
        %v3198 = vpack.c.b16 %v3154, %v3150
        %v3199 = vpack.c.b16 %v3155, %v3151
        %v3200 = vpack.c.b16 %v3156, %v3152
        %v3201 = vpack.c.b16 %v3161, %v3157
        %v3202 = vpack.c.b16 %v3162, %v3158
        %v3203 = vpack.c.b16 %v3163, %v3159
        %v3204 = vpack.c.b16 %v3164, %v3160
        %v3205 = vpack.c.b16 %v3169, %v3165
        %v3206 = vpack.c.b16 %v3170, %v3166
        %v3207 = vpack.c.b16 %v3171, %v3167
        %v3208 = vpack.c.b16 %v3172, %v3168
        %v3209 = vpack.c.b16 %v3177, %v3173
        %v3210 = vpack.c.b16 %v3178, %v3174
        %v3211 = vpack.c.b16 %v3179, %v3175
        %v3212 = vpack.c.b16 %v3180, %v3176
        %3245 = vmatprep.subr.bf16.mxu0 %v3182
        %3246 = vmatpush1.bf16.msra.mxu0 %v3181
        %3247 = vmatprep.subr.bf16.mxu0 %v3186
        %3248 = vmatpush1.bf16.msra.mxu0 %v3185
        %3249 = vmatprep.subr.bf16.mxu0 %v3190
        %3250 = vmatpush1.bf16.msra.mxu0 %v3189
        %3251 = vmatprep.subr.bf16.mxu0 %v3194
        %3252 = vmatpush1.bf16.msra.mxu0 %v3193
        %3253 = vmatprep.subr.bf16.mxu0 %v3198
        %3254 = vmatpush1.bf16.msra.mxu0 %v3197
        %3255 = vmatprep.subr.bf16.mxu0 %v3202
        %3256 = vmatpush1.bf16.msra.mxu0 %v3201
        %3257 = vmatprep.subr.bf16.mxu0 %v3206
        %3258 = vmatpush1.bf16.msra.mxu0 %v3205
        %3259 = vmatprep.subr.bf16.mxu0 %v3210
        %3260 = vmatpush1.bf16.msra.mxu0 %v3209
        %3261 = vmatprep.subr.bf16.mxu0 0
        %3262 = vmatpush1.bf16.msra.mxu0 0
        %3263 = vmatprep.subr.bf16.mxu0 0
        %3264 = vmatpush1.bf16.msra.mxu0 0
        %3265 = vmatprep.subr.bf16.mxu0 0
        %3266 = vmatpush1.bf16.msra.mxu0 0
        %3267 = vmatprep.subr.bf16.mxu0 0
        %3268 = vmatpush1.bf16.msra.mxu0 0
        %3269 = vmatprep.subr.bf16.mxu0 0
        %3270 = vmatpush1.bf16.msra.mxu0 0
        %3271 = vmatprep.subr.bf16.mxu0 0
        %3272 = vmatpush1.bf16.msra.mxu0 0
        %3273 = vmatprep.subr.bf16.mxu0 0
        %3274 = vmatpush1.bf16.msra.mxu0 0
        %3275 = vmatprep.subr.bf16.mxu0 0
        %3276 = vmatpush1.bf16.msra.mxu0 0
        %3277 = vmatprep.mubr.bf16.mxu0 0
        %3278 = vmatmul.mubr.bf16.gmra.mrb[0].mxu0 %v3030
        %v3279 = vpop.f32.mrb[0].mxu0
        %v3280 = vadd.f32 %v3068, %v3279
        %v3281 = vpop.f32.mrb[0].mxu0
        %v3282 = vadd.f32 %v3072, %v3281
        %v3283 = vpop.f32.mrb[0].mxu0
        %v3284 = vpop.f32.mrb[0].mxu0
        %3285 = vdwg.mxu0
        %3286 = vmatprep.subr.bf16.mxu0 %v3184
        %3287 = vmatpush1.bf16.msra.mxu0 %v3183
        %3288 = vmatprep.subr.bf16.mxu0 %v3188
        %3289 = vmatpush1.bf16.msra.mxu0 %v3187
        %3290 = vmatprep.subr.bf16.mxu0 %v3192
        %3291 = vmatpush1.bf16.msra.mxu0 %v3191
        %3292 = vmatprep.subr.bf16.mxu0 %v3196
        %3293 = vmatpush1.bf16.msra.mxu0 %v3195
        %3294 = vmatprep.subr.bf16.mxu0 %v3200
        %3295 = vmatpush1.bf16.msra.mxu0 %v3199
        %3296 = vmatprep.subr.bf16.mxu0 %v3204
        %3297 = vmatpush1.bf16.msra.mxu0 %v3203
        %3298 = vmatprep.subr.bf16.mxu0 %v3208
        %3299 = vmatpush1.bf16.msra.mxu0 %v3207
        %3300 = vmatprep.subr.bf16.mxu0 %v3212
        %3301 = vmatpush1.bf16.msra.mxu0 %v3211
        %3302 = vmatprep.subr.bf16.mxu0 0
        %3303 = vmatpush1.bf16.msra.mxu0 0
        %3304 = vmatprep.subr.bf16.mxu0 0
        %3305 = vmatpush1.bf16.msra.mxu0 0
        %3306 = vmatprep.subr.bf16.mxu0 0
        %3307 = vmatpush1.bf16.msra.mxu0 0
        %3308 = vmatprep.subr.bf16.mxu0 0
        %3309 = vmatpush1.bf16.msra.mxu0 0
        %3310 = vmatprep.subr.bf16.mxu0 0
        %3311 = vmatpush1.bf16.msra.mxu0 0
        %3312 = vmatprep.subr.bf16.mxu0 0
        %3313 = vmatpush1.bf16.msra.mxu0 0
        %3314 = vmatprep.subr.bf16.mxu0 0
        %3315 = vmatpush1.bf16.msra.mxu0 0
        %3316 = vmatprep.subr.bf16.mxu0 0
        %3317 = vmatpush1.bf16.msra.mxu0 0
        %3318 = vmatprep.mubr.bf16.mxu0 0
        %3319 = vmatmul.mubr.bf16.gmra.mrb[0].mxu0 %v3030
        %v3320 = vpop.f32.mrb[0].mxu0
        %v3321 = vadd.f32 %v3076, %v3320
        %v3322 = vpop.f32.mrb[0].mxu0
        %v3323 = vadd.f32 %v3080, %v3322
        %v3324 = vpop.f32.mrb[0].mxu0
        %v3325 = vpop.f32.mrb[0].mxu0
        %3326 = vdwg.mxu0
        %v3327 = vmax.f32 %v3280, 0.0
        %v3328 = vmax.f32 %v3282, 0.0
        %v3329 = vmax.f32 %v3321, 0.0
        %v3330 = vmax.f32 %v3323, 0.0
        %v3331 = vpack.c.bf16 %v3327, %v3327
        %v3332 = vpack.c.bf16 %v3328, %v3328
        %v3333 = vpack.c.bf16 %v3329, %v3329
        %v3334 = vpack.c.bf16 %v3330, %v3330
        %v3335 = vld [vmem:[#allocation13] sm:$0xf]
        %v3336 = vld [vmem:[#allocation13 + $0x4] sm:$0xf]
        %v3337 = vld [vmem:[#allocation13 + $0x8] sm:$0xf]
        %v3338 = vld [vmem:[#allocation13 + $0xc] sm:$0xf]
        %v3339 = vld [vmem:[#allocation13 + $0x10] sm:$0xf]
        %v3340 = vld [vmem:[#allocation13 + $0x14] sm:$0xf]
        %v3341 = vld [vmem:[#allocation13 + $0x18] sm:$0xf]
        %v3342 = vld [vmem:[#allocation13 + $0x1c] sm:$0xf]
        %v3343 = vld [vmem:[#allocation13 + $0x20] sm:$0xf]
        %v3344 = vld [vmem:[#allocation13 + $0x24] sm:$0xf]
        %v3345 = vld [vmem:[#allocation13 + $0x28] sm:$0xf]
        %v3346 = vld [vmem:[#allocation13 + $0x2c] sm:$0xf]
        %v3347 = vld [vmem:[#allocation13 + $0x30] sm:$0xf]
        %v3348 = vld [vmem:[#allocation13 + $0x34] sm:$0xf]
        %v3349 = vld [vmem:[#allocation13 + $0x38] sm:$0xf]
        %v3350 = vld [vmem:[#allocation13 + $0x3c] sm:$0xf]
        %v3351 = vld [vmem:[#allocation13 + $0x40] sm:$0xf]
        %v3352 = vld [vmem:[#allocation13 + $0x44] sm:$0xf]
        %v3353 = vld [vmem:[#allocation13 + $0x48] sm:$0xf]
        %v3354 = vld [vmem:[#allocation13 + $0x4c] sm:$0xf]
        %v3355 = vld [vmem:[#allocation13 + $0x50] sm:$0xf]
        %v3356 = vld [vmem:[#allocation13 + $0x54] sm:$0xf]
        %v3357 = vld [vmem:[#allocation13 + $0x58] sm:$0xf]
        %v3358 = vld [vmem:[#allocation13 + $0x5c] sm:$0xf]
        %v3359 = vld [vmem:[#allocation13 + $0x60] sm:$0xf]
        %v3360 = vld [vmem:[#allocation13 + $0x64] sm:$0xf]
        %v3361 = vld [vmem:[#allocation13 + $0x68] sm:$0xf]
        %v3362 = vld [vmem:[#allocation13 + $0x6c] sm:$0xf]
        %v3363 = vld [vmem:[#allocation13 + $0x70] sm:$0xf]
        %v3364 = vld [vmem:[#allocation13 + $0x74] sm:$0xf]
        %v3365 = vld [vmem:[#allocation13 + $0x78] sm:$0xf]
        %v3366 = vld [vmem:[#allocation13 + $0x7c] sm:$0xf]
        %v3367 = vld [vmem:[#allocation13 + $0x80] sm:$0xf]
        %v3368 = vld [vmem:[#allocation13 + $0x84] sm:$0xf]
        %v3369 = vld [vmem:[#allocation13 + $0x88] sm:$0xf]
        %v3370 = vld [vmem:[#allocation13 + $0x8c] sm:$0xf]
        %v3371 = vld [vmem:[#allocation13 + $0x90] sm:$0xf]
        %v3372 = vld [vmem:[#allocation13 + $0x94] sm:$0xf]
        %v3373 = vld [vmem:[#allocation13 + $0x98] sm:$0xf]
        %v3374 = vld [vmem:[#allocation13 + $0x9c] sm:$0xf]
        %v3375 = vld [vmem:[#allocation13 + $0xa0] sm:$0xf]
        %v3376 = vld [vmem:[#allocation13 + $0xa4] sm:$0xf]
        %v3377 = vld [vmem:[#allocation13 + $0xa8] sm:$0xf]
        %v3378 = vld [vmem:[#allocation13 + $0xac] sm:$0xf]
        %v3379 = vld [vmem:[#allocation13 + $0xb0] sm:$0xf]
        %v3380 = vld [vmem:[#allocation13 + $0xb4] sm:$0xf]
        %v3381 = vld [vmem:[#allocation13 + $0xb8] sm:$0xf]
        %v3382 = vld [vmem:[#allocation13 + $0xbc] sm:$0xf]
        %v3383 = vld [vmem:[#allocation13 + $0xc0] sm:$0xf]
        %v3384 = vld [vmem:[#allocation13 + $0xc4] sm:$0xf]
        %v3385 = vld [vmem:[#allocation13 + $0xc8] sm:$0xf]
        %v3386 = vld [vmem:[#allocation13 + $0xcc] sm:$0xf]
        %v3387 = vld [vmem:[#allocation13 + $0xd0] sm:$0xf]
        %v3388 = vld [vmem:[#allocation13 + $0xd4] sm:$0xf]
        %v3389 = vld [vmem:[#allocation13 + $0xd8] sm:$0xf]
        %v3390 = vld [vmem:[#allocation13 + $0xdc] sm:$0xf]
        %v3391 = vld [vmem:[#allocation13 + $0xe0] sm:$0xf]
        %v3392 = vld [vmem:[#allocation13 + $0xe4] sm:$0xf]
        %v3393 = vld [vmem:[#allocation13 + $0xe8] sm:$0xf]
        %v3394 = vld [vmem:[#allocation13 + $0xec] sm:$0xf]
        %v3395 = vld [vmem:[#allocation13 + $0xf0] sm:$0xf]
        %v3396 = vld [vmem:[#allocation13 + $0xf4] sm:$0xf]
        %v3397 = vld [vmem:[#allocation13 + $0xf8] sm:$0xf]
        %v3398 = vld [vmem:[#allocation13 + $0xfc] sm:$0xf]
        %v3399 = vld [vmem:[%s12] sm:$0x1]
        %v3401 = vlaneseq
        %v3402 = vshrl.u32 %v3401, 7
        %v3403 = vsub.s32 0, %v3402
        %v3404 = vrot.slane %v3399, %v3403
        %v3470 = vunpack.c.l.b16 %v3335
        %v3471 = vunpack.c.l.b16 %v3336
        %v3472 = vunpack.c.l.b16 %v3337
        %v3473 = vunpack.c.l.b16 %v3338
        %v3474 = vunpack.c.l.b16 %v3339
        %v3475 = vunpack.c.l.b16 %v3340
        %v3476 = vunpack.c.l.b16 %v3341
        %v3477 = vunpack.c.l.b16 %v3342
        %v3478 = vunpack.c.l.b16 %v3343
        %v3479 = vunpack.c.l.b16 %v3344
        %v3480 = vunpack.c.l.b16 %v3345
        %v3481 = vunpack.c.l.b16 %v3346
        %v3482 = vunpack.c.l.b16 %v3347
        %v3483 = vunpack.c.l.b16 %v3348
        %v3484 = vunpack.c.l.b16 %v3349
        %v3485 = vunpack.c.l.b16 %v3350
        %v3486 = vunpack.c.l.b16 %v3351
        %v3487 = vunpack.c.l.b16 %v3352
        %v3488 = vunpack.c.l.b16 %v3353
        %v3489 = vunpack.c.l.b16 %v3354
        %v3490 = vunpack.c.l.b16 %v3355
        %v3491 = vunpack.c.l.b16 %v3356
        %v3492 = vunpack.c.l.b16 %v3357
        %v3493 = vunpack.c.l.b16 %v3358
        %v3494 = vunpack.c.l.b16 %v3359
        %v3495 = vunpack.c.l.b16 %v3360
        %v3496 = vunpack.c.l.b16 %v3361
        %v3497 = vunpack.c.l.b16 %v3362
        %v3498 = vunpack.c.l.b16 %v3363
        %v3499 = vunpack.c.l.b16 %v3364
        %v3500 = vunpack.c.l.b16 %v3365
        %v3501 = vunpack.c.l.b16 %v3366
        %v3502 = vunpack.c.l.b16 %v3367
        %v3503 = vunpack.c.l.b16 %v3368
        %v3504 = vunpack.c.l.b16 %v3369
        %v3505 = vunpack.c.l.b16 %v3370
        %v3506 = vunpack.c.l.b16 %v3371
        %v3507 = vunpack.c.l.b16 %v3372
        %v3508 = vunpack.c.l.b16 %v3373
        %v3509 = vunpack.c.l.b16 %v3374
        %v3510 = vunpack.c.l.b16 %v3375
        %v3511 = vunpack.c.l.b16 %v3376
        %v3512 = vunpack.c.l.b16 %v3377
        %v3513 = vunpack.c.l.b16 %v3378
        %v3514 = vunpack.c.l.b16 %v3379
        %v3515 = vunpack.c.l.b16 %v3380
        %v3516 = vunpack.c.l.b16 %v3381
        %v3517 = vunpack.c.l.b16 %v3382
        %v3518 = vunpack.c.l.b16 %v3383
        %v3519 = vunpack.c.l.b16 %v3384
        %v3520 = vunpack.c.l.b16 %v3385
        %v3521 = vunpack.c.l.b16 %v3386
        %v3522 = vunpack.c.l.b16 %v3387
        %v3523 = vunpack.c.l.b16 %v3388
        %v3524 = vunpack.c.l.b16 %v3389
        %v3525 = vunpack.c.l.b16 %v3390
        %v3526 = vunpack.c.l.b16 %v3391
        %v3527 = vunpack.c.l.b16 %v3392
        %v3528 = vunpack.c.l.b16 %v3393
        %v3529 = vunpack.c.l.b16 %v3394
        %v3530 = vunpack.c.l.b16 %v3395
        %v3531 = vunpack.c.l.b16 %v3396
        %v3532 = vunpack.c.l.b16 %v3397
        %v3533 = vunpack.c.l.b16 %v3398
        %v3534 = vpack.c.b16 %v3471, %v3470
        %v3535 = vpack.c.b16 %v3473, %v3472
        %v3536 = vpack.c.b16 %v3475, %v3474
        %v3537 = vpack.c.b16 %v3477, %v3476
        %v3538 = vpack.c.b16 %v3479, %v3478
        %v3539 = vpack.c.b16 %v3481, %v3480
        %v3540 = vpack.c.b16 %v3483, %v3482
        %v3541 = vpack.c.b16 %v3485, %v3484
        %v3542 = vpack.c.b16 %v3487, %v3486
        %v3543 = vpack.c.b16 %v3489, %v3488
        %v3544 = vpack.c.b16 %v3491, %v3490
        %v3545 = vpack.c.b16 %v3493, %v3492
        %v3546 = vpack.c.b16 %v3495, %v3494
        %v3547 = vpack.c.b16 %v3497, %v3496
        %v3548 = vpack.c.b16 %v3499, %v3498
        %v3549 = vpack.c.b16 %v3501, %v3500
        %v3550 = vpack.c.b16 %v3503, %v3502
        %v3551 = vpack.c.b16 %v3505, %v3504
        %v3552 = vpack.c.b16 %v3507, %v3506
        %v3553 = vpack.c.b16 %v3509, %v3508
        %v3554 = vpack.c.b16 %v3511, %v3510
        %v3555 = vpack.c.b16 %v3513, %v3512
        %v3556 = vpack.c.b16 %v3515, %v3514
        %v3557 = vpack.c.b16 %v3517, %v3516
        %v3558 = vpack.c.b16 %v3519, %v3518
        %v3559 = vpack.c.b16 %v3521, %v3520
        %v3560 = vpack.c.b16 %v3523, %v3522
        %v3561 = vpack.c.b16 %v3525, %v3524
        %v3562 = vpack.c.b16 %v3527, %v3526
        %v3563 = vpack.c.b16 %v3529, %v3528
        %v3564 = vpack.c.b16 %v3531, %v3530
        %v3565 = vpack.c.b16 %v3533, %v3532
        %3598 = vmatprep.subr.bf16.mxu0 0
        %3599 = vmatpush1.bf16.msra.mxu0 %v3534
        %3600 = vmatprep.subr.bf16.mxu0 0
        %3601 = vmatpush1.bf16.msra.mxu0 %v3535
        %3602 = vmatprep.subr.bf16.mxu0 0
        %3603 = vmatpush1.bf16.msra.mxu0 %v3536
        %3604 = vmatprep.subr.bf16.mxu0 0
        %3605 = vmatpush1.bf16.msra.mxu0 %v3537
        %3606 = vmatprep.subr.bf16.mxu0 0
        %3607 = vmatpush1.bf16.msra.mxu0 %v3538
        %3608 = vmatprep.subr.bf16.mxu0 0
        %3609 = vmatpush1.bf16.msra.mxu0 %v3539
        %3610 = vmatprep.subr.bf16.mxu0 0
        %3611 = vmatpush1.bf16.msra.mxu0 %v3540
        %3612 = vmatprep.subr.bf16.mxu0 0
        %3613 = vmatpush1.bf16.msra.mxu0 %v3541
        %3614 = vmatprep.subr.bf16.mxu0 0
        %3615 = vmatpush1.bf16.msra.mxu0 %v3542
        %3616 = vmatprep.subr.bf16.mxu0 0
        %3617 = vmatpush1.bf16.msra.mxu0 %v3543
        %3618 = vmatprep.subr.bf16.mxu0 0
        %3619 = vmatpush1.bf16.msra.mxu0 %v3544
        %3620 = vmatprep.subr.bf16.mxu0 0
        %3621 = vmatpush1.bf16.msra.mxu0 %v3545
        %3622 = vmatprep.subr.bf16.mxu0 0
        %3623 = vmatpush1.bf16.msra.mxu0 %v3546
        %3624 = vmatprep.subr.bf16.mxu0 0
        %3625 = vmatpush1.bf16.msra.mxu0 %v3547
        %3626 = vmatprep.subr.bf16.mxu0 0
        %3627 = vmatpush1.bf16.msra.mxu0 %v3548
        %3628 = vmatprep.subr.bf16.mxu0 0
        %3629 = vmatpush1.bf16.msra.mxu0 %v3549
        %3630 = vmatprep.mubr.bf16.mxu0 %v3332
        %3631 = vmatmul.mubr.bf16.gmra.mrb[0].mxu0 %v3331
        %v3632 = vpop.f32.mrb[0].mxu0
        %v3633 = vadd.f32 %v3404, %v3632
        %v3634 = vpop.f32.mrb[0].mxu0
        %v3635 = vpop.f32.mrb[0].mxu0
        %v3636 = vpop.f32.mrb[0].mxu0
        %3637 = vdwg.mxu0
        %3638 = vmatprep.subr.bf16.mxu0 0
        %3639 = vmatpush1.bf16.msra.mxu0 %v3550
        %3640 = vmatprep.subr.bf16.mxu0 0
        %3641 = vmatpush1.bf16.msra.mxu0 %v3551
        %3642 = vmatprep.subr.bf16.mxu0 0
        %3643 = vmatpush1.bf16.msra.mxu0 %v3552
        %3644 = vmatprep.subr.bf16.mxu0 0
        %3645 = vmatpush1.bf16.msra.mxu0 %v3553
        %3646 = vmatprep.subr.bf16.mxu0 0
        %3647 = vmatpush1.bf16.msra.mxu0 %v3554
        %3648 = vmatprep.subr.bf16.mxu0 0
        %3649 = vmatpush1.bf16.msra.mxu0 %v3555
        %3650 = vmatprep.subr.bf16.mxu0 0
        %3651 = vmatpush1.bf16.msra.mxu0 %v3556
        %3652 = vmatprep.subr.bf16.mxu0 0
        %3653 = vmatpush1.bf16.msra.mxu0 %v3557
        %3654 = vmatprep.subr.bf16.mxu0 0
        %3655 = vmatpush1.bf16.msra.mxu0 %v3558
        %3656 = vmatprep.subr.bf16.mxu0 0
        %3657 = vmatpush1.bf16.msra.mxu0 %v3559
        %3658 = vmatprep.subr.bf16.mxu0 0
        %3659 = vmatpush1.bf16.msra.mxu0 %v3560
        %3660 = vmatprep.subr.bf16.mxu0 0
        %3661 = vmatpush1.bf16.msra.mxu0 %v3561
        %3662 = vmatprep.subr.bf16.mxu0 0
        %3663 = vmatpush1.bf16.msra.mxu0 %v3562
        %3664 = vmatprep.subr.bf16.mxu0 0
        %3665 = vmatpush1.bf16.msra.mxu0 %v3563
        %3666 = vmatprep.subr.bf16.mxu0 0
        %3667 = vmatpush1.bf16.msra.mxu0 %v3564
        %3668 = vmatprep.subr.bf16.mxu0 0
        %3669 = vmatpush1.bf16.msra.mxu0 %v3565
        %3670 = vmatprep.mubr.bf16.mxu0 %v3334
        %3671 = vmatmul.mubr.bf16.gmra.mrb[0].mxu0 %v3333
        %v3672 = vpop.f32.mrb[0].mxu0
        %v3673 = vadd.f32 %v3633, %v3672
        %v3674 = vpop.f32.mrb[0].mxu0
        %v3675 = vpop.f32.mrb[0].mxu0
        %v3676 = vpop.f32.mrb[0].mxu0
        %3677 = vdwg.mxu0
        %v3678 = vadd.f32 %v3002, %v3673
        %3679 = vst [vmem:[%s538] sm:$0xff] %v3678
        %s3680 = sand.u32 %s319, 1
        %s3681 = scalar_lea.sflag [#allocation4], %s3680
        %s3682 = sand.u32 %s319, 1
        %s3683 = smul.addr %s3682, 8
        %s3684 = scalar_lea.vmem [#allocation14], %s3683
        // Predicated region
        $region101: #{tpu_custom_call.1} parent=71 // pred_check
          %p3685 = pneg %p329
        $region102: #{tpu_custom_call.1} parent=71 // pred_check_branch
          %3687 = sbr.rel (%p3685) target = $region104
        $region103: #{tpu_custom_call.1} parent=71 // pred_region
          %s3689 = ssub.s32 128, 128
          %3690 = vsyncadd %s3681, %s3689
          %s3691 = smul.addr %s33, 128
          %s3692 = scalar_lea.hbm %s13, %s3691
          %s3694 = sshll.u32 %s3684, 4
          %s3695 = int_to_ptr.vmem [resolvable:$true] %s3694
          %3697 = dma.vmem_to_hbm [thread:$0]  %s3695, 128, %s3692, %s3681
        $region104: #{tpu_custom_call.1} parent=71 // pred_fallthru
          _
      $region72: #{tpu_custom_call.1} parent=5 // pred_fallthru
        _
      %p3698 = scmp.le.s32.totalorder 2, %s28
      // Predicated region
      $region105: #{tpu_custom_call.1} parent=5 // pred_check
        %p3699 = pneg %p3698
      $region106: #{tpu_custom_call.1} parent=5 // pred_check_branch
        %3701 = sbr.rel (%p3699) target = $region108
      $region107: #{tpu_custom_call.1} parent=5 // pred_region
        %s3702 = ssub.s32 %s28, 2
        // Predicated region
        $region109: #{tpu_custom_call.1} parent=107 // pred_check
          %p3703 = pneg %p335
        $region110: #{tpu_custom_call.1} parent=107 // pred_check_branch
          %3705 = sbr.rel (%p3703) target = $region112
        $region111: #{tpu_custom_call.1} parent=107 // pred_region
          %s3706 = sand.u32 %s320, 1
          %s3707 = scalar_lea.sflag [#allocation4], %s3706
          %s3708 = sand.u32 %s320, 1
          %s3709 = smul.addr %s3708, 8
          %s3710 = scalar_lea.vmem [#allocation14], %s3709
          %3711 = dma.done %s3707, 128
        $region112: #{tpu_custom_call.1} parent=107 // pred_fallthru
          _
      $region108: #{tpu_custom_call.1} parent=5 // pred_fallthru
        _
    $region6: #{tpu_custom_call.1} parent=1 // loop_footer
      %s32 = sadd.s32 1, %s28
    $region7: #{tpu_custom_call.1} parent=1 // loop_footer_branch
      %27 = sbr.rel target = $region3
    $region8: #{tpu_custom_call.1} parent=1 // loop_exit
      _
    %3712 = vsyncpa [#allocation3], 1
    %s3713 = scalar_lea.sflag [#allocation3], 1
    %3714 = vsyncpa %s3713, 1
    %3715 = vsyncpa [#allocation6], 1
    %3716 = vsyncpa [#allocation9], 1
    %3717 = vsyncpa [#allocation12], 1
    %3718 = vsyncpa [#allocation4], 1
    %s3719 = scalar_lea.sflag [#allocation4], 1
    %3720 = vsyncpa %s3719, 1

</llo_original>
